<compile_context>
chip_gen: v7x
topology: tpu7x:2x2x1
jax: 0.10.0
libtpu: 0.0.40
codegen_flags: <defaults>
</compile_context>

<pallas_src>
import jax
import jax.numpy as jnp
from jax.experimental import pallas as pl
from jax.experimental.pallas import tpu as pltpu

VMEM_LIMIT = 32 * 1024 * 1024  # explicit, safe on v5e/v6e/v7x (usage here is << limit)


def _row_tile(m, cap):
    """Row-tile size: whole array if small, else a multiple-of-8 cap."""
    return m if m <= cap else cap


# ---------------------------------------------------------------------------
# Fused conv3x3 (+bias, +ReLU) + 2x2 max-pool kernel
#   patches: (4, M, K)  bf16   -- axis 0 = pool-window position (ph, pw)
#   w:       (K, Cout)  bf16
#   b:       (1, Cout)  f32
#   out:     (M, Cout)  f32    -- pooled activations, rows ordered (b, hp, wp)
# relu(max_i(y_i) + b) == max_i(relu(y_i + b)) since bias is shared and relu is
# monotone, so this matches Conv2d -> ReLU -> MaxPool2d(2, 2) exactly.
# ---------------------------------------------------------------------------
def _conv_relu_pool_kernel(p_ref, w_ref, b_ref, o_ref):
    w = w_ref[...]
    y0 = jnp.dot(p_ref[0], w, preferred_element_type=jnp.float32)
    y1 = jnp.dot(p_ref[1], w, preferred_element_type=jnp.float32)
    y2 = jnp.dot(p_ref[2], w, preferred_element_type=jnp.float32)
    y3 = jnp.dot(p_ref[3], w, preferred_element_type=jnp.float32)
    y = jnp.maximum(jnp.maximum(y0, y1), jnp.maximum(y2, y3))
    o_ref[...] = jnp.maximum(y + b_ref[...], 0.0).astype(o_ref.dtype)


def conv_relu_pool(patches, w_mat, b):
    _, M, K = patches.shape
    Cout = w_mat.shape[1]
    tm = _row_tile(M, 512)
    grid = (pl.cdiv(M, tm),)
    return pl.pallas_call(
        _conv_relu_pool_kernel,
        out_shape=jax.ShapeDtypeStruct((M, Cout), jnp.float32),
        grid=grid,
        in_specs=[pl.BlockSpec((4, tm, K), lambda i: (0, i, 0)),
                  pl.BlockSpec((K, Cout), lambda i: (0, 0)),
                  pl.BlockSpec((1, Cout), lambda i: (0, 0))],
        out_specs=pl.BlockSpec((tm, Cout), lambda i: (i, 0)),
        compiler_params=pltpu.CompilerParams(
            dimension_semantics=("parallel",),
            vmem_limit_bytes=VMEM_LIMIT),
    )(patches, w_mat, b.reshape(1, Cout))


# ---------------------------------------------------------------------------
# Fused MLP head: dense -> relu -> output, tiled over the batch (M) axis.
# ---------------------------------------------------------------------------
def _mlp_kernel(x_ref, w1_ref, b1_ref, w2_ref, b2_ref, o_ref):
    h = jnp.dot(x_ref[...], w1_ref[...], preferred_element_type=jnp.float32)
    h = jnp.maximum(h + b1_ref[...], 0.0).astype(jnp.bfloat16)
    out = jnp.dot(h, w2_ref[...], preferred_element_type=jnp.float32) + b2_ref[...]
    o_ref[...] = out.astype(o_ref.dtype)


def mlp_head(x, w1, b1, w2, b2):
    M, K = x.shape
    H = w1.shape[1]
    N = w2.shape[1]
    tm = _row_tile(M, 256)
    grid = (pl.cdiv(M, tm),)
    return pl.pallas_call(
        _mlp_kernel,
        out_shape=jax.ShapeDtypeStruct((M, N), jnp.float32),
        grid=grid,
        in_specs=[pl.BlockSpec((tm, K), lambda i: (i, 0)),
                  pl.BlockSpec((K, H), lambda i: (0, 0)),
                  pl.BlockSpec((1, H), lambda i: (0, 0)),
                  pl.BlockSpec((H, N), lambda i: (0, 0)),
                  pl.BlockSpec((1, N), lambda i: (0, 0))],
        out_specs=pl.BlockSpec((tm, N), lambda i: (i, 0)),
        compiler_params=pltpu.CompilerParams(
            dimension_semantics=("parallel",),
            vmem_limit_bytes=VMEM_LIMIT),
    )(x, w1, b1.reshape(1, H), w2, b2.reshape(1, N))


# ---------------------------------------------------------------------------
# XLA glue: patch extraction for conv3x3/pad1 with the 2x2 pool-window position
# on a leading axis.  Output: (4, B*Hp*Wp, 9*C) bf16; K ordered (kh, kw, c).
# ---------------------------------------------------------------------------
def _pool_patches(x_nhwc):
    B, H, W, C = x_nhwc.shape
    Hp, Wp = H // 2, W // 2
    xp = jnp.pad(x_nhwc, ((0, 0), (1, 1), (1, 1), (0, 0)))
    groups = []
    for ph in range(2):
        for pw in range(2):
            taps = []
            for kh in range(3):
                for kw in range(3):
                    taps.append(xp[:, ph + kh: ph + kh + 2 * Hp: 2,
                                   pw + kw: pw + kw + 2 * Wp: 2, :])
            t = jnp.stack(taps, axis=3)                       # (B, Hp, Wp, 9, C)
            groups.append(t.reshape(B * Hp * Wp, 9 * C))
    return jnp.stack(groups, axis=0).astype(jnp.bfloat16)     # (4, B*Hp*Wp, 9*C)


# ---------------------------------------------------------------------------
# Parameters (PyTorch-shaped) + one-time inference prep (layout / dtype)
# ---------------------------------------------------------------------------
def init_params(key):
    ks = jax.random.split(key, 8)
    s = 0.05
    return {
        "conv1_w": jax.random.normal(ks[0], (32, 1, 3, 3), jnp.float32) * s,
        "conv1_b": jax.random.normal(ks[1], (32,), jnp.float32) * s,
        "conv2_w": jax.random.normal(ks[2], (64, 32, 3, 3), jnp.float32) * s,
        "conv2_b": jax.random.normal(ks[3], (64,), jnp.float32) * s,
        "dense_w": jax.random.normal(ks[4], (128, 64 * 7 * 7), jnp.float32) * s,
        "dense_b": jax.random.normal(ks[5], (128,), jnp.float32) * s,
        "out_w":   jax.random.normal(ks[6], (10, 128), jnp.float32) * s,
        "out_b":   jax.random.normal(ks[7], (10,), jnp.float32) * s,
    }


def prepare_params(params):
    """One-time weight prep: conv weights -> (9*Cin, Cout) matmul layout (bf16);
    dense weight input-dim permuted from NCHW-flatten to NHWC-flatten order so
    the forward pass needs no transpose; MXU operands cast to bf16."""
    def conv_mat(w):  # (Cout, Cin, 3, 3) -> ((kh,kw,cin), Cout)
        return jnp.transpose(w, (2, 3, 1, 0)).reshape(-1, w.shape[0]).astype(jnp.bfloat16)

    dw = params["dense_w"].reshape(128, 64, 7, 7)             # (out, c, h, w)
    dw = jnp.transpose(dw, (0, 2, 3, 1)).reshape(128, 64 * 7 * 7)  # cols -> (h, w, c)
    return {
        "conv1_w": conv_mat(params["conv1_w"]), "conv1_b": params["conv1_b"],
        "conv2_w": conv_mat(params["conv2_w"]), "conv2_b": params["conv2_b"],
        "dense_w": jnp.transpose(dw).astype(jnp.bfloat16),    # (3136, 128)
        "dense_b": params["dense_b"],
        "out_w":   jnp.transpose(params["out_w"]).astype(jnp.bfloat16),  # (128, 10)
        "out_b":   params["out_b"],
    }


# ---------------------------------------------------------------------------
# Forward pass
# ---------------------------------------------------------------------------
@jax.jit
def mnist_cnn_forward(x_nchw, prep):
    B = x_nchw.shape[0]
    x = jnp.transpose(x_nchw, (0, 2, 3, 1))                   # NCHW -> NHWC (B,28,28,1)

    p1 = _pool_patches(x)                                     # (4, B*196, 9)
    y1 = conv_relu_pool(p1, prep["conv1_w"], prep["conv1_b"]) # (B*196, 32)
    y1 = y1.reshape(B, 14, 14, 32)

    p2 = _pool_patches(y1)                                    # (4, B*49, 288)
    y2 = conv_relu_pool(p2, prep["conv2_w"], prep["conv2_b"]) # (B*49, 64)

    # NHWC flatten (h, w, c) -- dense weight was pre-permuted to match, so this
    # is a free reshape that reproduces nn.Flatten's semantics exactly.
    flat = y2.reshape(B, 7 * 7 * 64).astype(jnp.bfloat16)

    logits = mlp_head(flat, prep["dense_w"], prep["dense_b"],
                      prep["out_w"], prep["out_b"])           # (B, 10)
    return logits


if __name__ == "__main__":
    key = jax.random.PRNGKey(0)
    pkey, xkey = jax.random.split(key)
    params = init_params(pkey)
    prep = prepare_params(params)
    x = jax.random.normal(xkey, (2, 1, 28, 28), jnp.float32)  # MNIST-shaped NCHW
    logits = mnist_cnn_forward(x, prep)
    jax.block_until_ready(logits)
    assert logits.shape == (2, 10) and logits.dtype == jnp.float32
    assert bool(jnp.isfinite(logits).all())
    print("KERNEL_OK")
</pallas_src>

<mosaic_0001>
module attributes {stable_mosaic.version = 11 : i64} {
  func.func @_conv_relu_pool_kernel(%arg0: i32, %arg1: memref<4x392x9xbf16, #tpu.memory_space<vmem>>, %arg2: memref<9x32xbf16, #tpu.memory_space<vmem>>, %arg3: memref<1x32xf32, #tpu.memory_space<vmem>>, %arg4: memref<392x32xf32, #tpu.memory_space<vmem>>) attributes {dimension_semantics = [#tpu.dimension_semantics<parallel>], iteration_bounds = array<i64: 1>, scalar_prefetch = 0 : i64, scratch_operands = 0 : i64, tpu.core_type = #tpu.core_type<tc>, window_params = [{transform_indices = @transform_0, window_bounds = array<i64: 4, 392, 9>}, {pipeline_mode = #tpu.pipeline_mode<synchronous>, transform_indices = @transform_1, window_bounds = array<i64: 9, 32>}, {pipeline_mode = #tpu.pipeline_mode<synchronous>, transform_indices = @transform_2, window_bounds = array<i64: 1, 32>}, {transform_indices = @transform_3, window_bounds = array<i64: 392, 32>}]} {
    %c0 = arith.constant 0 : index
    %c0_0 = arith.constant 0 : index
    %0 = vector.load %arg2[%c0, %c0_0] : memref<9x32xbf16, #tpu.memory_space<vmem>>, vector<9x32xbf16>
    %c0_1 = arith.constant 0 : index
    %c0_2 = arith.constant 0 : index
    %c0_3 = arith.constant 0 : index
    %1 = vector.load %arg1[%c0_1, %c0_2, %c0_3] : memref<4x392x9xbf16, #tpu.memory_space<vmem>>, vector<1x392x9xbf16>
    %2 = vector.shape_cast %1 : vector<1x392x9xbf16> to vector<392x9xbf16>
    %cst = arith.constant dense<0.000000e+00> : vector<392x32xf32>
    %3 = tpu.matmul %2, %0, %cst {dimension_numbers = #tpu.dot_dimension_numbers<[1], [0], [0], [1], [0, 0, 1, 1], [], []>} : vector<392x9xbf16>, vector<9x32xbf16>, vector<392x32xf32> -> vector<392x32xf32>
    %c1 = arith.constant 1 : index
    %c0_4 = arith.constant 0 : index
    %c0_5 = arith.constant 0 : index
    %4 = vector.load %arg1[%c1, %c0_4, %c0_5] : memref<4x392x9xbf16, #tpu.memory_space<vmem>>, vector<1x392x9xbf16>
    %5 = vector.shape_cast %4 : vector<1x392x9xbf16> to vector<392x9xbf16>
    %cst_6 = arith.constant dense<0.000000e+00> : vector<392x32xf32>
    %6 = tpu.matmul %5, %0, %cst_6 {dimension_numbers = #tpu.dot_dimension_numbers<[1], [0], [0], [1], [0, 0, 1, 1], [], []>} : vector<392x9xbf16>, vector<9x32xbf16>, vector<392x32xf32> -> vector<392x32xf32>
    %c2 = arith.constant 2 : index
    %c0_7 = arith.constant 0 : index
    %c0_8 = arith.constant 0 : index
    %7 = vector.load %arg1[%c2, %c0_7, %c0_8] : memref<4x392x9xbf16, #tpu.memory_space<vmem>>, vector<1x392x9xbf16>
    %8 = vector.shape_cast %7 : vector<1x392x9xbf16> to vector<392x9xbf16>
    %cst_9 = arith.constant dense<0.000000e+00> : vector<392x32xf32>
    %9 = tpu.matmul %8, %0, %cst_9 {dimension_numbers = #tpu.dot_dimension_numbers<[1], [0], [0], [1], [0, 0, 1, 1], [], []>} : vector<392x9xbf16>, vector<9x32xbf16>, vector<392x32xf32> -> vector<392x32xf32>
    %c3 = arith.constant 3 : index
    %c0_10 = arith.constant 0 : index
    %c0_11 = arith.constant 0 : index
    %10 = vector.load %arg1[%c3, %c0_10, %c0_11] : memref<4x392x9xbf16, #tpu.memory_space<vmem>>, vector<1x392x9xbf16>
    %11 = vector.shape_cast %10 : vector<1x392x9xbf16> to vector<392x9xbf16>
    %cst_12 = arith.constant dense<0.000000e+00> : vector<392x32xf32>
    %12 = tpu.matmul %11, %0, %cst_12 {dimension_numbers = #tpu.dot_dimension_numbers<[1], [0], [0], [1], [0, 0, 1, 1], [], []>} : vector<392x9xbf16>, vector<9x32xbf16>, vector<392x32xf32> -> vector<392x32xf32>
    %13 = arith.maximumf %3, %6 : vector<392x32xf32>
    %14 = arith.maximumf %9, %12 : vector<392x32xf32>
    %15 = arith.maximumf %13, %14 : vector<392x32xf32>
    %c0_13 = arith.constant 0 : index
    %c0_14 = arith.constant 0 : index
    %16 = vector.load %arg3[%c0_13, %c0_14] : memref<1x32xf32, #tpu.memory_space<vmem>>, vector<1x32xf32>
    %17 = vector.broadcast %16 : vector<1x32xf32> to vector<392x32xf32>
    %18 = arith.addf %15, %17 : vector<392x32xf32>
    %cst_15 = arith.constant 0.000000e+00 : f32
    %19 = vector.broadcast %cst_15 : f32 to vector<392x32xf32>
    %20 = arith.maximumf %18, %19 : vector<392x32xf32>
    %c0_16 = arith.constant 0 : index
    %c0_17 = arith.constant 0 : index
    %21 = vector.load %arg4[%c0_16, %c0_17] : memref<392x32xf32, #tpu.memory_space<vmem>>, vector<392x32xf32>
    tpu.vector_store %arg4[%c0_16, %c0_17], %20 {strides = array<i32>} : memref<392x32xf32, #tpu.memory_space<vmem>>, vector<392x32xf32>,
    return
  }
  func.func @transform_0(%arg0: i32) -> (i32, i32, i32) {
    %c0_i32 = arith.constant 0 : i32
    %c0_i32_0 = arith.constant 0 : i32
    %c0_i32_1 = arith.constant 0 : i32
    return %c0_i32, %arg0, %c0_i32_0 : i32, i32, i32
  }
  func.func @transform_1(%arg0: i32) -> (i32, i32) {
    %c0_i32 = arith.constant 0 : i32
    %c0_i32_0 = arith.constant 0 : i32
    %c0_i32_1 = arith.constant 0 : i32
    return %c0_i32, %c0_i32_0 : i32, i32
  }
  func.func @transform_2(%arg0: i32) -> (i32, i32) {
    %c0_i32 = arith.constant 0 : i32
    %c0_i32_0 = arith.constant 0 : i32
    %c0_i32_1 = arith.constant 0 : i32
    return %c0_i32, %c0_i32_0 : i32, i32
  }
  func.func @transform_3(%arg0: i32) -> (i32, i32) {
    %c0_i32 = arith.constant 0 : i32
    %c0_i32_0 = arith.constant 0 : i32
    return %arg0, %c0_i32 : i32, i32
  }
}

module attributes {stable_mosaic.version = 11 : i64} {
  func.func @_conv_relu_pool_kernel(%arg0: i32, %arg1: memref<4x98x288xbf16, #tpu.memory_space<vmem>>, %arg2: memref<288x64xbf16, #tpu.memory_space<vmem>>, %arg3: memref<1x64xf32, #tpu.memory_space<vmem>>, %arg4: memref<98x64xf32, #tpu.memory_space<vmem>>) attributes {dimension_semantics = [#tpu.dimension_semantics<parallel>], iteration_bounds = array<i64: 1>, scalar_prefetch = 0 : i64, scratch_operands = 0 : i64, tpu.core_type = #tpu.core_type<tc>, window_params = [{transform_indices = @transform_0, window_bounds = array<i64: 4, 98, 288>}, {pipeline_mode = #tpu.pipeline_mode<synchronous>, transform_indices = @transform_1, window_bounds = array<i64: 288, 64>}, {pipeline_mode = #tpu.pipeline_mode<synchronous>, transform_indices = @transform_2, window_bounds = array<i64: 1, 64>}, {transform_indices = @transform_3, window_bounds = array<i64: 98, 64>}]} {
    %c0 = arith.constant 0 : index
    %c0_0 = arith.constant 0 : index
    %0 = vector.load %arg2[%c0, %c0_0] : memref<288x64xbf16, #tpu.memory_space<vmem>>, vector<288x64xbf16>
    %c0_1 = arith.constant 0 : index
    %c0_2 = arith.constant 0 : index
    %c0_3 = arith.constant 0 : index
    %1 = vector.load %arg1[%c0_1, %c0_2, %c0_3] : memref<4x98x288xbf16, #tpu.memory_space<vmem>>, vector<1x98x288xbf16>
    %2 = vector.shape_cast %1 : vector<1x98x288xbf16> to vector<98x288xbf16>
    %cst = arith.constant dense<0.000000e+00> : vector<98x64xf32>
    %3 = tpu.matmul %2, %0, %cst {dimension_numbers = #tpu.dot_dimension_numbers<[1], [0], [0], [1], [0, 0, 1, 1], [], []>} : vector<98x288xbf16>, vector<288x64xbf16>, vector<98x64xf32> -> vector<98x64xf32>
    %c1 = arith.constant 1 : index
    %c0_4 = arith.constant 0 : index
    %c0_5 = arith.constant 0 : index
    %4 = vector.load %arg1[%c1, %c0_4, %c0_5] : memref<4x98x288xbf16, #tpu.memory_space<vmem>>, vector<1x98x288xbf16>
    %5 = vector.shape_cast %4 : vector<1x98x288xbf16> to vector<98x288xbf16>
    %cst_6 = arith.constant dense<0.000000e+00> : vector<98x64xf32>
    %6 = tpu.matmul %5, %0, %cst_6 {dimension_numbers = #tpu.dot_dimension_numbers<[1], [0], [0], [1], [0, 0, 1, 1], [], []>} : vector<98x288xbf16>, vector<288x64xbf16>, vector<98x64xf32> -> vector<98x64xf32>
    %c2 = arith.constant 2 : index
    %c0_7 = arith.constant 0 : index
    %c0_8 = arith.constant 0 : index
    %7 = vector.load %arg1[%c2, %c0_7, %c0_8] : memref<4x98x288xbf16, #tpu.memory_space<vmem>>, vector<1x98x288xbf16>
    %8 = vector.shape_cast %7 : vector<1x98x288xbf16> to vector<98x288xbf16>
    %cst_9 = arith.constant dense<0.000000e+00> : vector<98x64xf32>
    %9 = tpu.matmul %8, %0, %cst_9 {dimension_numbers = #tpu.dot_dimension_numbers<[1], [0], [0], [1], [0, 0, 1, 1], [], []>} : vector<98x288xbf16>, vector<288x64xbf16>, vector<98x64xf32> -> vector<98x64xf32>
    %c3 = arith.constant 3 : index
    %c0_10 = arith.constant 0 : index
    %c0_11 = arith.constant 0 : index
    %10 = vector.load %arg1[%c3, %c0_10, %c0_11] : memref<4x98x288xbf16, #tpu.memory_space<vmem>>, vector<1x98x288xbf16>
    %11 = vector.shape_cast %10 : vector<1x98x288xbf16> to vector<98x288xbf16>
    %cst_12 = arith.constant dense<0.000000e+00> : vector<98x64xf32>
    %12 = tpu.matmul %11, %0, %cst_12 {dimension_numbers = #tpu.dot_dimension_numbers<[1], [0], [0], [1], [0, 0, 1, 1], [], []>} : vector<98x288xbf16>, vector<288x64xbf16>, vector<98x64xf32> -> vector<98x64xf32>
    %13 = arith.maximumf %3, %6 : vector<98x64xf32>
    %14 = arith.maximumf %9, %12 : vector<98x64xf32>
    %15 = arith.maximumf %13, %14 : vector<98x64xf32>
    %c0_13 = arith.constant 0 : index
    %c0_14 = arith.constant 0 : index
    %16 = vector.load %arg3[%c0_13, %c0_14] : memref<1x64xf32, #tpu.memory_space<vmem>>, vector<1x64xf32>
    %17 = vector.broadcast %16 : vector<1x64xf32> to vector<98x64xf32>
    %18 = arith.addf %15, %17 : vector<98x64xf32>
    %cst_15 = arith.constant 0.000000e+00 : f32
    %19 = vector.broadcast %cst_15 : f32 to vector<98x64xf32>
    %20 = arith.maximumf %18, %19 : vector<98x64xf32>
    %c0_16 = arith.constant 0 : index
    %c0_17 = arith.constant 0 : index
    %21 = vector.load %arg4[%c0_16, %c0_17] : memref<98x64xf32, #tpu.memory_space<vmem>>, vector<98x64xf32>
    tpu.vector_store %arg4[%c0_16, %c0_17], %20 {strides = array<i32>} : memref<98x64xf32, #tpu.memory_space<vmem>>, vector<98x64xf32>,
    return
  }
  func.func @transform_0(%arg0: i32) -> (i32, i32, i32) {
    %c0_i32 = arith.constant 0 : i32
    %c0_i32_0 = arith.constant 0 : i32
    %c0_i32_1 = arith.constant 0 : i32
    return %c0_i32, %arg0, %c0_i32_0 : i32, i32, i32
  }
  func.func @transform_1(%arg0: i32) -> (i32, i32) {
    %c0_i32 = arith.constant 0 : i32
    %c0_i32_0 = arith.constant 0 : i32
    %c0_i32_1 = arith.constant 0 : i32
    return %c0_i32, %c0_i32_0 : i32, i32
  }
  func.func @transform_2(%arg0: i32) -> (i32, i32) {
    %c0_i32 = arith.constant 0 : i32
    %c0_i32_0 = arith.constant 0 : i32
    %c0_i32_1 = arith.constant 0 : i32
    return %c0_i32, %c0_i32_0 : i32, i32
  }
  func.func @transform_3(%arg0: i32) -> (i32, i32) {
    %c0_i32 = arith.constant 0 : i32
    %c0_i32_0 = arith.constant 0 : i32
    return %arg0, %c0_i32 : i32, i32
  }
}

module attributes {stable_mosaic.version = 11 : i64} {
  func.func @_mlp_kernel(%arg0: i32, %arg1: memref<2x3136xbf16, #tpu.memory_space<vmem>>, %arg2: memref<3136x128xbf16, #tpu.memory_space<vmem>>, %arg3: memref<1x128xf32, #tpu.memory_space<vmem>>, %arg4: memref<128x10xbf16, #tpu.memory_space<vmem>>, %arg5: memref<1x10xf32, #tpu.memory_space<vmem>>, %arg6: memref<2x10xf32, #tpu.memory_space<vmem>>) attributes {dimension_semantics = [#tpu.dimension_semantics<parallel>], iteration_bounds = array<i64: 1>, scalar_prefetch = 0 : i64, scratch_operands = 0 : i64, tpu.core_type = #tpu.core_type<tc>, window_params = [{transform_indices = @transform_0, window_bounds = array<i64: 2, 3136>}, {pipeline_mode = #tpu.pipeline_mode<synchronous>, transform_indices = @transform_1, window_bounds = array<i64: 3136, 128>}, {pipeline_mode = #tpu.pipeline_mode<synchronous>, transform_indices = @transform_2, window_bounds = array<i64: 1, 128>}, {pipeline_mode = #tpu.pipeline_mode<synchronous>, transform_indices = @transform_3, window_bounds = array<i64: 128, 10>}, {pipeline_mode = #tpu.pipeline_mode<synchronous>, transform_indices = @transform_4, window_bounds = array<i64: 1, 10>}, {transform_indices = @transform_5, window_bounds = array<i64: 2, 10>}]} {
    %c0 = arith.constant 0 : index
    %c0_0 = arith.constant 0 : index
    %0 = vector.load %arg1[%c0, %c0_0] : memref<2x3136xbf16, #tpu.memory_space<vmem>>, vector<2x3136xbf16>
    %c0_1 = arith.constant 0 : index
    %c0_2 = arith.constant 0 : index
    %1 = vector.load %arg2[%c0_1, %c0_2] : memref<3136x128xbf16, #tpu.memory_space<vmem>>, vector<3136x128xbf16>
    %cst = arith.constant dense<0.000000e+00> : vector<2x128xf32>
    %2 = tpu.matmul %0, %1, %cst {dimension_numbers = #tpu.dot_dimension_numbers<[1], [0], [0], [1], [0, 0, 1, 1], [], []>} : vector<2x3136xbf16>, vector<3136x128xbf16>, vector<2x128xf32> -> vector<2x128xf32>
    %c0_3 = arith.constant 0 : index
    %c0_4 = arith.constant 0 : index
    %3 = vector.load %arg3[%c0_3, %c0_4] : memref<1x128xf32, #tpu.memory_space<vmem>>, vector<1x128xf32>
    %4 = vector.broadcast %3 : vector<1x128xf32> to vector<2x128xf32>
    %5 = arith.addf %2, %4 : vector<2x128xf32>
    %cst_5 = arith.constant 0.000000e+00 : f32
    %6 = vector.broadcast %cst_5 : f32 to vector<2x128xf32>
    %7 = arith.maximumf %5, %6 : vector<2x128xf32>
    %8 = arith.truncf %7 : vector<2x128xf32> to vector<2x128xbf16>
    %c0_6 = arith.constant 0 : index
    %c0_7 = arith.constant 0 : index
    %9 = vector.load %arg4[%c0_6, %c0_7] : memref<128x10xbf16, #tpu.memory_space<vmem>>, vector<128x10xbf16>
    %cst_8 = arith.constant dense<0.000000e+00> : vector<2x10xf32>
    %10 = tpu.matmul %8, %9, %cst_8 {dimension_numbers = #tpu.dot_dimension_numbers<[1], [0], [0], [1], [0, 0, 1, 1], [], []>} : vector<2x128xbf16>, vector<128x10xbf16>, vector<2x10xf32> -> vector<2x10xf32>
    %c0_9 = arith.constant 0 : index
    %c0_10 = arith.constant 0 : index
    %11 = vector.load %arg5[%c0_9, %c0_10] : memref<1x10xf32, #tpu.memory_space<vmem>>, vector<1x10xf32>
    %12 = vector.broadcast %11 : vector<1x10xf32> to vector<2x10xf32>
    %13 = arith.addf %10, %12 : vector<2x10xf32>
    %c0_11 = arith.constant 0 : index
    %c0_12 = arith.constant 0 : index
    %14 = vector.load %arg6[%c0_11, %c0_12] : memref<2x10xf32, #tpu.memory_space<vmem>>, vector<2x10xf32>
    tpu.vector_store %arg6[%c0_11, %c0_12], %13 {strides = array<i32>} : memref<2x10xf32, #tpu.memory_space<vmem>>, vector<2x10xf32>,
    return
  }
  func.func @transform_0(%arg0: i32) -> (i32, i32) {
    %c0_i32 = arith.constant 0 : i32
    %c0_i32_0 = arith.constant 0 : i32
    return %arg0, %c0_i32 : i32, i32
  }
  func.func @transform_1(%arg0: i32) -> (i32, i32) {
    %c0_i32 = arith.constant 0 : i32
    %c0_i32_0 = arith.constant 0 : i32
    %c0_i32_1 = arith.constant 0 : i32
    return %c0_i32, %c0_i32_0 : i32, i32
  }
  func.func @transform_2(%arg0: i32) -> (i32, i32) {
    %c0_i32 = arith.constant 0 : i32
    %c0_i32_0 = arith.constant 0 : i32
    %c0_i32_1 = arith.constant 0 : i32
    return %c0_i32, %c0_i32_0 : i32, i32
  }
  func.func @transform_3(%arg0: i32) -> (i32, i32) {
    %c0_i32 = arith.constant 0 : i32
    %c0_i32_0 = arith.constant 0 : i32
    %c0_i32_1 = arith.constant 0 : i32
    return %c0_i32, %c0_i32_0 : i32, i32
  }
  func.func @transform_4(%arg0: i32) -> (i32, i32) {
    %c0_i32 = arith.constant 0 : i32
    %c0_i32_0 = arith.constant 0 : i32
    %c0_i32_1 = arith.constant 0 : i32
    return %c0_i32, %c0_i32_0 : i32, i32
  }
  func.func @transform_5(%arg0: i32) -> (i32, i32) {
    %c0_i32 = arith.constant 0 : i32
    %c0_i32_0 = arith.constant 0 : i32
    return %arg0, %c0_i32 : i32, i32
  }
}

</mosaic_0001>

<llo_original>
// kernel: mnist_cnn_forward.3
$region0: #{mnist_cnn_forward.3}
  #allocation0 [shape = 'u32[]', space=smem, size = 0x4, offset = 0x4, fixed_abs, tag = 'smem constant byte address 0x4 - core index']
  #allocation1 [shape = 'u32[144,128]{1,0:T(1,128)}', space=vmem, size = 0x12000, scoped, tag = 'internal scratch']
  %s0 = inlined_call_operand.vmem [shape: bf16[4,392,9], index: 0, kind: input, shape index: {}]
  %s1 = inlined_call_operand.vmem [shape: bf16[9,32], index: 1, kind: input, shape index: {}]
  %s2 = inlined_call_operand.vmem [shape: f32[1,32], index: 2, kind: input, shape index: {}]
  %s3 = inlined_call_operand.vmem [shape: f32[392,32], index: 3, kind: output, shape index: {}]
  %s4 = sld [smem:[#allocation0]]
  $region22: #{mnist_cnn_forward.3} parent=0
    _
  %s6 = ssub.s32 1, %s4
  %s7 = scalar_select 0, %s6, %s4
  // Predicated region
  $region2: #{mnist_cnn_forward.3} parent=0 // pred_check
    _
  $region3: #{mnist_cnn_forward.3} parent=0 // pred_check_branch
    %9 = sbr.rel (0) target = $region5
  $region4: #{mnist_cnn_forward.3} parent=0 // pred_region
    _
  $region5: #{mnist_cnn_forward.3} parent=0 // pred_fallthru
    _
  // Predicated region
  $region6: #{mnist_cnn_forward.3} parent=0 // pred_check
    _
  $region7: #{mnist_cnn_forward.3} parent=0 // pred_check_branch
    %11 = sbr.rel (0) target = $region9
  $region8: #{mnist_cnn_forward.3} parent=0 // pred_region
    _
  $region9: #{mnist_cnn_forward.3} parent=0 // pred_fallthru
    _
  // Predicated region
  $region10: #{mnist_cnn_forward.3} parent=0 // pred_check
    _
  $region11: #{mnist_cnn_forward.3} parent=0 // pred_check_branch
    %13 = sbr.rel (0) target = $region13
  $region12: #{mnist_cnn_forward.3} parent=0 // pred_region
    _
  $region13: #{mnist_cnn_forward.3} parent=0 // pred_fallthru
    _
  %v15 = vld [vmem:[%s1] sm:$0xf]
  %v16 = vld [vmem:[%s1 + $0x4] sm:$0x1]
  %v17 = vld [vmem:[%s0] sm:$0xf]
  %v18 = vld [vmem:[%s0 + $0x4] sm:$0xf]
  %v19 = vld [vmem:[%s0 + $0x8] sm:$0xf]
  %v20 = vld [vmem:[%s0 + $0xc] sm:$0xf]
  %v21 = vld [vmem:[%s0 + $0x10] sm:$0xf]
  %v22 = vld [vmem:[%s0 + $0x14] sm:$0xf]
  %v23 = vld [vmem:[%s0 + $0x18] sm:$0xf]
  %v24 = vld [vmem:[%s0 + $0x1c] sm:$0xf]
  %v25 = vld [vmem:[%s0 + $0x20] sm:$0xf]
  %v26 = vld [vmem:[%s0 + $0x24] sm:$0xf]
  %v27 = vld [vmem:[%s0 + $0x28] sm:$0xf]
  %v28 = vld [vmem:[%s0 + $0x2c] sm:$0xf]
  %v29 = vld [vmem:[%s0 + $0x30] sm:$0xf]
  %v30 = vld [vmem:[%s0 + $0x34] sm:$0xf]
  %v31 = vld [vmem:[%s0 + $0x38] sm:$0xf]
  %v32 = vld [vmem:[%s0 + $0x3c] sm:$0xf]
  %v33 = vld [vmem:[%s0 + $0x40] sm:$0xf]
  %v34 = vld [vmem:[%s0 + $0x44] sm:$0xf]
  %v35 = vld [vmem:[%s0 + $0x48] sm:$0xf]
  %v36 = vld [vmem:[%s0 + $0x4c] sm:$0xf]
  %v37 = vld [vmem:[%s0 + $0x50] sm:$0xf]
  %v38 = vld [vmem:[%s0 + $0x54] sm:$0xf]
  %v39 = vld [vmem:[%s0 + $0x58] sm:$0xf]
  %v40 = vld [vmem:[%s0 + $0x5c] sm:$0xf]
  %v41 = vld [vmem:[%s0 + $0x60] sm:$0xf]
  %v42 = vld [vmem:[%s0 + $0x64] sm:$0xf]
  %v43 = vld [vmem:[%s0 + $0x68] sm:$0xf]
  %v44 = vld [vmem:[%s0 + $0x6c] sm:$0xf]
  %v45 = vld [vmem:[%s0 + $0x70] sm:$0xf]
  %v46 = vld [vmem:[%s0 + $0x74] sm:$0xf]
  %v47 = vld [vmem:[%s0 + $0x78] sm:$0xf]
  %v48 = vld [vmem:[%s0 + $0x7c] sm:$0xf]
  %v49 = vld [vmem:[%s0 + $0x80] sm:$0xf]
  %v50 = vld [vmem:[%s0 + $0x84] sm:$0xf]
  %v51 = vld [vmem:[%s0 + $0x88] sm:$0xf]
  %v52 = vld [vmem:[%s0 + $0x8c] sm:$0xf]
  %v53 = vld [vmem:[%s0 + $0x90] sm:$0xf]
  %v54 = vld [vmem:[%s0 + $0x94] sm:$0xf]
  %v55 = vld [vmem:[%s0 + $0x98] sm:$0xf]
  %v56 = vld [vmem:[%s0 + $0x9c] sm:$0xf]
  %v57 = vld [vmem:[%s0 + $0xa0] sm:$0xf]
  %v58 = vld [vmem:[%s0 + $0xa4] sm:$0xf]
  %v59 = vld [vmem:[%s0 + $0xa8] sm:$0xf]
  %v60 = vld [vmem:[%s0 + $0xac] sm:$0xf]
  %v61 = vld [vmem:[%s0 + $0xb0] sm:$0xf]
  %v62 = vld [vmem:[%s0 + $0xb4] sm:$0xf]
  %v63 = vld [vmem:[%s0 + $0xb8] sm:$0xf]
  %v64 = vld [vmem:[%s0 + $0xbc] sm:$0xf]
  %v65 = vld [vmem:[%s0 + $0xc0] sm:$0xf]
  %v115 = vunpack.c.l.b16 %v17
  %v116 = vunpack.c.l.b16 %v18
  %v117 = vunpack.c.l.b16 %v19
  %v118 = vunpack.c.l.b16 %v20
  %v119 = vunpack.c.l.b16 %v21
  %v120 = vunpack.c.l.b16 %v22
  %v121 = vunpack.c.l.b16 %v23
  %v122 = vunpack.c.l.b16 %v24
  %v123 = vunpack.c.l.b16 %v25
  %v124 = vunpack.c.l.b16 %v26
  %v125 = vunpack.c.l.b16 %v27
  %v126 = vunpack.c.l.b16 %v28
  %v127 = vunpack.c.l.b16 %v29
  %v128 = vunpack.c.l.b16 %v30
  %v129 = vunpack.c.l.b16 %v31
  %v130 = vunpack.c.l.b16 %v32
  %v131 = vunpack.c.l.b16 %v33
  %v132 = vunpack.c.l.b16 %v34
  %v133 = vunpack.c.l.b16 %v35
  %v134 = vunpack.c.l.b16 %v36
  %v135 = vunpack.c.l.b16 %v37
  %v136 = vunpack.c.l.b16 %v38
  %v137 = vunpack.c.l.b16 %v39
  %v138 = vunpack.c.l.b16 %v40
  %v139 = vunpack.c.l.b16 %v41
  %v140 = vunpack.c.l.b16 %v42
  %v141 = vunpack.c.l.b16 %v43
  %v142 = vunpack.c.l.b16 %v44
  %v143 = vunpack.c.l.b16 %v45
  %v144 = vunpack.c.l.b16 %v46
  %v145 = vunpack.c.l.b16 %v47
  %v146 = vunpack.c.l.b16 %v48
  %v147 = vunpack.c.l.b16 %v49
  %v148 = vunpack.c.l.b16 %v50
  %v149 = vunpack.c.l.b16 %v51
  %v150 = vunpack.c.l.b16 %v52
  %v151 = vunpack.c.l.b16 %v53
  %v152 = vunpack.c.l.b16 %v54
  %v153 = vunpack.c.l.b16 %v55
  %v154 = vunpack.c.l.b16 %v56
  %v155 = vunpack.c.l.b16 %v57
  %v156 = vunpack.c.l.b16 %v58
  %v157 = vunpack.c.l.b16 %v59
  %v158 = vunpack.c.l.b16 %v60
  %v159 = vunpack.c.l.b16 %v61
  %v160 = vunpack.c.l.b16 %v62
  %v161 = vunpack.c.l.b16 %v63
  %v162 = vunpack.c.l.b16 %v64
  %v163 = vunpack.c.l.b16 %v65
  %v164 = vpack.c.b16 %v116, %v115
  %v165 = vpack.c.b16 %v118, %v117
  %v166 = vpack.c.b16 %v120, %v119
  %v167 = vpack.c.b16 %v122, %v121
  %v168 = vpack.c.b16 %v124, %v123
  %v169 = vpack.c.b16 %v126, %v125
  %v170 = vpack.c.b16 %v128, %v127
  %v171 = vpack.c.b16 %v130, %v129
  %v172 = vpack.c.b16 %v132, %v131
  %v173 = vpack.c.b16 %v134, %v133
  %v174 = vpack.c.b16 %v136, %v135
  %v175 = vpack.c.b16 %v138, %v137
  %v176 = vpack.c.b16 %v140, %v139
  %v177 = vpack.c.b16 %v142, %v141
  %v178 = vpack.c.b16 %v144, %v143
  %v179 = vpack.c.b16 %v146, %v145
  %v180 = vpack.c.b16 %v148, %v147
  %v181 = vpack.c.b16 %v150, %v149
  %v182 = vpack.c.b16 %v152, %v151
  %v183 = vpack.c.b16 %v154, %v153
  %v184 = vpack.c.b16 %v156, %v155
  %v185 = vpack.c.b16 %v158, %v157
  %v186 = vpack.c.b16 %v160, %v159
  %v187 = vpack.c.b16 %v162, %v161
  %v188 = vpack.c.b16 %v163, %v163
  %v191 = vunpack.c.l.b16 %v15
  %v192 = vunpack.c.l.b16 %v16
  %v193 = vpack.c.b16 %v192, %v191
  %vm194 = vcmask 72704
  %v196 = vsel %vm194, %v164, 0
  %v199 = vsel %vm194, %v165, 0
  %v202 = vsel %vm194, %v166, 0
  %v205 = vsel %vm194, %v167, 0
  %v208 = vsel %vm194, %v168, 0
  %v211 = vsel %vm194, %v169, 0
  %v214 = vsel %vm194, %v170, 0
  %v217 = vsel %vm194, %v171, 0
  %v220 = vsel %vm194, %v172, 0
  %v223 = vsel %vm194, %v173, 0
  %v226 = vsel %vm194, %v174, 0
  %v229 = vsel %vm194, %v175, 0
  %v232 = vsel %vm194, %v176, 0
  %v235 = vsel %vm194, %v177, 0
  %v238 = vsel %vm194, %v178, 0
  %v241 = vsel %vm194, %v179, 0
  %v244 = vsel %vm194, %v180, 0
  %v247 = vsel %vm194, %v181, 0
  %v250 = vsel %vm194, %v182, 0
  %v253 = vsel %vm194, %v183, 0
  %v256 = vsel %vm194, %v184, 0
  %v259 = vsel %vm194, %v185, 0
  %v262 = vsel %vm194, %v186, 0
  %v265 = vsel %vm194, %v187, 0
  %v268 = vsel %vm194, %v188, 0
  %vm270 = vcmask 1043456
  %vm271 = vcmask 1044480
  %v272 = vsel %vm270, 4294967295, 65535
  %v273 = vsel %vm271, %v272, 0
  %v275 = vand.u32 %v193, %v273
  %277 = vmatprep.subr.bf16.mxu0 0
  %278 = vmatpush1.bf16.msra.mxu0 %v275
  %279 = vmatprep.subr.bf16.mxu0 0
  %280 = vmatpush1.bf16.msra.mxu0 0
  %281 = vmatprep.subr.bf16.mxu0 0
  %282 = vmatpush1.bf16.msra.mxu0 0
  %283 = vmatprep.subr.bf16.mxu0 0
  %284 = vmatpush1.bf16.msra.mxu0 0
  %285 = vmatprep.subr.bf16.mxu0 0
  %286 = vmatpush1.bf16.msra.mxu0 0
  %287 = vmatprep.subr.bf16.mxu0 0
  %288 = vmatpush1.bf16.msra.mxu0 0
  %289 = vmatprep.subr.bf16.mxu0 0
  %290 = vmatpush1.bf16.msra.mxu0 0
  %291 = vmatprep.subr.bf16.mxu0 0
  %292 = vmatpush1.bf16.msra.mxu0 0
  %293 = vmatprep.subr.bf16.mxu0 0
  %294 = vmatpush1.bf16.msra.mxu0 0
  %295 = vmatprep.subr.bf16.mxu0 0
  %296 = vmatpush1.bf16.msra.mxu0 0
  %297 = vmatprep.subr.bf16.mxu0 0
  %298 = vmatpush1.bf16.msra.mxu0 0
  %299 = vmatprep.subr.bf16.mxu0 0
  %300 = vmatpush1.bf16.msra.mxu0 0
  %301 = vmatprep.subr.bf16.mxu0 0
  %302 = vmatpush1.bf16.msra.mxu0 0
  %303 = vmatprep.subr.bf16.mxu0 0
  %304 = vmatpush1.bf16.msra.mxu0 0
  %305 = vmatprep.subr.bf16.mxu0 0
  %306 = vmatpush1.bf16.msra.mxu0 0
  %307 = vmatprep.subr.bf16.mxu0 0
  %308 = vmatpush1.bf16.msra.mxu0 0
  %309 = vmatprep.mubr.bf16.mxu0 0
  %310 = vmatmul.mubr.bf16.gmra.mrb[0].mxu0 %v196
  %v311 = vpop.f32.mrb[0].mxu0
  %v312 = vadd.f32 0.0, %v311
  %v313 = vpop.f32.mrb[0].mxu0
  %v314 = vpop.f32.mrb[0].mxu0
  %v315 = vadd.f32 0.0, %v314
  %v316 = vpop.f32.mrb[0].mxu0
  %317 = vmatprep.mubr.bf16.mxu0 0
  %318 = vmatmul.mubr.bf16.gmra.mrb[0].mxu0 %v199
  %v319 = vpop.f32.mrb[0].mxu0
  %v320 = vadd.f32 0.0, %v319
  %v321 = vpop.f32.mrb[0].mxu0
  %v322 = vpop.f32.mrb[0].mxu0
  %v323 = vadd.f32 0.0, %v322
  %v324 = vpop.f32.mrb[0].mxu0
  %325 = vmatprep.mubr.bf16.mxu0 0
  %326 = vmatmul.mubr.bf16.gmra.mrb[0].mxu0 %v202
  %v327 = vpop.f32.mrb[0].mxu0
  %v328 = vadd.f32 0.0, %v327
  %v329 = vpop.f32.mrb[0].mxu0
  %v330 = vpop.f32.mrb[0].mxu0
  %v331 = vadd.f32 0.0, %v330
  %v332 = vpop.f32.mrb[0].mxu0
  %333 = vmatprep.mubr.bf16.mxu0 0
  %334 = vmatmul.mubr.bf16.gmra.mrb[0].mxu0 %v205
  %v335 = vpop.f32.mrb[0].mxu0
  %v336 = vadd.f32 0.0, %v335
  %v337 = vpop.f32.mrb[0].mxu0
  %v338 = vpop.f32.mrb[0].mxu0
  %v339 = vadd.f32 0.0, %v338
  %v340 = vpop.f32.mrb[0].mxu0
  %341 = vmatprep.mubr.bf16.mxu0 0
  %342 = vmatmul.mubr.bf16.gmra.mrb[0].mxu0 %v208
  %v343 = vpop.f32.mrb[0].mxu0
  %v344 = vadd.f32 0.0, %v343
  %v345 = vpop.f32.mrb[0].mxu0
  %v346 = vpop.f32.mrb[0].mxu0
  %v347 = vadd.f32 0.0, %v346
  %v348 = vpop.f32.mrb[0].mxu0
  %349 = vmatprep.mubr.bf16.mxu0 0
  %350 = vmatmul.mubr.bf16.gmra.mrb[0].mxu0 %v211
  %v351 = vpop.f32.mrb[0].mxu0
  %v352 = vadd.f32 0.0, %v351
  %v353 = vpop.f32.mrb[0].mxu0
  %v354 = vpop.f32.mrb[0].mxu0
  %v355 = vadd.f32 0.0, %v354
  %v356 = vpop.f32.mrb[0].mxu0
  %357 = vmatprep.mubr.bf16.mxu0 0
  %358 = vmatmul.mubr.bf16.gmra.mrb[0].mxu0 %v214
  %v359 = vpop.f32.mrb[0].mxu0
  %v360 = vadd.f32 0.0, %v359
  %v361 = vpop.f32.mrb[0].mxu0
  %v362 = vpop.f32.mrb[0].mxu0
  %v363 = vadd.f32 0.0, %v362
  %v364 = vpop.f32.mrb[0].mxu0
  %365 = vmatprep.mubr.bf16.mxu0 0
  %366 = vmatmul.mubr.bf16.gmra.mrb[0].mxu0 %v217
  %v367 = vpop.f32.mrb[0].mxu0
  %v368 = vadd.f32 0.0, %v367
  %v369 = vpop.f32.mrb[0].mxu0
  %v370 = vpop.f32.mrb[0].mxu0
  %v371 = vadd.f32 0.0, %v370
  %v372 = vpop.f32.mrb[0].mxu0
  %373 = vmatprep.mubr.bf16.mxu0 0
  %374 = vmatmul.mubr.bf16.gmra.mrb[0].mxu0 %v220
  %v375 = vpop.f32.mrb[0].mxu0
  %v376 = vadd.f32 0.0, %v375
  %v377 = vpop.f32.mrb[0].mxu0
  %v378 = vpop.f32.mrb[0].mxu0
  %v379 = vadd.f32 0.0, %v378
  %v380 = vpop.f32.mrb[0].mxu0
  %381 = vmatprep.mubr.bf16.mxu0 0
  %382 = vmatmul.mubr.bf16.gmra.mrb[0].mxu0 %v223
  %v383 = vpop.f32.mrb[0].mxu0
  %v384 = vadd.f32 0.0, %v383
  %v385 = vpop.f32.mrb[0].mxu0
  %v386 = vpop.f32.mrb[0].mxu0
  %v387 = vadd.f32 0.0, %v386
  %v388 = vpop.f32.mrb[0].mxu0
  %389 = vmatprep.mubr.bf16.mxu0 0
  %390 = vmatmul.mubr.bf16.gmra.mrb[0].mxu0 %v226
  %v391 = vpop.f32.mrb[0].mxu0
  %v392 = vadd.f32 0.0, %v391
  %v393 = vpop.f32.mrb[0].mxu0
  %v394 = vpop.f32.mrb[0].mxu0
  %v395 = vadd.f32 0.0, %v394
  %v396 = vpop.f32.mrb[0].mxu0
  %397 = vmatprep.mubr.bf16.mxu0 0
  %398 = vmatmul.mubr.bf16.gmra.mrb[0].mxu0 %v229
  %v399 = vpop.f32.mrb[0].mxu0
  %v400 = vadd.f32 0.0, %v399
  %v401 = vpop.f32.mrb[0].mxu0
  %v402 = vpop.f32.mrb[0].mxu0
  %v403 = vadd.f32 0.0, %v402
  %v404 = vpop.f32.mrb[0].mxu0
  %405 = vmatprep.mubr.bf16.mxu0 0
  %406 = vmatmul.mubr.bf16.gmra.mrb[0].mxu0 %v232
  %v407 = vpop.f32.mrb[0].mxu0
  %v408 = vadd.f32 0.0, %v407
  %v409 = vpop.f32.mrb[0].mxu0
  %v410 = vpop.f32.mrb[0].mxu0
  %v411 = vadd.f32 0.0, %v410
  %v412 = vpop.f32.mrb[0].mxu0
  %413 = vmatprep.mubr.bf16.mxu0 0
  %414 = vmatmul.mubr.bf16.gmra.mrb[0].mxu0 %v235
  %v415 = vpop.f32.mrb[0].mxu0
  %v416 = vadd.f32 0.0, %v415
  %v417 = vpop.f32.mrb[0].mxu0
  %v418 = vpop.f32.mrb[0].mxu0
  %v419 = vadd.f32 0.0, %v418
  %v420 = vpop.f32.mrb[0].mxu0
  %421 = vmatprep.mubr.bf16.mxu0 0
  %422 = vmatmul.mubr.bf16.gmra.mrb[0].mxu0 %v238
  %v423 = vpop.f32.mrb[0].mxu0
  %v424 = vadd.f32 0.0, %v423
  %v425 = vpop.f32.mrb[0].mxu0
  %v426 = vpop.f32.mrb[0].mxu0
  %v427 = vadd.f32 0.0, %v426
  %v428 = vpop.f32.mrb[0].mxu0
  %429 = vmatprep.mubr.bf16.mxu0 0
  %430 = vmatmul.mubr.bf16.gmra.mrb[0].mxu0 %v241
  %v431 = vpop.f32.mrb[0].mxu0
  %v432 = vadd.f32 0.0, %v431
  %v433 = vpop.f32.mrb[0].mxu0
  %v434 = vpop.f32.mrb[0].mxu0
  %v435 = vadd.f32 0.0, %v434
  %v436 = vpop.f32.mrb[0].mxu0
  %437 = vmatprep.mubr.bf16.mxu0 0
  %438 = vmatmul.mubr.bf16.gmra.mrb[0].mxu0 %v244
  %v439 = vpop.f32.mrb[0].mxu0
  %v440 = vadd.f32 0.0, %v439
  %v441 = vpop.f32.mrb[0].mxu0
  %v442 = vpop.f32.mrb[0].mxu0
  %v443 = vadd.f32 0.0, %v442
  %v444 = vpop.f32.mrb[0].mxu0
  %445 = vmatprep.mubr.bf16.mxu0 0
  %446 = vmatmul.mubr.bf16.gmra.mrb[0].mxu0 %v247
  %v447 = vpop.f32.mrb[0].mxu0
  %v448 = vadd.f32 0.0, %v447
  %v449 = vpop.f32.mrb[0].mxu0
  %v450 = vpop.f32.mrb[0].mxu0
  %v451 = vadd.f32 0.0, %v450
  %v452 = vpop.f32.mrb[0].mxu0
  %453 = vmatprep.mubr.bf16.mxu0 0
  %454 = vmatmul.mubr.bf16.gmra.mrb[0].mxu0 %v250
  %v455 = vpop.f32.mrb[0].mxu0
  %v456 = vadd.f32 0.0, %v455
  %v457 = vpop.f32.mrb[0].mxu0
  %v458 = vpop.f32.mrb[0].mxu0
  %v459 = vadd.f32 0.0, %v458
  %v460 = vpop.f32.mrb[0].mxu0
  %461 = vmatprep.mubr.bf16.mxu0 0
  %462 = vmatmul.mubr.bf16.gmra.mrb[0].mxu0 %v253
  %v463 = vpop.f32.mrb[0].mxu0
  %v464 = vadd.f32 0.0, %v463
  %v465 = vpop.f32.mrb[0].mxu0
  %v466 = vpop.f32.mrb[0].mxu0
  %v467 = vadd.f32 0.0, %v466
  %v468 = vpop.f32.mrb[0].mxu0
  %469 = vmatprep.mubr.bf16.mxu0 0
  %470 = vmatmul.mubr.bf16.gmra.mrb[0].mxu0 %v256
  %v471 = vpop.f32.mrb[0].mxu0
  %v472 = vadd.f32 0.0, %v471
  %v473 = vpop.f32.mrb[0].mxu0
  %v474 = vpop.f32.mrb[0].mxu0
  %v475 = vadd.f32 0.0, %v474
  %v476 = vpop.f32.mrb[0].mxu0
  %477 = vmatprep.mubr.bf16.mxu0 0
  %478 = vmatmul.mubr.bf16.gmra.mrb[0].mxu0 %v259
  %v479 = vpop.f32.mrb[0].mxu0
  %v480 = vadd.f32 0.0, %v479
  %v481 = vpop.f32.mrb[0].mxu0
  %v482 = vpop.f32.mrb[0].mxu0
  %v483 = vadd.f32 0.0, %v482
  %v484 = vpop.f32.mrb[0].mxu0
  %485 = vmatprep.mubr.bf16.mxu0 0
  %486 = vmatmul.mubr.bf16.gmra.mrb[0].mxu0 %v262
  %v487 = vpop.f32.mrb[0].mxu0
  %v488 = vadd.f32 0.0, %v487
  %v489 = vpop.f32.mrb[0].mxu0
  %v490 = vpop.f32.mrb[0].mxu0
  %v491 = vadd.f32 0.0, %v490
  %v492 = vpop.f32.mrb[0].mxu0
  %493 = vmatprep.mubr.bf16.mxu0 0
  %494 = vmatmul.mubr.bf16.gmra.mrb[0].mxu0 %v265
  %v495 = vpop.f32.mrb[0].mxu0
  %v496 = vadd.f32 0.0, %v495
  %v497 = vpop.f32.mrb[0].mxu0
  %v498 = vpop.f32.mrb[0].mxu0
  %v499 = vadd.f32 0.0, %v498
  %v500 = vpop.f32.mrb[0].mxu0
  %501 = vmatprep.mubr.bf16.mxu0 0
  %502 = vmatmul.mubr.bf16.gmra.mrb[0].mxu0 %v268
  %v503 = vpop.f32.mrb[0].mxu0
  %v504 = vadd.f32 0.0, %v503
  %v505 = vpop.f32.mrb[0].mxu0
  %v506 = vpop.f32.mrb[0].mxu0
  %v507 = vpop.f32.mrb[0].mxu0
  %508 = vdwg.mxu0
  %s509 = scalar_lea.vmem %s0, 196
  %v510 = vld [vmem:[%s509] sm:$0xf]
  %v511 = vld [vmem:[%s509 + $0x4] sm:$0xf]
  %v512 = vld [vmem:[%s509 + $0x8] sm:$0xf]
  %v513 = vld [vmem:[%s509 + $0xc] sm:$0xf]
  %v514 = vld [vmem:[%s509 + $0x10] sm:$0xf]
  %v515 = vld [vmem:[%s509 + $0x14] sm:$0xf]
  %v516 = vld [vmem:[%s509 + $0x18] sm:$0xf]
  %v517 = vld [vmem:[%s509 + $0x1c] sm:$0xf]
  %v518 = vld [vmem:[%s509 + $0x20] sm:$0xf]
  %v519 = vld [vmem:[%s509 + $0x24] sm:$0xf]
  %v520 = vld [vmem:[%s509 + $0x28] sm:$0xf]
  %v521 = vld [vmem:[%s509 + $0x2c] sm:$0xf]
  %v522 = vld [vmem:[%s509 + $0x30] sm:$0xf]
  %v523 = vld [vmem:[%s509 + $0x34] sm:$0xf]
  %v524 = vld [vmem:[%s509 + $0x38] sm:$0xf]
  %v525 = vld [vmem:[%s509 + $0x3c] sm:$0xf]
  %v526 = vld [vmem:[%s509 + $0x40] sm:$0xf]
  %v527 = vld [vmem:[%s509 + $0x44] sm:$0xf]
  %v528 = vld [vmem:[%s509 + $0x48] sm:$0xf]
  %v529 = vld [vmem:[%s509 + $0x4c] sm:$0xf]
  %v530 = vld [vmem:[%s509 + $0x50] sm:$0xf]
  %v531 = vld [vmem:[%s509 + $0x54] sm:$0xf]
  %v532 = vld [vmem:[%s509 + $0x58] sm:$0xf]
  %v533 = vld [vmem:[%s509 + $0x5c] sm:$0xf]
  %v534 = vld [vmem:[%s509 + $0x60] sm:$0xf]
  %v535 = vld [vmem:[%s509 + $0x64] sm:$0xf]
  %v536 = vld [vmem:[%s509 + $0x68] sm:$0xf]
  %v537 = vld [vmem:[%s509 + $0x6c] sm:$0xf]
  %v538 = vld [vmem:[%s509 + $0x70] sm:$0xf]
  %v539 = vld [vmem:[%s509 + $0x74] sm:$0xf]
  %v540 = vld [vmem:[%s509 + $0x78] sm:$0xf]
  %v541 = vld [vmem:[%s509 + $0x7c] sm:$0xf]
  %v542 = vld [vmem:[%s509 + $0x80] sm:$0xf]
  %v543 = vld [vmem:[%s509 + $0x84] sm:$0xf]
  %v544 = vld [vmem:[%s509 + $0x88] sm:$0xf]
  %v545 = vld [vmem:[%s509 + $0x8c] sm:$0xf]
  %v546 = vld [vmem:[%s509 + $0x90] sm:$0xf]
  %v547 = vld [vmem:[%s509 + $0x94] sm:$0xf]
  %v548 = vld [vmem:[%s509 + $0x98] sm:$0xf]
  %v549 = vld [vmem:[%s509 + $0x9c] sm:$0xf]
  %v550 = vld [vmem:[%s509 + $0xa0] sm:$0xf]
  %v551 = vld [vmem:[%s509 + $0xa4] sm:$0xf]
  %v552 = vld [vmem:[%s509 + $0xa8] sm:$0xf]
  %v553 = vld [vmem:[%s509 + $0xac] sm:$0xf]
  %v554 = vld [vmem:[%s509 + $0xb0] sm:$0xf]
  %v555 = vld [vmem:[%s509 + $0xb4] sm:$0xf]
  %v556 = vld [vmem:[%s509 + $0xb8] sm:$0xf]
  %v557 = vld [vmem:[%s509 + $0xbc] sm:$0xf]
  %v558 = vld [vmem:[%s509 + $0xc0] sm:$0xf]
  %v608 = vunpack.c.l.b16 %v510
  %v609 = vunpack.c.l.b16 %v511
  %v610 = vunpack.c.l.b16 %v512
  %v611 = vunpack.c.l.b16 %v513
  %v612 = vunpack.c.l.b16 %v514
  %v613 = vunpack.c.l.b16 %v515
  %v614 = vunpack.c.l.b16 %v516
  %v615 = vunpack.c.l.b16 %v517
  %v616 = vunpack.c.l.b16 %v518
  %v617 = vunpack.c.l.b16 %v519
  %v618 = vunpack.c.l.b16 %v520
  %v619 = vunpack.c.l.b16 %v521
  %v620 = vunpack.c.l.b16 %v522
  %v621 = vunpack.c.l.b16 %v523
  %v622 = vunpack.c.l.b16 %v524
  %v623 = vunpack.c.l.b16 %v525
  %v624 = vunpack.c.l.b16 %v526
  %v625 = vunpack.c.l.b16 %v527
  %v626 = vunpack.c.l.b16 %v528
  %v627 = vunpack.c.l.b16 %v529
  %v628 = vunpack.c.l.b16 %v530
  %v629 = vunpack.c.l.b16 %v531
  %v630 = vunpack.c.l.b16 %v532
  %v631 = vunpack.c.l.b16 %v533
  %v632 = vunpack.c.l.b16 %v534
  %v633 = vunpack.c.l.b16 %v535
  %v634 = vunpack.c.l.b16 %v536
  %v635 = vunpack.c.l.b16 %v537
  %v636 = vunpack.c.l.b16 %v538
  %v637 = vunpack.c.l.b16 %v539
  %v638 = vunpack.c.l.b16 %v540
  %v639 = vunpack.c.l.b16 %v541
  %v640 = vunpack.c.l.b16 %v542
  %v641 = vunpack.c.l.b16 %v543
  %v642 = vunpack.c.l.b16 %v544
  %v643 = vunpack.c.l.b16 %v545
  %v644 = vunpack.c.l.b16 %v546
  %v645 = vunpack.c.l.b16 %v547
  %v646 = vunpack.c.l.b16 %v548
  %v647 = vunpack.c.l.b16 %v549
  %v648 = vunpack.c.l.b16 %v550
  %v649 = vunpack.c.l.b16 %v551
  %v650 = vunpack.c.l.b16 %v552
  %v651 = vunpack.c.l.b16 %v553
  %v652 = vunpack.c.l.b16 %v554
  %v653 = vunpack.c.l.b16 %v555
  %v654 = vunpack.c.l.b16 %v556
  %v655 = vunpack.c.l.b16 %v557
  %v656 = vunpack.c.l.b16 %v558
  %v657 = vpack.c.b16 %v609, %v608
  %v658 = vpack.c.b16 %v611, %v610
  %v659 = vpack.c.b16 %v613, %v612
  %v660 = vpack.c.b16 %v615, %v614
  %v661 = vpack.c.b16 %v617, %v616
  %v662 = vpack.c.b16 %v619, %v618
  %v663 = vpack.c.b16 %v621, %v620
  %v664 = vpack.c.b16 %v623, %v622
  %v665 = vpack.c.b16 %v625, %v624
  %v666 = vpack.c.b16 %v627, %v626
  %v667 = vpack.c.b16 %v629, %v628
  %v668 = vpack.c.b16 %v631, %v630
  %v669 = vpack.c.b16 %v633, %v632
  %v670 = vpack.c.b16 %v635, %v634
  %v671 = vpack.c.b16 %v637, %v636
  %v672 = vpack.c.b16 %v639, %v638
  %v673 = vpack.c.b16 %v641, %v640
  %v674 = vpack.c.b16 %v643, %v642
  %v675 = vpack.c.b16 %v645, %v644
  %v676 = vpack.c.b16 %v647, %v646
  %v677 = vpack.c.b16 %v649, %v648
  %v678 = vpack.c.b16 %v651, %v650
  %v679 = vpack.c.b16 %v653, %v652
  %v680 = vpack.c.b16 %v655, %v654
  %v681 = vpack.c.b16 %v656, %v656
  %v683 = vsel %vm194, %v657, 0
  %v686 = vsel %vm194, %v658, 0
  %v689 = vsel %vm194, %v659, 0
  %v692 = vsel %vm194, %v660, 0
  %v695 = vsel %vm194, %v661, 0
  %v698 = vsel %vm194, %v662, 0
  %v701 = vsel %vm194, %v663, 0
  %v704 = vsel %vm194, %v664, 0
  %v707 = vsel %vm194, %v665, 0
  %v710 = vsel %vm194, %v666, 0
  %v713 = vsel %vm194, %v667, 0
  %v716 = vsel %vm194, %v668, 0
  %v719 = vsel %vm194, %v669, 0
  %v722 = vsel %vm194, %v670, 0
  %v725 = vsel %vm194, %v671, 0
  %v728 = vsel %vm194, %v672, 0
  %v731 = vsel %vm194, %v673, 0
  %v734 = vsel %vm194, %v674, 0
  %v737 = vsel %vm194, %v675, 0
  %v740 = vsel %vm194, %v676, 0
  %v743 = vsel %vm194, %v677, 0
  %v746 = vsel %vm194, %v678, 0
  %v749 = vsel %vm194, %v679, 0
  %v752 = vsel %vm194, %v680, 0
  %v755 = vsel %vm194, %v681, 0
  %757 = vmatprep.subr.bf16.mxu0 0
  %758 = vmatpush1.bf16.msra.mxu0 %v275
  %759 = vmatprep.subr.bf16.mxu0 0
  %760 = vmatpush1.bf16.msra.mxu0 0
  %761 = vmatprep.subr.bf16.mxu0 0
  %762 = vmatpush1.bf16.msra.mxu0 0
  %763 = vmatprep.subr.bf16.mxu0 0
  %764 = vmatpush1.bf16.msra.mxu0 0
  %765 = vmatprep.subr.bf16.mxu0 0
  %766 = vmatpush1.bf16.msra.mxu0 0
  %767 = vmatprep.subr.bf16.mxu0 0
  %768 = vmatpush1.bf16.msra.mxu0 0
  %769 = vmatprep.subr.bf16.mxu0 0
  %770 = vmatpush1.bf16.msra.mxu0 0
  %771 = vmatprep.subr.bf16.mxu0 0
  %772 = vmatpush1.bf16.msra.mxu0 0
  %773 = vmatprep.subr.bf16.mxu0 0
  %774 = vmatpush1.bf16.msra.mxu0 0
  %775 = vmatprep.subr.bf16.mxu0 0
  %776 = vmatpush1.bf16.msra.mxu0 0
  %777 = vmatprep.subr.bf16.mxu0 0
  %778 = vmatpush1.bf16.msra.mxu0 0
  %779 = vmatprep.subr.bf16.mxu0 0
  %780 = vmatpush1.bf16.msra.mxu0 0
  %781 = vmatprep.subr.bf16.mxu0 0
  %782 = vmatpush1.bf16.msra.mxu0 0
  %783 = vmatprep.subr.bf16.mxu0 0
  %784 = vmatpush1.bf16.msra.mxu0 0
  %785 = vmatprep.subr.bf16.mxu0 0
  %786 = vmatpush1.bf16.msra.mxu0 0
  %787 = vmatprep.subr.bf16.mxu0 0
  %788 = vmatpush1.bf16.msra.mxu0 0
  %789 = vmatprep.mubr.bf16.mxu0 0
  %790 = vmatmul.mubr.bf16.gmra.mrb[0].mxu0 %v683
  %v791 = vpop.f32.mrb[0].mxu0
  %v792 = vadd.f32 0.0, %v791
  %v793 = vpop.f32.mrb[0].mxu0
  %v794 = vpop.f32.mrb[0].mxu0
  %v795 = vadd.f32 0.0, %v794
  %v796 = vpop.f32.mrb[0].mxu0
  %797 = vmatprep.mubr.bf16.mxu0 0
  %798 = vmatmul.mubr.bf16.gmra.mrb[0].mxu0 %v686
  %v799 = vpop.f32.mrb[0].mxu0
  %v800 = vadd.f32 0.0, %v799
  %v801 = vpop.f32.mrb[0].mxu0
  %v802 = vpop.f32.mrb[0].mxu0
  %v803 = vadd.f32 0.0, %v802
  %v804 = vpop.f32.mrb[0].mxu0
  %805 = vmatprep.mubr.bf16.mxu0 0
  %806 = vmatmul.mubr.bf16.gmra.mrb[0].mxu0 %v689
  %v807 = vpop.f32.mrb[0].mxu0
  %v808 = vadd.f32 0.0, %v807
  %v809 = vpop.f32.mrb[0].mxu0
  %v810 = vpop.f32.mrb[0].mxu0
  %v811 = vadd.f32 0.0, %v810
  %v812 = vpop.f32.mrb[0].mxu0
  %813 = vmatprep.mubr.bf16.mxu0 0
  %814 = vmatmul.mubr.bf16.gmra.mrb[0].mxu0 %v692
  %v815 = vpop.f32.mrb[0].mxu0
  %v816 = vadd.f32 0.0, %v815
  %v817 = vpop.f32.mrb[0].mxu0
  %v818 = vpop.f32.mrb[0].mxu0
  %v819 = vadd.f32 0.0, %v818
  %v820 = vpop.f32.mrb[0].mxu0
  %821 = vmatprep.mubr.bf16.mxu0 0
  %822 = vmatmul.mubr.bf16.gmra.mrb[0].mxu0 %v695
  %v823 = vpop.f32.mrb[0].mxu0
  %v824 = vadd.f32 0.0, %v823
  %v825 = vpop.f32.mrb[0].mxu0
  %v826 = vpop.f32.mrb[0].mxu0
  %v827 = vadd.f32 0.0, %v826
  %v828 = vpop.f32.mrb[0].mxu0
  %829 = vmatprep.mubr.bf16.mxu0 0
  %830 = vmatmul.mubr.bf16.gmra.mrb[0].mxu0 %v698
  %v831 = vpop.f32.mrb[0].mxu0
  %v832 = vadd.f32 0.0, %v831
  %v833 = vpop.f32.mrb[0].mxu0
  %v834 = vpop.f32.mrb[0].mxu0
  %v835 = vadd.f32 0.0, %v834
  %v836 = vpop.f32.mrb[0].mxu0
  %837 = vmatprep.mubr.bf16.mxu0 0
  %838 = vmatmul.mubr.bf16.gmra.mrb[0].mxu0 %v701
  %v839 = vpop.f32.mrb[0].mxu0
  %v840 = vadd.f32 0.0, %v839
  %v841 = vpop.f32.mrb[0].mxu0
  %v842 = vpop.f32.mrb[0].mxu0
  %v843 = vadd.f32 0.0, %v842
  %v844 = vpop.f32.mrb[0].mxu0
  %845 = vmatprep.mubr.bf16.mxu0 0
  %846 = vmatmul.mubr.bf16.gmra.mrb[0].mxu0 %v704
  %v847 = vpop.f32.mrb[0].mxu0
  %v848 = vadd.f32 0.0, %v847
  %v849 = vpop.f32.mrb[0].mxu0
  %v850 = vpop.f32.mrb[0].mxu0
  %v851 = vadd.f32 0.0, %v850
  %v852 = vpop.f32.mrb[0].mxu0
  %853 = vmatprep.mubr.bf16.mxu0 0
  %854 = vmatmul.mubr.bf16.gmra.mrb[0].mxu0 %v707
  %v855 = vpop.f32.mrb[0].mxu0
  %v856 = vadd.f32 0.0, %v855
  %v857 = vpop.f32.mrb[0].mxu0
  %v858 = vpop.f32.mrb[0].mxu0
  %v859 = vadd.f32 0.0, %v858
  %v860 = vpop.f32.mrb[0].mxu0
  %861 = vmatprep.mubr.bf16.mxu0 0
  %862 = vmatmul.mubr.bf16.gmra.mrb[0].mxu0 %v710
  %v863 = vpop.f32.mrb[0].mxu0
  %v864 = vadd.f32 0.0, %v863
  %v865 = vpop.f32.mrb[0].mxu0
  %v866 = vpop.f32.mrb[0].mxu0
  %v867 = vadd.f32 0.0, %v866
  %v868 = vpop.f32.mrb[0].mxu0
  %869 = vmatprep.mubr.bf16.mxu0 0
  %870 = vmatmul.mubr.bf16.gmra.mrb[0].mxu0 %v713
  %v871 = vpop.f32.mrb[0].mxu0
  %v872 = vadd.f32 0.0, %v871
  %v873 = vpop.f32.mrb[0].mxu0
  %v874 = vpop.f32.mrb[0].mxu0
  %v875 = vadd.f32 0.0, %v874
  %v876 = vpop.f32.mrb[0].mxu0
  %877 = vmatprep.mubr.bf16.mxu0 0
  %878 = vmatmul.mubr.bf16.gmra.mrb[0].mxu0 %v716
  %v879 = vpop.f32.mrb[0].mxu0
  %v880 = vadd.f32 0.0, %v879
  %v881 = vpop.f32.mrb[0].mxu0
  %v882 = vpop.f32.mrb[0].mxu0
  %v883 = vadd.f32 0.0, %v882
  %v884 = vpop.f32.mrb[0].mxu0
  %885 = vmatprep.mubr.bf16.mxu0 0
  %886 = vmatmul.mubr.bf16.gmra.mrb[0].mxu0 %v719
  %v887 = vpop.f32.mrb[0].mxu0
  %v888 = vadd.f32 0.0, %v887
  %v889 = vpop.f32.mrb[0].mxu0
  %v890 = vpop.f32.mrb[0].mxu0
  %v891 = vadd.f32 0.0, %v890
  %v892 = vpop.f32.mrb[0].mxu0
  %893 = vmatprep.mubr.bf16.mxu0 0
  %894 = vmatmul.mubr.bf16.gmra.mrb[0].mxu0 %v722
  %v895 = vpop.f32.mrb[0].mxu0
  %v896 = vadd.f32 0.0, %v895
  %v897 = vpop.f32.mrb[0].mxu0
  %v898 = vpop.f32.mrb[0].mxu0
  %v899 = vadd.f32 0.0, %v898
  %v900 = vpop.f32.mrb[0].mxu0
  %901 = vmatprep.mubr.bf16.mxu0 0
  %902 = vmatmul.mubr.bf16.gmra.mrb[0].mxu0 %v725
  %v903 = vpop.f32.mrb[0].mxu0
  %v904 = vadd.f32 0.0, %v903
  %v905 = vpop.f32.mrb[0].mxu0
  %v906 = vpop.f32.mrb[0].mxu0
  %v907 = vadd.f32 0.0, %v906
  %v908 = vpop.f32.mrb[0].mxu0
  %909 = vmatprep.mubr.bf16.mxu0 0
  %910 = vmatmul.mubr.bf16.gmra.mrb[0].mxu0 %v728
  %v911 = vpop.f32.mrb[0].mxu0
  %v912 = vadd.f32 0.0, %v911
  %v913 = vpop.f32.mrb[0].mxu0
  %v914 = vpop.f32.mrb[0].mxu0
  %v915 = vadd.f32 0.0, %v914
  %v916 = vpop.f32.mrb[0].mxu0
  %917 = vmatprep.mubr.bf16.mxu0 0
  %918 = vmatmul.mubr.bf16.gmra.mrb[0].mxu0 %v731
  %v919 = vpop.f32.mrb[0].mxu0
  %v920 = vadd.f32 0.0, %v919
  %v921 = vpop.f32.mrb[0].mxu0
  %v922 = vpop.f32.mrb[0].mxu0
  %v923 = vadd.f32 0.0, %v922
  %v924 = vpop.f32.mrb[0].mxu0
  %925 = vmatprep.mubr.bf16.mxu0 0
  %926 = vmatmul.mubr.bf16.gmra.mrb[0].mxu0 %v734
  %v927 = vpop.f32.mrb[0].mxu0
  %v928 = vadd.f32 0.0, %v927
  %v929 = vpop.f32.mrb[0].mxu0
  %v930 = vpop.f32.mrb[0].mxu0
  %v931 = vadd.f32 0.0, %v930
  %v932 = vpop.f32.mrb[0].mxu0
  %933 = vmatprep.mubr.bf16.mxu0 0
  %934 = vmatmul.mubr.bf16.gmra.mrb[0].mxu0 %v737
  %v935 = vpop.f32.mrb[0].mxu0
  %v936 = vadd.f32 0.0, %v935
  %v937 = vpop.f32.mrb[0].mxu0
  %v938 = vpop.f32.mrb[0].mxu0
  %v939 = vadd.f32 0.0, %v938
  %v940 = vpop.f32.mrb[0].mxu0
  %941 = vmatprep.mubr.bf16.mxu0 0
  %942 = vmatmul.mubr.bf16.gmra.mrb[0].mxu0 %v740
  %v943 = vpop.f32.mrb[0].mxu0
  %v944 = vadd.f32 0.0, %v943
  %v945 = vpop.f32.mrb[0].mxu0
  %v946 = vpop.f32.mrb[0].mxu0
  %v947 = vadd.f32 0.0, %v946
  %v948 = vpop.f32.mrb[0].mxu0
  %949 = vmatprep.mubr.bf16.mxu0 0
  %950 = vmatmul.mubr.bf16.gmra.mrb[0].mxu0 %v743
  %v951 = vpop.f32.mrb[0].mxu0
  %v952 = vadd.f32 0.0, %v951
  %v953 = vpop.f32.mrb[0].mxu0
  %v954 = vpop.f32.mrb[0].mxu0
  %v955 = vadd.f32 0.0, %v954
  %v956 = vpop.f32.mrb[0].mxu0
  %957 = vmatprep.mubr.bf16.mxu0 0
  %958 = vmatmul.mubr.bf16.gmra.mrb[0].mxu0 %v746
  %v959 = vpop.f32.mrb[0].mxu0
  %v960 = vadd.f32 0.0, %v959
  %v961 = vpop.f32.mrb[0].mxu0
  %v962 = vpop.f32.mrb[0].mxu0
  %v963 = vadd.f32 0.0, %v962
  %v964 = vpop.f32.mrb[0].mxu0
  %965 = vmatprep.mubr.bf16.mxu0 0
  %966 = vmatmul.mubr.bf16.gmra.mrb[0].mxu0 %v749
  %v967 = vpop.f32.mrb[0].mxu0
  %v968 = vadd.f32 0.0, %v967
  %v969 = vpop.f32.mrb[0].mxu0
  %v970 = vpop.f32.mrb[0].mxu0
  %v971 = vadd.f32 0.0, %v970
  %v972 = vpop.f32.mrb[0].mxu0
  %973 = vmatprep.mubr.bf16.mxu0 0
  %974 = vmatmul.mubr.bf16.gmra.mrb[0].mxu0 %v752
  %v975 = vpop.f32.mrb[0].mxu0
  %v976 = vadd.f32 0.0, %v975
  %v977 = vpop.f32.mrb[0].mxu0
  %v978 = vpop.f32.mrb[0].mxu0
  %v979 = vadd.f32 0.0, %v978
  %v980 = vpop.f32.mrb[0].mxu0
  %981 = vmatprep.mubr.bf16.mxu0 0
  %982 = vmatmul.mubr.bf16.gmra.mrb[0].mxu0 %v755
  %v983 = vpop.f32.mrb[0].mxu0
  %v984 = vadd.f32 0.0, %v983
  %v985 = vpop.f32.mrb[0].mxu0
  %v986 = vpop.f32.mrb[0].mxu0
  %v987 = vpop.f32.mrb[0].mxu0
  %988 = vdwg.mxu0
  %s989 = scalar_lea.vmem %s0, 392
  %v990 = vld [vmem:[%s989] sm:$0xf]
  %v991 = vld [vmem:[%s989 + $0x4] sm:$0xf]
  %v992 = vld [vmem:[%s989 + $0x8] sm:$0xf]
  %v993 = vld [vmem:[%s989 + $0xc] sm:$0xf]
  %v994 = vld [vmem:[%s989 + $0x10] sm:$0xf]
  %v995 = vld [vmem:[%s989 + $0x14] sm:$0xf]
  %v996 = vld [vmem:[%s989 + $0x18] sm:$0xf]
  %v997 = vld [vmem:[%s989 + $0x1c] sm:$0xf]
  %v998 = vld [vmem:[%s989 + $0x20] sm:$0xf]
  %v999 = vld [vmem:[%s989 + $0x24] sm:$0xf]
  %v1000 = vld [vmem:[%s989 + $0x28] sm:$0xf]
  %v1001 = vld [vmem:[%s989 + $0x2c] sm:$0xf]
  %v1002 = vld [vmem:[%s989 + $0x30] sm:$0xf]
  %v1003 = vld [vmem:[%s989 + $0x34] sm:$0xf]
  %v1004 = vld [vmem:[%s989 + $0x38] sm:$0xf]
  %v1005 = vld [vmem:[%s989 + $0x3c] sm:$0xf]
  %v1006 = vld [vmem:[%s989 + $0x40] sm:$0xf]
  %v1007 = vld [vmem:[%s989 + $0x44] sm:$0xf]
  %v1008 = vld [vmem:[%s989 + $0x48] sm:$0xf]
  %v1009 = vld [vmem:[%s989 + $0x4c] sm:$0xf]
  %v1010 = vld [vmem:[%s989 + $0x50] sm:$0xf]
  %v1011 = vld [vmem:[%s989 + $0x54] sm:$0xf]
  %v1012 = vld [vmem:[%s989 + $0x58] sm:$0xf]
  %v1013 = vld [vmem:[%s989 + $0x5c] sm:$0xf]
  %v1014 = vld [vmem:[%s989 + $0x60] sm:$0xf]
  %v1015 = vld [vmem:[%s989 + $0x64] sm:$0xf]
  %v1016 = vld [vmem:[%s989 + $0x68] sm:$0xf]
  %v1017 = vld [vmem:[%s989 + $0x6c] sm:$0xf]
  %v1018 = vld [vmem:[%s989 + $0x70] sm:$0xf]
  %v1019 = vld [vmem:[%s989 + $0x74] sm:$0xf]
  %v1020 = vld [vmem:[%s989 + $0x78] sm:$0xf]
  %v1021 = vld [vmem:[%s989 + $0x7c] sm:$0xf]
  %v1022 = vld [vmem:[%s989 + $0x80] sm:$0xf]
  %v1023 = vld [vmem:[%s989 + $0x84] sm:$0xf]
  %v1024 = vld [vmem:[%s989 + $0x88] sm:$0xf]
  %v1025 = vld [vmem:[%s989 + $0x8c] sm:$0xf]
  %v1026 = vld [vmem:[%s989 + $0x90] sm:$0xf]
  %v1027 = vld [vmem:[%s989 + $0x94] sm:$0xf]
  %v1028 = vld [vmem:[%s989 + $0x98] sm:$0xf]
  %v1029 = vld [vmem:[%s989 + $0x9c] sm:$0xf]
  %v1030 = vld [vmem:[%s989 + $0xa0] sm:$0xf]
  %v1031 = vld [vmem:[%s989 + $0xa4] sm:$0xf]
  %v1032 = vld [vmem:[%s989 + $0xa8] sm:$0xf]
  %v1033 = vld [vmem:[%s989 + $0xac] sm:$0xf]
  %v1034 = vld [vmem:[%s989 + $0xb0] sm:$0xf]
  %v1035 = vld [vmem:[%s989 + $0xb4] sm:$0xf]
  %v1036 = vld [vmem:[%s989 + $0xb8] sm:$0xf]
  %v1037 = vld [vmem:[%s989 + $0xbc] sm:$0xf]
  %v1038 = vld [vmem:[%s989 + $0xc0] sm:$0xf]
  %v1088 = vunpack.c.l.b16 %v990
  %v1089 = vunpack.c.l.b16 %v991
  %v1090 = vunpack.c.l.b16 %v992
  %v1091 = vunpack.c.l.b16 %v993
  %v1092 = vunpack.c.l.b16 %v994
  %v1093 = vunpack.c.l.b16 %v995
  %v1094 = vunpack.c.l.b16 %v996
  %v1095 = vunpack.c.l.b16 %v997
  %v1096 = vunpack.c.l.b16 %v998
  %v1097 = vunpack.c.l.b16 %v999
  %v1098 = vunpack.c.l.b16 %v1000
  %v1099 = vunpack.c.l.b16 %v1001
  %v1100 = vunpack.c.l.b16 %v1002
  %v1101 = vunpack.c.l.b16 %v1003
  %v1102 = vunpack.c.l.b16 %v1004
  %v1103 = vunpack.c.l.b16 %v1005
  %v1104 = vunpack.c.l.b16 %v1006
  %v1105 = vunpack.c.l.b16 %v1007
  %v1106 = vunpack.c.l.b16 %v1008
  %v1107 = vunpack.c.l.b16 %v1009
  %v1108 = vunpack.c.l.b16 %v1010
  %v1109 = vunpack.c.l.b16 %v1011
  %v1110 = vunpack.c.l.b16 %v1012
  %v1111 = vunpack.c.l.b16 %v1013
  %v1112 = vunpack.c.l.b16 %v1014
  %v1113 = vunpack.c.l.b16 %v1015
  %v1114 = vunpack.c.l.b16 %v1016
  %v1115 = vunpack.c.l.b16 %v1017
  %v1116 = vunpack.c.l.b16 %v1018
  %v1117 = vunpack.c.l.b16 %v1019
  %v1118 = vunpack.c.l.b16 %v1020
  %v1119 = vunpack.c.l.b16 %v1021
  %v1120 = vunpack.c.l.b16 %v1022
  %v1121 = vunpack.c.l.b16 %v1023
  %v1122 = vunpack.c.l.b16 %v1024
  %v1123 = vunpack.c.l.b16 %v1025
  %v1124 = vunpack.c.l.b16 %v1026
  %v1125 = vunpack.c.l.b16 %v1027
  %v1126 = vunpack.c.l.b16 %v1028
  %v1127 = vunpack.c.l.b16 %v1029
  %v1128 = vunpack.c.l.b16 %v1030
  %v1129 = vunpack.c.l.b16 %v1031
  %v1130 = vunpack.c.l.b16 %v1032
  %v1131 = vunpack.c.l.b16 %v1033
  %v1132 = vunpack.c.l.b16 %v1034
  %v1133 = vunpack.c.l.b16 %v1035
  %v1134 = vunpack.c.l.b16 %v1036
  %v1135 = vunpack.c.l.b16 %v1037
  %v1136 = vunpack.c.l.b16 %v1038
  %v1137 = vpack.c.b16 %v1089, %v1088
  %v1138 = vpack.c.b16 %v1091, %v1090
  %v1139 = vpack.c.b16 %v1093, %v1092
  %v1140 = vpack.c.b16 %v1095, %v1094
  %v1141 = vpack.c.b16 %v1097, %v1096
  %v1142 = vpack.c.b16 %v1099, %v1098
  %v1143 = vpack.c.b16 %v1101, %v1100
  %v1144 = vpack.c.b16 %v1103, %v1102
  %v1145 = vpack.c.b16 %v1105, %v1104
  %v1146 = vpack.c.b16 %v1107, %v1106
  %v1147 = vpack.c.b16 %v1109, %v1108
  %v1148 = vpack.c.b16 %v1111, %v1110
  %v1149 = vpack.c.b16 %v1113, %v1112
  %v1150 = vpack.c.b16 %v1115, %v1114
  %v1151 = vpack.c.b16 %v1117, %v1116
  %v1152 = vpack.c.b16 %v1119, %v1118
  %v1153 = vpack.c.b16 %v1121, %v1120
  %v1154 = vpack.c.b16 %v1123, %v1122
  %v1155 = vpack.c.b16 %v1125, %v1124
  %v1156 = vpack.c.b16 %v1127, %v1126
  %v1157 = vpack.c.b16 %v1129, %v1128
  %v1158 = vpack.c.b16 %v1131, %v1130
  %v1159 = vpack.c.b16 %v1133, %v1132
  %v1160 = vpack.c.b16 %v1135, %v1134
  %v1161 = vpack.c.b16 %v1136, %v1136
  %v1163 = vsel %vm194, %v1137, 0
  %v1166 = vsel %vm194, %v1138, 0
  %v1169 = vsel %vm194, %v1139, 0
  %v1172 = vsel %vm194, %v1140, 0
  %v1175 = vsel %vm194, %v1141, 0
  %v1178 = vsel %vm194, %v1142, 0
  %v1181 = vsel %vm194, %v1143, 0
  %v1184 = vsel %vm194, %v1144, 0
  %v1187 = vsel %vm194, %v1145, 0
  %v1190 = vsel %vm194, %v1146, 0
  %v1193 = vsel %vm194, %v1147, 0
  %v1196 = vsel %vm194, %v1148, 0
  %v1199 = vsel %vm194, %v1149, 0
  %v1202 = vsel %vm194, %v1150, 0
  %v1205 = vsel %vm194, %v1151, 0
  %v1208 = vsel %vm194, %v1152, 0
  %v1211 = vsel %vm194, %v1153, 0
  %v1214 = vsel %vm194, %v1154, 0
  %v1217 = vsel %vm194, %v1155, 0
  %v1220 = vsel %vm194, %v1156, 0
  %v1223 = vsel %vm194, %v1157, 0
  %v1226 = vsel %vm194, %v1158, 0
  %v1229 = vsel %vm194, %v1159, 0
  %v1232 = vsel %vm194, %v1160, 0
  %v1235 = vsel %vm194, %v1161, 0
  %1237 = vmatprep.subr.bf16.mxu0 0
  %1238 = vmatpush1.bf16.msra.mxu0 %v275
  %1239 = vmatprep.subr.bf16.mxu0 0
  %1240 = vmatpush1.bf16.msra.mxu0 0
  %1241 = vmatprep.subr.bf16.mxu0 0
  %1242 = vmatpush1.bf16.msra.mxu0 0
  %1243 = vmatprep.subr.bf16.mxu0 0
  %1244 = vmatpush1.bf16.msra.mxu0 0
  %1245 = vmatprep.subr.bf16.mxu0 0
  %1246 = vmatpush1.bf16.msra.mxu0 0
  %1247 = vmatprep.subr.bf16.mxu0 0
  %1248 = vmatpush1.bf16.msra.mxu0 0
  %1249 = vmatprep.subr.bf16.mxu0 0
  %1250 = vmatpush1.bf16.msra.mxu0 0
  %1251 = vmatprep.subr.bf16.mxu0 0
  %1252 = vmatpush1.bf16.msra.mxu0 0
  %1253 = vmatprep.subr.bf16.mxu0 0
  %1254 = vmatpush1.bf16.msra.mxu0 0
  %1255 = vmatprep.subr.bf16.mxu0 0
  %1256 = vmatpush1.bf16.msra.mxu0 0
  %1257 = vmatprep.subr.bf16.mxu0 0
  %1258 = vmatpush1.bf16.msra.mxu0 0
  %1259 = vmatprep.subr.bf16.mxu0 0
  %1260 = vmatpush1.bf16.msra.mxu0 0
  %1261 = vmatprep.subr.bf16.mxu0 0
  %1262 = vmatpush1.bf16.msra.mxu0 0
  %1263 = vmatprep.subr.bf16.mxu0 0
  %1264 = vmatpush1.bf16.msra.mxu0 0
  %1265 = vmatprep.subr.bf16.mxu0 0
  %1266 = vmatpush1.bf16.msra.mxu0 0
  %1267 = vmatprep.subr.bf16.mxu0 0
  %1268 = vmatpush1.bf16.msra.mxu0 0
  %1269 = vmatprep.mubr.bf16.mxu0 0
  %1270 = vmatmul.mubr.bf16.gmra.mrb[0].mxu0 %v1163
  %v1271 = vpop.f32.mrb[0].mxu0
  %v1272 = vadd.f32 0.0, %v1271
  %v1273 = vpop.f32.mrb[0].mxu0
  %v1274 = vpop.f32.mrb[0].mxu0
  %v1275 = vadd.f32 0.0, %v1274
  %v1276 = vpop.f32.mrb[0].mxu0
  %1277 = vmatprep.mubr.bf16.mxu0 0
  %1278 = vmatmul.mubr.bf16.gmra.mrb[0].mxu0 %v1166
  %v1279 = vpop.f32.mrb[0].mxu0
  %v1280 = vadd.f32 0.0, %v1279
  %v1281 = vpop.f32.mrb[0].mxu0
  %v1282 = vpop.f32.mrb[0].mxu0
  %v1283 = vadd.f32 0.0, %v1282
  %v1284 = vpop.f32.mrb[0].mxu0
  %1285 = vmatprep.mubr.bf16.mxu0 0
  %1286 = vmatmul.mubr.bf16.gmra.mrb[0].mxu0 %v1169
  %v1287 = vpop.f32.mrb[0].mxu0
  %v1288 = vadd.f32 0.0, %v1287
  %v1289 = vpop.f32.mrb[0].mxu0
  %v1290 = vpop.f32.mrb[0].mxu0
  %v1291 = vadd.f32 0.0, %v1290
  %v1292 = vpop.f32.mrb[0].mxu0
  %1293 = vmatprep.mubr.bf16.mxu0 0
  %1294 = vmatmul.mubr.bf16.gmra.mrb[0].mxu0 %v1172
  %v1295 = vpop.f32.mrb[0].mxu0
  %v1296 = vadd.f32 0.0, %v1295
  %v1297 = vpop.f32.mrb[0].mxu0
  %v1298 = vpop.f32.mrb[0].mxu0
  %v1299 = vadd.f32 0.0, %v1298
  %v1300 = vpop.f32.mrb[0].mxu0
  %1301 = vmatprep.mubr.bf16.mxu0 0
  %1302 = vmatmul.mubr.bf16.gmra.mrb[0].mxu0 %v1175
  %v1303 = vpop.f32.mrb[0].mxu0
  %v1304 = vadd.f32 0.0, %v1303
  %v1305 = vpop.f32.mrb[0].mxu0
  %v1306 = vpop.f32.mrb[0].mxu0
  %v1307 = vadd.f32 0.0, %v1306
  %v1308 = vpop.f32.mrb[0].mxu0
  %1309 = vmatprep.mubr.bf16.mxu0 0
  %1310 = vmatmul.mubr.bf16.gmra.mrb[0].mxu0 %v1178
  %v1311 = vpop.f32.mrb[0].mxu0
  %v1312 = vadd.f32 0.0, %v1311
  %v1313 = vpop.f32.mrb[0].mxu0
  %v1314 = vpop.f32.mrb[0].mxu0
  %v1315 = vadd.f32 0.0, %v1314
  %v1316 = vpop.f32.mrb[0].mxu0
  %1317 = vmatprep.mubr.bf16.mxu0 0
  %1318 = vmatmul.mubr.bf16.gmra.mrb[0].mxu0 %v1181
  %v1319 = vpop.f32.mrb[0].mxu0
  %v1320 = vadd.f32 0.0, %v1319
  %v1321 = vpop.f32.mrb[0].mxu0
  %v1322 = vpop.f32.mrb[0].mxu0
  %v1323 = vadd.f32 0.0, %v1322
  %v1324 = vpop.f32.mrb[0].mxu0
  %1325 = vmatprep.mubr.bf16.mxu0 0
  %1326 = vmatmul.mubr.bf16.gmra.mrb[0].mxu0 %v1184
  %v1327 = vpop.f32.mrb[0].mxu0
  %v1328 = vadd.f32 0.0, %v1327
  %v1329 = vpop.f32.mrb[0].mxu0
  %v1330 = vpop.f32.mrb[0].mxu0
  %v1331 = vadd.f32 0.0, %v1330
  %v1332 = vpop.f32.mrb[0].mxu0
  %1333 = vmatprep.mubr.bf16.mxu0 0
  %1334 = vmatmul.mubr.bf16.gmra.mrb[0].mxu0 %v1187
  %v1335 = vpop.f32.mrb[0].mxu0
  %v1336 = vadd.f32 0.0, %v1335
  %v1337 = vpop.f32.mrb[0].mxu0
  %v1338 = vpop.f32.mrb[0].mxu0
  %v1339 = vadd.f32 0.0, %v1338
  %v1340 = vpop.f32.mrb[0].mxu0
  %1341 = vmatprep.mubr.bf16.mxu0 0
  %1342 = vmatmul.mubr.bf16.gmra.mrb[0].mxu0 %v1190
  %v1343 = vpop.f32.mrb[0].mxu0
  %v1344 = vadd.f32 0.0, %v1343
  %v1345 = vpop.f32.mrb[0].mxu0
  %v1346 = vpop.f32.mrb[0].mxu0
  %v1347 = vadd.f32 0.0, %v1346
  %v1348 = vpop.f32.mrb[0].mxu0
  %1349 = vmatprep.mubr.bf16.mxu0 0
  %1350 = vmatmul.mubr.bf16.gmra.mrb[0].mxu0 %v1193
  %v1351 = vpop.f32.mrb[0].mxu0
  %v1352 = vadd.f32 0.0, %v1351
  %v1353 = vpop.f32.mrb[0].mxu0
  %v1354 = vpop.f32.mrb[0].mxu0
  %v1355 = vadd.f32 0.0, %v1354
  %v1356 = vpop.f32.mrb[0].mxu0
  %1357 = vmatprep.mubr.bf16.mxu0 0
  %1358 = vmatmul.mubr.bf16.gmra.mrb[0].mxu0 %v1196
  %v1359 = vpop.f32.mrb[0].mxu0
  %v1360 = vadd.f32 0.0, %v1359
  %v1361 = vpop.f32.mrb[0].mxu0
  %v1362 = vpop.f32.mrb[0].mxu0
  %v1363 = vadd.f32 0.0, %v1362
  %v1364 = vpop.f32.mrb[0].mxu0
  %1365 = vmatprep.mubr.bf16.mxu0 0
  %1366 = vmatmul.mubr.bf16.gmra.mrb[0].mxu0 %v1199
  %v1367 = vpop.f32.mrb[0].mxu0
  %v1368 = vadd.f32 0.0, %v1367
  %v1369 = vpop.f32.mrb[0].mxu0
  %v1370 = vpop.f32.mrb[0].mxu0
  %v1371 = vadd.f32 0.0, %v1370
  %v1372 = vpop.f32.mrb[0].mxu0
  %1373 = vmatprep.mubr.bf16.mxu0 0
  %1374 = vmatmul.mubr.bf16.gmra.mrb[0].mxu0 %v1202
  %v1375 = vpop.f32.mrb[0].mxu0
  %v1376 = vadd.f32 0.0, %v1375
  %v1377 = vpop.f32.mrb[0].mxu0
  %v1378 = vpop.f32.mrb[0].mxu0
  %v1379 = vadd.f32 0.0, %v1378
  %v1380 = vpop.f32.mrb[0].mxu0
  %1381 = vmatprep.mubr.bf16.mxu0 0
  %1382 = vmatmul.mubr.bf16.gmra.mrb[0].mxu0 %v1205
  %v1383 = vpop.f32.mrb[0].mxu0
  %v1384 = vadd.f32 0.0, %v1383
  %v1385 = vpop.f32.mrb[0].mxu0
  %v1386 = vpop.f32.mrb[0].mxu0
  %v1387 = vadd.f32 0.0, %v1386
  %v1388 = vpop.f32.mrb[0].mxu0
  %1389 = vmatprep.mubr.bf16.mxu0 0
  %1390 = vmatmul.mubr.bf16.gmra.mrb[0].mxu0 %v1208
  %v1391 = vpop.f32.mrb[0].mxu0
  %v1392 = vadd.f32 0.0, %v1391
  %v1393 = vpop.f32.mrb[0].mxu0
  %v1394 = vpop.f32.mrb[0].mxu0
  %v1395 = vadd.f32 0.0, %v1394
  %v1396 = vpop.f32.mrb[0].mxu0
  %1397 = vmatprep.mubr.bf16.mxu0 0
  %1398 = vmatmul.mubr.bf16.gmra.mrb[0].mxu0 %v1211
  %v1399 = vpop.f32.mrb[0].mxu0
  %v1400 = vadd.f32 0.0, %v1399
  %v1401 = vpop.f32.mrb[0].mxu0
  %v1402 = vpop.f32.mrb[0].mxu0
  %v1403 = vadd.f32 0.0, %v1402
  %v1404 = vpop.f32.mrb[0].mxu0
  %1405 = vmatprep.mubr.bf16.mxu0 0
  %1406 = vmatmul.mubr.bf16.gmra.mrb[0].mxu0 %v1214
  %v1407 = vpop.f32.mrb[0].mxu0
  %v1408 = vadd.f32 0.0, %v1407
  %v1409 = vpop.f32.mrb[0].mxu0
  %v1410 = vpop.f32.mrb[0].mxu0
  %v1411 = vadd.f32 0.0, %v1410
  %v1412 = vpop.f32.mrb[0].mxu0
  %1413 = vmatprep.mubr.bf16.mxu0 0
  %1414 = vmatmul.mubr.bf16.gmra.mrb[0].mxu0 %v1217
  %v1415 = vpop.f32.mrb[0].mxu0
  %v1416 = vadd.f32 0.0, %v1415
  %v1417 = vpop.f32.mrb[0].mxu0
  %v1418 = vpop.f32.mrb[0].mxu0
  %v1419 = vadd.f32 0.0, %v1418
  %v1420 = vpop.f32.mrb[0].mxu0
  %1421 = vmatprep.mubr.bf16.mxu0 0
  %1422 = vmatmul.mubr.bf16.gmra.mrb[0].mxu0 %v1220
  %v1423 = vpop.f32.mrb[0].mxu0
  %v1424 = vadd.f32 0.0, %v1423
  %v1425 = vpop.f32.mrb[0].mxu0
  %v1426 = vpop.f32.mrb[0].mxu0
  %v1427 = vadd.f32 0.0, %v1426
  %v1428 = vpop.f32.mrb[0].mxu0
  %1429 = vmatprep.mubr.bf16.mxu0 0
  %1430 = vmatmul.mubr.bf16.gmra.mrb[0].mxu0 %v1223
  %v1431 = vpop.f32.mrb[0].mxu0
  %v1432 = vadd.f32 0.0, %v1431
  %v1433 = vpop.f32.mrb[0].mxu0
  %v1434 = vpop.f32.mrb[0].mxu0
  %v1435 = vadd.f32 0.0, %v1434
  %v1436 = vpop.f32.mrb[0].mxu0
  %1437 = vmatprep.mubr.bf16.mxu0 0
  %1438 = vmatmul.mubr.bf16.gmra.mrb[0].mxu0 %v1226
  %v1439 = vpop.f32.mrb[0].mxu0
  %v1440 = vadd.f32 0.0, %v1439
  %v1441 = vpop.f32.mrb[0].mxu0
  %v1442 = vpop.f32.mrb[0].mxu0
  %v1443 = vadd.f32 0.0, %v1442
  %v1444 = vpop.f32.mrb[0].mxu0
  %1445 = vmatprep.mubr.bf16.mxu0 0
  %1446 = vmatmul.mubr.bf16.gmra.mrb[0].mxu0 %v1229
  %v1447 = vpop.f32.mrb[0].mxu0
  %v1448 = vadd.f32 0.0, %v1447
  %v1449 = vpop.f32.mrb[0].mxu0
  %v1450 = vpop.f32.mrb[0].mxu0
  %v1451 = vadd.f32 0.0, %v1450
  %v1452 = vpop.f32.mrb[0].mxu0
  %1453 = vmatprep.mubr.bf16.mxu0 0
  %1454 = vmatmul.mubr.bf16.gmra.mrb[0].mxu0 %v1232
  %v1455 = vpop.f32.mrb[0].mxu0
  %v1456 = vadd.f32 0.0, %v1455
  %v1457 = vpop.f32.mrb[0].mxu0
  %v1458 = vpop.f32.mrb[0].mxu0
  %v1459 = vadd.f32 0.0, %v1458
  %v1460 = vpop.f32.mrb[0].mxu0
  %1461 = vmatprep.mubr.bf16.mxu0 0
  %1462 = vmatmul.mubr.bf16.gmra.mrb[0].mxu0 %v1235
  %v1463 = vpop.f32.mrb[0].mxu0
  %v1464 = vadd.f32 0.0, %v1463
  %v1465 = vpop.f32.mrb[0].mxu0
  %v1466 = vpop.f32.mrb[0].mxu0
  %v1467 = vpop.f32.mrb[0].mxu0
  %1468 = vdwg.mxu0
  %s1469 = scalar_lea.vmem %s0, 588
  %v1470 = vld [vmem:[%s1469] sm:$0xf]
  %v1471 = vld [vmem:[%s1469 + $0x4] sm:$0xf]
  %v1472 = vld [vmem:[%s1469 + $0x8] sm:$0xf]
  %v1473 = vld [vmem:[%s1469 + $0xc] sm:$0xf]
  %v1474 = vld [vmem:[%s1469 + $0x10] sm:$0xf]
  %v1475 = vld [vmem:[%s1469 + $0x14] sm:$0xf]
  %v1476 = vld [vmem:[%s1469 + $0x18] sm:$0xf]
  %v1477 = vld [vmem:[%s1469 + $0x1c] sm:$0xf]
  %v1478 = vld [vmem:[%s1469 + $0x20] sm:$0xf]
  %v1479 = vld [vmem:[%s1469 + $0x24] sm:$0xf]
  %v1480 = vld [vmem:[%s1469 + $0x28] sm:$0xf]
  %v1481 = vld [vmem:[%s1469 + $0x2c] sm:$0xf]
  %v1482 = vld [vmem:[%s1469 + $0x30] sm:$0xf]
  %v1483 = vld [vmem:[%s1469 + $0x34] sm:$0xf]
  %v1484 = vld [vmem:[%s1469 + $0x38] sm:$0xf]
  %v1485 = vld [vmem:[%s1469 + $0x3c] sm:$0xf]
  %v1486 = vld [vmem:[%s1469 + $0x40] sm:$0xf]
  %v1487 = vld [vmem:[%s1469 + $0x44] sm:$0xf]
  %v1488 = vld [vmem:[%s1469 + $0x48] sm:$0xf]
  %v1489 = vld [vmem:[%s1469 + $0x4c] sm:$0xf]
  %v1490 = vld [vmem:[%s1469 + $0x50] sm:$0xf]
  %v1491 = vld [vmem:[%s1469 + $0x54] sm:$0xf]
  %v1492 = vld [vmem:[%s1469 + $0x58] sm:$0xf]
  %v1493 = vld [vmem:[%s1469 + $0x5c] sm:$0xf]
  %v1494 = vld [vmem:[%s1469 + $0x60] sm:$0xf]
  %v1495 = vld [vmem:[%s1469 + $0x64] sm:$0xf]
  %v1496 = vld [vmem:[%s1469 + $0x68] sm:$0xf]
  %v1497 = vld [vmem:[%s1469 + $0x6c] sm:$0xf]
  %v1498 = vld [vmem:[%s1469 + $0x70] sm:$0xf]
  %v1499 = vld [vmem:[%s1469 + $0x74] sm:$0xf]
  %v1500 = vld [vmem:[%s1469 + $0x78] sm:$0xf]
  %v1501 = vld [vmem:[%s1469 + $0x7c] sm:$0xf]
  %v1502 = vld [vmem:[%s1469 + $0x80] sm:$0xf]
  %v1503 = vld [vmem:[%s1469 + $0x84] sm:$0xf]
  %v1504 = vld [vmem:[%s1469 + $0x88] sm:$0xf]
  %v1505 = vld [vmem:[%s1469 + $0x8c] sm:$0xf]
  %v1506 = vld [vmem:[%s1469 + $0x90] sm:$0xf]
  %v1507 = vld [vmem:[%s1469 + $0x94] sm:$0xf]
  %v1508 = vld [vmem:[%s1469 + $0x98] sm:$0xf]
  %v1509 = vld [vmem:[%s1469 + $0x9c] sm:$0xf]
  %v1510 = vld [vmem:[%s1469 + $0xa0] sm:$0xf]
  %v1511 = vld [vmem:[%s1469 + $0xa4] sm:$0xf]
  %v1512 = vld [vmem:[%s1469 + $0xa8] sm:$0xf]
  %v1513 = vld [vmem:[%s1469 + $0xac] sm:$0xf]
  %v1514 = vld [vmem:[%s1469 + $0xb0] sm:$0xf]
  %v1515 = vld [vmem:[%s1469 + $0xb4] sm:$0xf]
  %v1516 = vld [vmem:[%s1469 + $0xb8] sm:$0xf]
  %v1517 = vld [vmem:[%s1469 + $0xbc] sm:$0xf]
  %v1518 = vld [vmem:[%s1469 + $0xc0] sm:$0xf]
  %v1568 = vunpack.c.l.b16 %v1470
  %v1569 = vunpack.c.l.b16 %v1471
  %v1570 = vunpack.c.l.b16 %v1472
  %v1571 = vunpack.c.l.b16 %v1473
  %v1572 = vunpack.c.l.b16 %v1474
  %v1573 = vunpack.c.l.b16 %v1475
  %v1574 = vunpack.c.l.b16 %v1476
  %v1575 = vunpack.c.l.b16 %v1477
  %v1576 = vunpack.c.l.b16 %v1478
  %v1577 = vunpack.c.l.b16 %v1479
  %v1578 = vunpack.c.l.b16 %v1480
  %v1579 = vunpack.c.l.b16 %v1481
  %v1580 = vunpack.c.l.b16 %v1482
  %v1581 = vunpack.c.l.b16 %v1483
  %v1582 = vunpack.c.l.b16 %v1484
  %v1583 = vunpack.c.l.b16 %v1485
  %v1584 = vunpack.c.l.b16 %v1486
  %v1585 = vunpack.c.l.b16 %v1487
  %v1586 = vunpack.c.l.b16 %v1488
  %v1587 = vunpack.c.l.b16 %v1489
  %v1588 = vunpack.c.l.b16 %v1490
  %v1589 = vunpack.c.l.b16 %v1491
  %v1590 = vunpack.c.l.b16 %v1492
  %v1591 = vunpack.c.l.b16 %v1493
  %v1592 = vunpack.c.l.b16 %v1494
  %v1593 = vunpack.c.l.b16 %v1495
  %v1594 = vunpack.c.l.b16 %v1496
  %v1595 = vunpack.c.l.b16 %v1497
  %v1596 = vunpack.c.l.b16 %v1498
  %v1597 = vunpack.c.l.b16 %v1499
  %v1598 = vunpack.c.l.b16 %v1500
  %v1599 = vunpack.c.l.b16 %v1501
  %v1600 = vunpack.c.l.b16 %v1502
  %v1601 = vunpack.c.l.b16 %v1503
  %v1602 = vunpack.c.l.b16 %v1504
  %v1603 = vunpack.c.l.b16 %v1505
  %v1604 = vunpack.c.l.b16 %v1506
  %v1605 = vunpack.c.l.b16 %v1507
  %v1606 = vunpack.c.l.b16 %v1508
  %v1607 = vunpack.c.l.b16 %v1509
  %v1608 = vunpack.c.l.b16 %v1510
  %v1609 = vunpack.c.l.b16 %v1511
  %v1610 = vunpack.c.l.b16 %v1512
  %v1611 = vunpack.c.l.b16 %v1513
  %v1612 = vunpack.c.l.b16 %v1514
  %v1613 = vunpack.c.l.b16 %v1515
  %v1614 = vunpack.c.l.b16 %v1516
  %v1615 = vunpack.c.l.b16 %v1517
  %v1616 = vunpack.c.l.b16 %v1518
  %v1617 = vpack.c.b16 %v1569, %v1568
  %v1618 = vpack.c.b16 %v1571, %v1570
  %v1619 = vpack.c.b16 %v1573, %v1572
  %v1620 = vpack.c.b16 %v1575, %v1574
  %v1621 = vpack.c.b16 %v1577, %v1576
  %v1622 = vpack.c.b16 %v1579, %v1578
  %v1623 = vpack.c.b16 %v1581, %v1580
  %v1624 = vpack.c.b16 %v1583, %v1582
  %v1625 = vpack.c.b16 %v1585, %v1584
  %v1626 = vpack.c.b16 %v1587, %v1586
  %v1627 = vpack.c.b16 %v1589, %v1588
  %v1628 = vpack.c.b16 %v1591, %v1590
  %v1629 = vpack.c.b16 %v1593, %v1592
  %v1630 = vpack.c.b16 %v1595, %v1594
  %v1631 = vpack.c.b16 %v1597, %v1596
  %v1632 = vpack.c.b16 %v1599, %v1598
  %v1633 = vpack.c.b16 %v1601, %v1600
  %v1634 = vpack.c.b16 %v1603, %v1602
  %v1635 = vpack.c.b16 %v1605, %v1604
  %v1636 = vpack.c.b16 %v1607, %v1606
  %v1637 = vpack.c.b16 %v1609, %v1608
  %v1638 = vpack.c.b16 %v1611, %v1610
  %v1639 = vpack.c.b16 %v1613, %v1612
  %v1640 = vpack.c.b16 %v1615, %v1614
  %v1641 = vpack.c.b16 %v1616, %v1616
  %v1643 = vsel %vm194, %v1617, 0
  %v1646 = vsel %vm194, %v1618, 0
  %v1649 = vsel %vm194, %v1619, 0
  %v1652 = vsel %vm194, %v1620, 0
  %v1655 = vsel %vm194, %v1621, 0
  %v1658 = vsel %vm194, %v1622, 0
  %v1661 = vsel %vm194, %v1623, 0
  %v1664 = vsel %vm194, %v1624, 0
  %v1667 = vsel %vm194, %v1625, 0
  %v1670 = vsel %vm194, %v1626, 0
  %v1673 = vsel %vm194, %v1627, 0
  %v1676 = vsel %vm194, %v1628, 0
  %v1679 = vsel %vm194, %v1629, 0
  %v1682 = vsel %vm194, %v1630, 0
  %v1685 = vsel %vm194, %v1631, 0
  %v1688 = vsel %vm194, %v1632, 0
  %v1691 = vsel %vm194, %v1633, 0
  %v1694 = vsel %vm194, %v1634, 0
  %v1697 = vsel %vm194, %v1635, 0
  %v1700 = vsel %vm194, %v1636, 0
  %v1703 = vsel %vm194, %v1637, 0
  %v1706 = vsel %vm194, %v1638, 0
  %v1709 = vsel %vm194, %v1639, 0
  %v1712 = vsel %vm194, %v1640, 0
  %v1715 = vsel %vm194, %v1641, 0
  %1717 = vmatprep.subr.bf16.mxu0 0
  %1718 = vmatpush1.bf16.msra.mxu0 %v275
  %1719 = vmatprep.subr.bf16.mxu0 0
  %1720 = vmatpush1.bf16.msra.mxu0 0
  %1721 = vmatprep.subr.bf16.mxu0 0
  %1722 = vmatpush1.bf16.msra.mxu0 0
  %1723 = vmatprep.subr.bf16.mxu0 0
  %1724 = vmatpush1.bf16.msra.mxu0 0
  %1725 = vmatprep.subr.bf16.mxu0 0
  %1726 = vmatpush1.bf16.msra.mxu0 0
  %1727 = vmatprep.subr.bf16.mxu0 0
  %1728 = vmatpush1.bf16.msra.mxu0 0
  %1729 = vmatprep.subr.bf16.mxu0 0
  %1730 = vmatpush1.bf16.msra.mxu0 0
  %1731 = vmatprep.subr.bf16.mxu0 0
  %1732 = vmatpush1.bf16.msra.mxu0 0
  %1733 = vmatprep.subr.bf16.mxu0 0
  %1734 = vmatpush1.bf16.msra.mxu0 0
  %1735 = vmatprep.subr.bf16.mxu0 0
  %1736 = vmatpush1.bf16.msra.mxu0 0
  %1737 = vmatprep.subr.bf16.mxu0 0
  %1738 = vmatpush1.bf16.msra.mxu0 0
  %1739 = vmatprep.subr.bf16.mxu0 0
  %1740 = vmatpush1.bf16.msra.mxu0 0
  %1741 = vmatprep.subr.bf16.mxu0 0
  %1742 = vmatpush1.bf16.msra.mxu0 0
  %1743 = vmatprep.subr.bf16.mxu0 0
  %1744 = vmatpush1.bf16.msra.mxu0 0
  %1745 = vmatprep.subr.bf16.mxu0 0
  %1746 = vmatpush1.bf16.msra.mxu0 0
  %1747 = vmatprep.subr.bf16.mxu0 0
  %1748 = vmatpush1.bf16.msra.mxu0 0
  %1749 = vmatprep.mubr.bf16.mxu0 0
  %1750 = vmatmul.mubr.bf16.gmra.mrb[0].mxu0 %v1643
  %v1751 = vpop.f32.mrb[0].mxu0
  %v1752 = vadd.f32 0.0, %v1751
  %v1753 = vpop.f32.mrb[0].mxu0
  %v1754 = vpop.f32.mrb[0].mxu0
  %v1755 = vadd.f32 0.0, %v1754
  %v1756 = vpop.f32.mrb[0].mxu0
  %1757 = vmatprep.mubr.bf16.mxu0 0
  %1758 = vmatmul.mubr.bf16.gmra.mrb[0].mxu0 %v1646
  %v1759 = vpop.f32.mrb[0].mxu0
  %v1760 = vadd.f32 0.0, %v1759
  %v1761 = vpop.f32.mrb[0].mxu0
  %v1762 = vpop.f32.mrb[0].mxu0
  %v1763 = vadd.f32 0.0, %v1762
  %v1764 = vpop.f32.mrb[0].mxu0
  %1765 = vmatprep.mubr.bf16.mxu0 0
  %1766 = vmatmul.mubr.bf16.gmra.mrb[0].mxu0 %v1649
  %v1767 = vpop.f32.mrb[0].mxu0
  %v1768 = vadd.f32 0.0, %v1767
  %v1769 = vpop.f32.mrb[0].mxu0
  %v1770 = vpop.f32.mrb[0].mxu0
  %v1771 = vadd.f32 0.0, %v1770
  %v1772 = vpop.f32.mrb[0].mxu0
  %1773 = vmatprep.mubr.bf16.mxu0 0
  %1774 = vmatmul.mubr.bf16.gmra.mrb[0].mxu0 %v1652
  %v1775 = vpop.f32.mrb[0].mxu0
  %v1776 = vadd.f32 0.0, %v1775
  %v1777 = vpop.f32.mrb[0].mxu0
  %v1778 = vpop.f32.mrb[0].mxu0
  %v1779 = vadd.f32 0.0, %v1778
  %v1780 = vpop.f32.mrb[0].mxu0
  %1781 = vmatprep.mubr.bf16.mxu0 0
  %1782 = vmatmul.mubr.bf16.gmra.mrb[0].mxu0 %v1655
  %v1783 = vpop.f32.mrb[0].mxu0
  %v1784 = vadd.f32 0.0, %v1783
  %v1785 = vpop.f32.mrb[0].mxu0
  %v1786 = vpop.f32.mrb[0].mxu0
  %v1787 = vadd.f32 0.0, %v1786
  %v1788 = vpop.f32.mrb[0].mxu0
  %1789 = vmatprep.mubr.bf16.mxu0 0
  %1790 = vmatmul.mubr.bf16.gmra.mrb[0].mxu0 %v1658
  %v1791 = vpop.f32.mrb[0].mxu0
  %v1792 = vadd.f32 0.0, %v1791
  %v1793 = vpop.f32.mrb[0].mxu0
  %v1794 = vpop.f32.mrb[0].mxu0
  %v1795 = vadd.f32 0.0, %v1794
  %v1796 = vpop.f32.mrb[0].mxu0
  %1797 = vmatprep.mubr.bf16.mxu0 0
  %1798 = vmatmul.mubr.bf16.gmra.mrb[0].mxu0 %v1661
  %v1799 = vpop.f32.mrb[0].mxu0
  %v1800 = vadd.f32 0.0, %v1799
  %v1801 = vpop.f32.mrb[0].mxu0
  %v1802 = vpop.f32.mrb[0].mxu0
  %v1803 = vadd.f32 0.0, %v1802
  %v1804 = vpop.f32.mrb[0].mxu0
  %1805 = vmatprep.mubr.bf16.mxu0 0
  %1806 = vmatmul.mubr.bf16.gmra.mrb[0].mxu0 %v1664
  %v1807 = vpop.f32.mrb[0].mxu0
  %v1808 = vadd.f32 0.0, %v1807
  %v1809 = vpop.f32.mrb[0].mxu0
  %v1810 = vpop.f32.mrb[0].mxu0
  %v1811 = vadd.f32 0.0, %v1810
  %v1812 = vpop.f32.mrb[0].mxu0
  %1813 = vmatprep.mubr.bf16.mxu0 0
  %1814 = vmatmul.mubr.bf16.gmra.mrb[0].mxu0 %v1667
  %v1815 = vpop.f32.mrb[0].mxu0
  %v1816 = vadd.f32 0.0, %v1815
  %v1817 = vpop.f32.mrb[0].mxu0
  %v1818 = vpop.f32.mrb[0].mxu0
  %v1819 = vadd.f32 0.0, %v1818
  %v1820 = vpop.f32.mrb[0].mxu0
  %1821 = vmatprep.mubr.bf16.mxu0 0
  %1822 = vmatmul.mubr.bf16.gmra.mrb[0].mxu0 %v1670
  %v1823 = vpop.f32.mrb[0].mxu0
  %v1824 = vadd.f32 0.0, %v1823
  %v1825 = vpop.f32.mrb[0].mxu0
  %v1826 = vpop.f32.mrb[0].mxu0
  %v1827 = vadd.f32 0.0, %v1826
  %v1828 = vpop.f32.mrb[0].mxu0
  %1829 = vmatprep.mubr.bf16.mxu0 0
  %1830 = vmatmul.mubr.bf16.gmra.mrb[0].mxu0 %v1673
  %v1831 = vpop.f32.mrb[0].mxu0
  %v1832 = vadd.f32 0.0, %v1831
  %v1833 = vpop.f32.mrb[0].mxu0
  %v1834 = vpop.f32.mrb[0].mxu0
  %v1835 = vadd.f32 0.0, %v1834
  %v1836 = vpop.f32.mrb[0].mxu0
  %1837 = vmatprep.mubr.bf16.mxu0 0
  %1838 = vmatmul.mubr.bf16.gmra.mrb[0].mxu0 %v1676
  %v1839 = vpop.f32.mrb[0].mxu0
  %v1840 = vadd.f32 0.0, %v1839
  %v1841 = vpop.f32.mrb[0].mxu0
  %v1842 = vpop.f32.mrb[0].mxu0
  %v1843 = vadd.f32 0.0, %v1842
  %v1844 = vpop.f32.mrb[0].mxu0
  %1845 = vmatprep.mubr.bf16.mxu0 0
  %1846 = vmatmul.mubr.bf16.gmra.mrb[0].mxu0 %v1679
  %v1847 = vpop.f32.mrb[0].mxu0
  %v1848 = vadd.f32 0.0, %v1847
  %v1849 = vpop.f32.mrb[0].mxu0
  %v1850 = vpop.f32.mrb[0].mxu0
  %v1851 = vadd.f32 0.0, %v1850
  %v1852 = vpop.f32.mrb[0].mxu0
  %1853 = vmatprep.mubr.bf16.mxu0 0
  %1854 = vmatmul.mubr.bf16.gmra.mrb[0].mxu0 %v1682
  %v1855 = vpop.f32.mrb[0].mxu0
  %v1856 = vadd.f32 0.0, %v1855
  %v1857 = vpop.f32.mrb[0].mxu0
  %v1858 = vpop.f32.mrb[0].mxu0
  %v1859 = vadd.f32 0.0, %v1858
  %v1860 = vpop.f32.mrb[0].mxu0
  %1861 = vmatprep.mubr.bf16.mxu0 0
  %1862 = vmatmul.mubr.bf16.gmra.mrb[0].mxu0 %v1685
  %v1863 = vpop.f32.mrb[0].mxu0
  %v1864 = vadd.f32 0.0, %v1863
  %v1865 = vpop.f32.mrb[0].mxu0
  %v1866 = vpop.f32.mrb[0].mxu0
  %v1867 = vadd.f32 0.0, %v1866
  %v1868 = vpop.f32.mrb[0].mxu0
  %1869 = vmatprep.mubr.bf16.mxu0 0
  %1870 = vmatmul.mubr.bf16.gmra.mrb[0].mxu0 %v1688
  %v1871 = vpop.f32.mrb[0].mxu0
  %v1872 = vadd.f32 0.0, %v1871
  %v1873 = vpop.f32.mrb[0].mxu0
  %v1874 = vpop.f32.mrb[0].mxu0
  %v1875 = vadd.f32 0.0, %v1874
  %v1876 = vpop.f32.mrb[0].mxu0
  %1877 = vmatprep.mubr.bf16.mxu0 0
  %1878 = vmatmul.mubr.bf16.gmra.mrb[0].mxu0 %v1691
  %v1879 = vpop.f32.mrb[0].mxu0
  %v1880 = vadd.f32 0.0, %v1879
  %v1881 = vpop.f32.mrb[0].mxu0
  %v1882 = vpop.f32.mrb[0].mxu0
  %v1883 = vadd.f32 0.0, %v1882
  %v1884 = vpop.f32.mrb[0].mxu0
  %1885 = vmatprep.mubr.bf16.mxu0 0
  %1886 = vmatmul.mubr.bf16.gmra.mrb[0].mxu0 %v1694
  %v1887 = vpop.f32.mrb[0].mxu0
  %v1888 = vadd.f32 0.0, %v1887
  %v1889 = vpop.f32.mrb[0].mxu0
  %v1890 = vpop.f32.mrb[0].mxu0
  %v1891 = vadd.f32 0.0, %v1890
  %v1892 = vpop.f32.mrb[0].mxu0
  %1893 = vmatprep.mubr.bf16.mxu0 0
  %1894 = vmatmul.mubr.bf16.gmra.mrb[0].mxu0 %v1697
  %v1895 = vpop.f32.mrb[0].mxu0
  %v1896 = vadd.f32 0.0, %v1895
  %v1897 = vpop.f32.mrb[0].mxu0
  %v1898 = vpop.f32.mrb[0].mxu0
  %v1899 = vadd.f32 0.0, %v1898
  %v1900 = vpop.f32.mrb[0].mxu0
  %1901 = vmatprep.mubr.bf16.mxu0 0
  %1902 = vmatmul.mubr.bf16.gmra.mrb[0].mxu0 %v1700
  %v1903 = vpop.f32.mrb[0].mxu0
  %v1904 = vadd.f32 0.0, %v1903
  %v1905 = vpop.f32.mrb[0].mxu0
  %v1906 = vpop.f32.mrb[0].mxu0
  %v1907 = vadd.f32 0.0, %v1906
  %v1908 = vpop.f32.mrb[0].mxu0
  %1909 = vmatprep.mubr.bf16.mxu0 0
  %1910 = vmatmul.mubr.bf16.gmra.mrb[0].mxu0 %v1703
  %v1911 = vpop.f32.mrb[0].mxu0
  %v1912 = vadd.f32 0.0, %v1911
  %v1913 = vpop.f32.mrb[0].mxu0
  %v1914 = vpop.f32.mrb[0].mxu0
  %v1915 = vadd.f32 0.0, %v1914
  %v1916 = vpop.f32.mrb[0].mxu0
  %1917 = vmatprep.mubr.bf16.mxu0 0
  %1918 = vmatmul.mubr.bf16.gmra.mrb[0].mxu0 %v1706
  %v1919 = vpop.f32.mrb[0].mxu0
  %v1920 = vadd.f32 0.0, %v1919
  %v1921 = vpop.f32.mrb[0].mxu0
  %v1922 = vpop.f32.mrb[0].mxu0
  %v1923 = vadd.f32 0.0, %v1922
  %v1924 = vpop.f32.mrb[0].mxu0
  %1925 = vmatprep.mubr.bf16.mxu0 0
  %1926 = vmatmul.mubr.bf16.gmra.mrb[0].mxu0 %v1709
  %v1927 = vpop.f32.mrb[0].mxu0
  %v1928 = vadd.f32 0.0, %v1927
  %v1929 = vpop.f32.mrb[0].mxu0
  %v1930 = vpop.f32.mrb[0].mxu0
  %v1931 = vadd.f32 0.0, %v1930
  %v1932 = vpop.f32.mrb[0].mxu0
  %1933 = vmatprep.mubr.bf16.mxu0 0
  %1934 = vmatmul.mubr.bf16.gmra.mrb[0].mxu0 %v1712
  %v1935 = vpop.f32.mrb[0].mxu0
  %v1936 = vadd.f32 0.0, %v1935
  %v1937 = vpop.f32.mrb[0].mxu0
  %v1938 = vpop.f32.mrb[0].mxu0
  %v1939 = vadd.f32 0.0, %v1938
  %v1940 = vpop.f32.mrb[0].mxu0
  %1941 = vmatprep.mubr.bf16.mxu0 0
  %1942 = vmatmul.mubr.bf16.gmra.mrb[0].mxu0 %v1715
  %v1943 = vpop.f32.mrb[0].mxu0
  %v1944 = vadd.f32 0.0, %v1943
  %v1945 = vpop.f32.mrb[0].mxu0
  %v1946 = vpop.f32.mrb[0].mxu0
  %v1947 = vpop.f32.mrb[0].mxu0
  %1948 = vdwg.mxu0
  %v1949 = vmax.f32 %v312, %v792
  %v1950 = vmax.f32 %v315, %v795
  %v1951 = vmax.f32 %v320, %v800
  %v1952 = vmax.f32 %v323, %v803
  %v1953 = vmax.f32 %v328, %v808
  %v1954 = vmax.f32 %v331, %v811
  %v1955 = vmax.f32 %v336, %v816
  %v1956 = vmax.f32 %v339, %v819
  %v1957 = vmax.f32 %v344, %v824
  %v1958 = vmax.f32 %v347, %v827
  %v1959 = vmax.f32 %v352, %v832
  %v1960 = vmax.f32 %v355, %v835
  %v1961 = vmax.f32 %v360, %v840
  %v1962 = vmax.f32 %v363, %v843
  %v1963 = vmax.f32 %v368, %v848
  %v1964 = vmax.f32 %v371, %v851
  %v1965 = vmax.f32 %v376, %v856
  %v1966 = vmax.f32 %v379, %v859
  %v1967 = vmax.f32 %v384, %v864
  %v1968 = vmax.f32 %v387, %v867
  %v1969 = vmax.f32 %v392, %v872
  %v1970 = vmax.f32 %v395, %v875
  %v1971 = vmax.f32 %v400, %v880
  %v1972 = vmax.f32 %v403, %v883
  %v1973 = vmax.f32 %v408, %v888
  %v1974 = vmax.f32 %v411, %v891
  %v1975 = vmax.f32 %v416, %v896
  %v1976 = vmax.f32 %v419, %v899
  %v1977 = vmax.f32 %v424, %v904
  %v1978 = vmax.f32 %v427, %v907
  %v1979 = vmax.f32 %v432, %v912
  %v1980 = vmax.f32 %v435, %v915
  %v1981 = vmax.f32 %v440, %v920
  %v1982 = vmax.f32 %v443, %v923
  %v1983 = vmax.f32 %v448, %v928
  %v1984 = vmax.f32 %v451, %v931
  %v1985 = vmax.f32 %v456, %v936
  %v1986 = vmax.f32 %v459, %v939
  %v1987 = vmax.f32 %v464, %v944
  %v1988 = vmax.f32 %v467, %v947
  %v1989 = vmax.f32 %v472, %v952
  %v1990 = vmax.f32 %v475, %v955
  %v1991 = vmax.f32 %v480, %v960
  %v1992 = vmax.f32 %v483, %v963
  %v1993 = vmax.f32 %v488, %v968
  %v1994 = vmax.f32 %v491, %v971
  %v1995 = vmax.f32 %v496, %v976
  %v1996 = vmax.f32 %v499, %v979
  %v1997 = vmax.f32 %v504, %v984
  %v1998 = vmax.f32 %v1272, %v1752
  %v1999 = vmax.f32 %v1275, %v1755
  %v2000 = vmax.f32 %v1280, %v1760
  %v2001 = vmax.f32 %v1283, %v1763
  %v2002 = vmax.f32 %v1288, %v1768
  %v2003 = vmax.f32 %v1291, %v1771
  %v2004 = vmax.f32 %v1296, %v1776
  %v2005 = vmax.f32 %v1299, %v1779
  %v2006 = vmax.f32 %v1304, %v1784
  %v2007 = vmax.f32 %v1307, %v1787
  %v2008 = vmax.f32 %v1312, %v1792
  %v2009 = vmax.f32 %v1315, %v1795
  %v2010 = vmax.f32 %v1320, %v1800
  %v2011 = vmax.f32 %v1323, %v1803
  %v2012 = vmax.f32 %v1328, %v1808
  %v2013 = vmax.f32 %v1331, %v1811
  %v2014 = vmax.f32 %v1336, %v1816
  %v2015 = vmax.f32 %v1339, %v1819
  %v2016 = vmax.f32 %v1344, %v1824
  %v2017 = vmax.f32 %v1347, %v1827
  %v2018 = vmax.f32 %v1352, %v1832
  %v2019 = vmax.f32 %v1355, %v1835
  %v2020 = vmax.f32 %v1360, %v1840
  %v2021 = vmax.f32 %v1363, %v1843
  %v2022 = vmax.f32 %v1368, %v1848
  %v2023 = vmax.f32 %v1371, %v1851
  %v2024 = vmax.f32 %v1376, %v1856
  %v2025 = vmax.f32 %v1379, %v1859
  %v2026 = vmax.f32 %v1384, %v1864
  %v2027 = vmax.f32 %v1387, %v1867
  %v2028 = vmax.f32 %v1392, %v1872
  %v2029 = vmax.f32 %v1395, %v1875
  %v2030 = vmax.f32 %v1400, %v1880
  %v2031 = vmax.f32 %v1403, %v1883
  %v2032 = vmax.f32 %v1408, %v1888
  %v2033 = vmax.f32 %v1411, %v1891
  %v2034 = vmax.f32 %v1416, %v1896
  %v2035 = vmax.f32 %v1419, %v1899
  %v2036 = vmax.f32 %v1424, %v1904
  %v2037 = vmax.f32 %v1427, %v1907
  %v2038 = vmax.f32 %v1432, %v1912
  %v2039 = vmax.f32 %v1435, %v1915
  %v2040 = vmax.f32 %v1440, %v1920
  %v2041 = vmax.f32 %v1443, %v1923
  %v2042 = vmax.f32 %v1448, %v1928
  %v2043 = vmax.f32 %v1451, %v1931
  %v2044 = vmax.f32 %v1456, %v1936
  %v2045 = vmax.f32 %v1459, %v1939
  %v2046 = vmax.f32 %v1464, %v1944
  %v2047 = vmax.f32 %v1949, %v1998
  %v2048 = vmax.f32 %v1950, %v1999
  %v2049 = vmax.f32 %v1951, %v2000
  %v2050 = vmax.f32 %v1952, %v2001
  %v2051 = vmax.f32 %v1953, %v2002
  %v2052 = vmax.f32 %v1954, %v2003
  %v2053 = vmax.f32 %v1955, %v2004
  %v2054 = vmax.f32 %v1956, %v2005
  %v2055 = vmax.f32 %v1957, %v2006
  %v2056 = vmax.f32 %v1958, %v2007
  %v2057 = vmax.f32 %v1959, %v2008
  %v2058 = vmax.f32 %v1960, %v2009
  %v2059 = vmax.f32 %v1961, %v2010
  %v2060 = vmax.f32 %v1962, %v2011
  %v2061 = vmax.f32 %v1963, %v2012
  %v2062 = vmax.f32 %v1964, %v2013
  %v2063 = vmax.f32 %v1965, %v2014
  %v2064 = vmax.f32 %v1966, %v2015
  %v2065 = vmax.f32 %v1967, %v2016
  %v2066 = vmax.f32 %v1968, %v2017
  %v2067 = vmax.f32 %v1969, %v2018
  %v2068 = vmax.f32 %v1970, %v2019
  %v2069 = vmax.f32 %v1971, %v2020
  %v2070 = vmax.f32 %v1972, %v2021
  %v2071 = vmax.f32 %v1973, %v2022
  %v2072 = vmax.f32 %v1974, %v2023
  %v2073 = vmax.f32 %v1975, %v2024
  %v2074 = vmax.f32 %v1976, %v2025
  %v2075 = vmax.f32 %v1977, %v2026
  %v2076 = vmax.f32 %v1978, %v2027
  %v2077 = vmax.f32 %v1979, %v2028
  %v2078 = vmax.f32 %v1980, %v2029
  %v2079 = vmax.f32 %v1981, %v2030
  %v2080 = vmax.f32 %v1982, %v2031
  %v2081 = vmax.f32 %v1983, %v2032
  %v2082 = vmax.f32 %v1984, %v2033
  %v2083 = vmax.f32 %v1985, %v2034
  %v2084 = vmax.f32 %v1986, %v2035
  %v2085 = vmax.f32 %v1987, %v2036
  %v2086 = vmax.f32 %v1988, %v2037
  %v2087 = vmax.f32 %v1989, %v2038
  %v2088 = vmax.f32 %v1990, %v2039
  %v2089 = vmax.f32 %v1991, %v2040
  %v2090 = vmax.f32 %v1992, %v2041
  %v2091 = vmax.f32 %v1993, %v2042
  %v2092 = vmax.f32 %v1994, %v2043
  %v2093 = vmax.f32 %v1995, %v2044
  %v2094 = vmax.f32 %v1996, %v2045
  %v2095 = vmax.f32 %v1997, %v2046
  %v2096 = vld [vmem:[%s2] sm:$0x1]
  %v2098 = vlaneseq
  %v2099 = vshrl.u32 %v2098, 7
  %v2100 = vsub.s32 0, %v2099
  %v2101 = vrot.slane %v2096, %v2100
  %v2103 = vadd.f32 %v2047, %v2101
  %v2104 = vadd.f32 %v2048, %v2101
  %v2105 = vadd.f32 %v2049, %v2101
  %v2106 = vadd.f32 %v2050, %v2101
  %v2107 = vadd.f32 %v2051, %v2101
  %v2108 = vadd.f32 %v2052, %v2101
  %v2109 = vadd.f32 %v2053, %v2101
  %v2110 = vadd.f32 %v2054, %v2101
  %v2111 = vadd.f32 %v2055, %v2101
  %v2112 = vadd.f32 %v2056, %v2101
  %v2113 = vadd.f32 %v2057, %v2101
  %v2114 = vadd.f32 %v2058, %v2101
  %v2115 = vadd.f32 %v2059, %v2101
  %v2116 = vadd.f32 %v2060, %v2101
  %v2117 = vadd.f32 %v2061, %v2101
  %v2118 = vadd.f32 %v2062, %v2101
  %v2119 = vadd.f32 %v2063, %v2101
  %v2120 = vadd.f32 %v2064, %v2101
  %v2121 = vadd.f32 %v2065, %v2101
  %v2122 = vadd.f32 %v2066, %v2101
  %v2123 = vadd.f32 %v2067, %v2101
  %v2124 = vadd.f32 %v2068, %v2101
  %v2125 = vadd.f32 %v2069, %v2101
  %v2126 = vadd.f32 %v2070, %v2101
  %v2127 = vadd.f32 %v2071, %v2101
  %v2128 = vadd.f32 %v2072, %v2101
  %v2129 = vadd.f32 %v2073, %v2101
  %v2130 = vadd.f32 %v2074, %v2101
  %v2131 = vadd.f32 %v2075, %v2101
  %v2132 = vadd.f32 %v2076, %v2101
  %v2133 = vadd.f32 %v2077, %v2101
  %v2134 = vadd.f32 %v2078, %v2101
  %v2135 = vadd.f32 %v2079, %v2101
  %v2136 = vadd.f32 %v2080, %v2101
  %v2137 = vadd.f32 %v2081, %v2101
  %v2138 = vadd.f32 %v2082, %v2101
  %v2139 = vadd.f32 %v2083, %v2101
  %v2140 = vadd.f32 %v2084, %v2101
  %v2141 = vadd.f32 %v2085, %v2101
  %v2142 = vadd.f32 %v2086, %v2101
  %v2143 = vadd.f32 %v2087, %v2101
  %v2144 = vadd.f32 %v2088, %v2101
  %v2145 = vadd.f32 %v2089, %v2101
  %v2146 = vadd.f32 %v2090, %v2101
  %v2147 = vadd.f32 %v2091, %v2101
  %v2148 = vadd.f32 %v2092, %v2101
  %v2149 = vadd.f32 %v2093, %v2101
  %v2150 = vadd.f32 %v2094, %v2101
  %v2151 = vadd.f32 %v2095, %v2101
  %v2152 = vmax.f32 %v2103, 0.0
  %v2153 = vmax.f32 %v2104, 0.0
  %v2154 = vmax.f32 %v2105, 0.0
  %v2155 = vmax.f32 %v2106, 0.0
  %v2156 = vmax.f32 %v2107, 0.0
  %v2157 = vmax.f32 %v2108, 0.0
  %v2158 = vmax.f32 %v2109, 0.0
  %v2159 = vmax.f32 %v2110, 0.0
  %v2160 = vmax.f32 %v2111, 0.0
  %v2161 = vmax.f32 %v2112, 0.0
  %v2162 = vmax.f32 %v2113, 0.0
  %v2163 = vmax.f32 %v2114, 0.0
  %v2164 = vmax.f32 %v2115, 0.0
  %v2165 = vmax.f32 %v2116, 0.0
  %v2166 = vmax.f32 %v2117, 0.0
  %v2167 = vmax.f32 %v2118, 0.0
  %v2168 = vmax.f32 %v2119, 0.0
  %v2169 = vmax.f32 %v2120, 0.0
  %v2170 = vmax.f32 %v2121, 0.0
  %v2171 = vmax.f32 %v2122, 0.0
  %v2172 = vmax.f32 %v2123, 0.0
  %v2173 = vmax.f32 %v2124, 0.0
  %v2174 = vmax.f32 %v2125, 0.0
  %v2175 = vmax.f32 %v2126, 0.0
  %v2176 = vmax.f32 %v2127, 0.0
  %v2177 = vmax.f32 %v2128, 0.0
  %v2178 = vmax.f32 %v2129, 0.0
  %v2179 = vmax.f32 %v2130, 0.0
  %v2180 = vmax.f32 %v2131, 0.0
  %v2181 = vmax.f32 %v2132, 0.0
  %v2182 = vmax.f32 %v2133, 0.0
  %v2183 = vmax.f32 %v2134, 0.0
  %v2184 = vmax.f32 %v2135, 0.0
  %v2185 = vmax.f32 %v2136, 0.0
  %v2186 = vmax.f32 %v2137, 0.0
  %v2187 = vmax.f32 %v2138, 0.0
  %v2188 = vmax.f32 %v2139, 0.0
  %v2189 = vmax.f32 %v2140, 0.0
  %v2190 = vmax.f32 %v2141, 0.0
  %v2191 = vmax.f32 %v2142, 0.0
  %v2192 = vmax.f32 %v2143, 0.0
  %v2193 = vmax.f32 %v2144, 0.0
  %v2194 = vmax.f32 %v2145, 0.0
  %v2195 = vmax.f32 %v2146, 0.0
  %v2196 = vmax.f32 %v2147, 0.0
  %v2197 = vmax.f32 %v2148, 0.0
  %v2198 = vmax.f32 %v2149, 0.0
  %v2199 = vmax.f32 %v2150, 0.0
  %v2200 = vmax.f32 %v2151, 0.0
  %vm2201 = vcmask 261120
  %2202 = vst.msk [vmem:[%s3] sm:$0xff] %vm2201, %v2152
  %2203 = vst.msk [vmem:[%s3 + $0x8] sm:$0xff] %vm2201, %v2153
  %2204 = vst.msk [vmem:[%s3 + $0x10] sm:$0xff] %vm2201, %v2154
  %2205 = vst.msk [vmem:[%s3 + $0x18] sm:$0xff] %vm2201, %v2155
  %2206 = vst.msk [vmem:[%s3 + $0x20] sm:$0xff] %vm2201, %v2156
  %2207 = vst.msk [vmem:[%s3 + $0x28] sm:$0xff] %vm2201, %v2157
  %2208 = vst.msk [vmem:[%s3 + $0x30] sm:$0xff] %vm2201, %v2158
  %2209 = vst.msk [vmem:[%s3 + $0x38] sm:$0xff] %vm2201, %v2159
  %2210 = vst.msk [vmem:[%s3 + $0x40] sm:$0xff] %vm2201, %v2160
  %2211 = vst.msk [vmem:[%s3 + $0x48] sm:$0xff] %vm2201, %v2161
  %2212 = vst.msk [vmem:[%s3 + $0x50] sm:$0xff] %vm2201, %v2162
  %2213 = vst.msk [vmem:[%s3 + $0x58] sm:$0xff] %vm2201, %v2163
  %2214 = vst.msk [vmem:[%s3 + $0x60] sm:$0xff] %vm2201, %v2164
  %2215 = vst.msk [vmem:[%s3 + $0x68] sm:$0xff] %vm2201, %v2165
  %2216 = vst.msk [vmem:[%s3 + $0x70] sm:$0xff] %vm2201, %v2166
  %2217 = vst.msk [vmem:[%s3 + $0x78] sm:$0xff] %vm2201, %v2167
  %2218 = vst.msk [vmem:[%s3 + $0x80] sm:$0xff] %vm2201, %v2168
  %2219 = vst.msk [vmem:[%s3 + $0x88] sm:$0xff] %vm2201, %v2169
  %2220 = vst.msk [vmem:[%s3 + $0x90] sm:$0xff] %vm2201, %v2170
  %2221 = vst.msk [vmem:[%s3 + $0x98] sm:$0xff] %vm2201, %v2171
  %2222 = vst.msk [vmem:[%s3 + $0xa0] sm:$0xff] %vm2201, %v2172
  %2223 = vst.msk [vmem:[%s3 + $0xa8] sm:$0xff] %vm2201, %v2173
  %2224 = vst.msk [vmem:[%s3 + $0xb0] sm:$0xff] %vm2201, %v2174
  %2225 = vst.msk [vmem:[%s3 + $0xb8] sm:$0xff] %vm2201, %v2175
  %2226 = vst.msk [vmem:[%s3 + $0xc0] sm:$0xff] %vm2201, %v2176
  %2227 = vst.msk [vmem:[%s3 + $0xc8] sm:$0xff] %vm2201, %v2177
  %2228 = vst.msk [vmem:[%s3 + $0xd0] sm:$0xff] %vm2201, %v2178
  %2229 = vst.msk [vmem:[%s3 + $0xd8] sm:$0xff] %vm2201, %v2179
  %2230 = vst.msk [vmem:[%s3 + $0xe0] sm:$0xff] %vm2201, %v2180
  %2231 = vst.msk [vmem:[%s3 + $0xe8] sm:$0xff] %vm2201, %v2181
  %2232 = vst.msk [vmem:[%s3 + $0xf0] sm:$0xff] %vm2201, %v2182
  %2233 = vst.msk [vmem:[%s3 + $0xf8] sm:$0xff] %vm2201, %v2183
  %2234 = vst.msk [vmem:[%s3 + $0x100] sm:$0xff] %vm2201, %v2184
  %2235 = vst.msk [vmem:[%s3 + $0x108] sm:$0xff] %vm2201, %v2185
  %2236 = vst.msk [vmem:[%s3 + $0x110] sm:$0xff] %vm2201, %v2186
  %2237 = vst.msk [vmem:[%s3 + $0x118] sm:$0xff] %vm2201, %v2187
  %2238 = vst.msk [vmem:[%s3 + $0x120] sm:$0xff] %vm2201, %v2188
  %2239 = vst.msk [vmem:[%s3 + $0x128] sm:$0xff] %vm2201, %v2189
  %2240 = vst.msk [vmem:[%s3 + $0x130] sm:$0xff] %vm2201, %v2190
  %2241 = vst.msk [vmem:[%s3 + $0x138] sm:$0xff] %vm2201, %v2191
  %2242 = vst.msk [vmem:[%s3 + $0x140] sm:$0xff] %vm2201, %v2192
  %2243 = vst.msk [vmem:[%s3 + $0x148] sm:$0xff] %vm2201, %v2193
  %2244 = vst.msk [vmem:[%s3 + $0x150] sm:$0xff] %vm2201, %v2194
  %2245 = vst.msk [vmem:[%s3 + $0x158] sm:$0xff] %vm2201, %v2195
  %2246 = vst.msk [vmem:[%s3 + $0x160] sm:$0xff] %vm2201, %v2196
  %2247 = vst.msk [vmem:[%s3 + $0x168] sm:$0xff] %vm2201, %v2197
  %2248 = vst.msk [vmem:[%s3 + $0x170] sm:$0xff] %vm2201, %v2198
  %2249 = vst.msk [vmem:[%s3 + $0x178] sm:$0xff] %vm2201, %v2199
  %2250 = vst.msk [vmem:[%s3 + $0x180] sm:$0xff] %vm2201, %v2200
  // Predicated region
  $region14: #{mnist_cnn_forward.3} parent=0 // pred_check
    _
  $region15: #{mnist_cnn_forward.3} parent=0 // pred_check_branch
    %2252 = sbr.rel (0) target = $region17
  $region16: #{mnist_cnn_forward.3} parent=0 // pred_region
    _
  $region17: #{mnist_cnn_forward.3} parent=0 // pred_fallthru
    _
  // Predicated region
  $region18: #{mnist_cnn_forward.3} parent=0 // pred_check
    _
  $region19: #{mnist_cnn_forward.3} parent=0 // pred_check_branch
    %2254 = sbr.rel (0) target = $region21
  $region20: #{mnist_cnn_forward.3} parent=0 // pred_region
    _
  $region21: #{mnist_cnn_forward.3} parent=0 // pred_fallthru
    _

// kernel: mnist_cnn_forward.4
$region0: #{mnist_cnn_forward.4}
  #allocation0 [shape = 'u32[]', space=smem, size = 0x4, offset = 0x4, fixed_abs, tag = 'smem constant byte address 0x4 - core index']
  #allocation1 [shape = 'u32[144,128]{1,0:T(1,128)}', space=vmem, size = 0x12000, scoped, tag = 'internal scratch']
  %s0 = inlined_call_operand.vmem [shape: bf16[4,98,288], index: 0, kind: input, shape index: {}]
  %s1 = inlined_call_operand.vmem [shape: bf16[288,64], index: 1, kind: input, shape index: {}]
  %s2 = inlined_call_operand.vmem [shape: f32[1,64], index: 2, kind: input, shape index: {}]
  %s3 = inlined_call_operand.vmem [shape: f32[98,64], index: 3, kind: output, shape index: {}]
  %s4 = sld [smem:[#allocation0]]
  $region22: #{mnist_cnn_forward.4} parent=0
    _
  %s6 = ssub.s32 1, %s4
  %s7 = scalar_select 0, %s6, %s4
  // Predicated region
  $region2: #{mnist_cnn_forward.4} parent=0 // pred_check
    _
  $region3: #{mnist_cnn_forward.4} parent=0 // pred_check_branch
    %9 = sbr.rel (0) target = $region5
  $region4: #{mnist_cnn_forward.4} parent=0 // pred_region
    _
  $region5: #{mnist_cnn_forward.4} parent=0 // pred_fallthru
    _
  // Predicated region
  $region6: #{mnist_cnn_forward.4} parent=0 // pred_check
    _
  $region7: #{mnist_cnn_forward.4} parent=0 // pred_check_branch
    %11 = sbr.rel (0) target = $region9
  $region8: #{mnist_cnn_forward.4} parent=0 // pred_region
    _
  $region9: #{mnist_cnn_forward.4} parent=0 // pred_fallthru
    _
  // Predicated region
  $region10: #{mnist_cnn_forward.4} parent=0 // pred_check
    _
  $region11: #{mnist_cnn_forward.4} parent=0 // pred_check_branch
    %13 = sbr.rel (0) target = $region13
  $region12: #{mnist_cnn_forward.4} parent=0 // pred_region
    _
  $region13: #{mnist_cnn_forward.4} parent=0 // pred_fallthru
    _
  %v15 = vld [vmem:[%s1] sm:$0xf]
  %v16 = vld [vmem:[%s1 + $0x4] sm:$0xf]
  %v17 = vld [vmem:[%s1 + $0x8] sm:$0xf]
  %v18 = vld [vmem:[%s1 + $0xc] sm:$0xf]
  %v19 = vld [vmem:[%s1 + $0x10] sm:$0xf]
  %v20 = vld [vmem:[%s1 + $0x14] sm:$0xf]
  %v21 = vld [vmem:[%s1 + $0x18] sm:$0xf]
  %v22 = vld [vmem:[%s1 + $0x1c] sm:$0xf]
  %v23 = vld [vmem:[%s1 + $0x20] sm:$0xf]
  %v24 = vld [vmem:[%s1 + $0x24] sm:$0xf]
  %v25 = vld [vmem:[%s1 + $0x28] sm:$0xf]
  %v26 = vld [vmem:[%s1 + $0x2c] sm:$0xf]
  %v27 = vld [vmem:[%s1 + $0x30] sm:$0xf]
  %v28 = vld [vmem:[%s1 + $0x34] sm:$0xf]
  %v29 = vld [vmem:[%s1 + $0x38] sm:$0xf]
  %v30 = vld [vmem:[%s1 + $0x3c] sm:$0xf]
  %v31 = vld [vmem:[%s1 + $0x40] sm:$0xf]
  %v32 = vld [vmem:[%s1 + $0x44] sm:$0xf]
  %v33 = vld [vmem:[%s1 + $0x48] sm:$0xf]
  %v34 = vld [vmem:[%s1 + $0x4c] sm:$0xf]
  %v35 = vld [vmem:[%s1 + $0x50] sm:$0xf]
  %v36 = vld [vmem:[%s1 + $0x54] sm:$0xf]
  %v37 = vld [vmem:[%s1 + $0x58] sm:$0xf]
  %v38 = vld [vmem:[%s1 + $0x5c] sm:$0xf]
  %v39 = vld [vmem:[%s1 + $0x60] sm:$0xf]
  %v40 = vld [vmem:[%s1 + $0x64] sm:$0xf]
  %v41 = vld [vmem:[%s1 + $0x68] sm:$0xf]
  %v42 = vld [vmem:[%s1 + $0x6c] sm:$0xf]
  %v43 = vld [vmem:[%s1 + $0x70] sm:$0xf]
  %v44 = vld [vmem:[%s1 + $0x74] sm:$0xf]
  %v45 = vld [vmem:[%s1 + $0x78] sm:$0xf]
  %v46 = vld [vmem:[%s1 + $0x7c] sm:$0xf]
  %v47 = vld [vmem:[%s1 + $0x80] sm:$0xf]
  %v48 = vld [vmem:[%s1 + $0x84] sm:$0xf]
  %v49 = vld [vmem:[%s1 + $0x88] sm:$0xf]
  %v50 = vld [vmem:[%s1 + $0x8c] sm:$0xf]
  %v51 = vld [vmem:[%s0] sm:$0xff]
  %v52 = vld [vmem:[%s0 + $0x8] sm:$0xf]
  %v53 = vld [vmem:[%s0 + $0xc] sm:$0xff]
  %v54 = vld [vmem:[%s0 + $0x14] sm:$0xf]
  %v55 = vld [vmem:[%s0 + $0x18] sm:$0xff]
  %v56 = vld [vmem:[%s0 + $0x20] sm:$0xf]
  %v57 = vld [vmem:[%s0 + $0x24] sm:$0xff]
  %v58 = vld [vmem:[%s0 + $0x2c] sm:$0xf]
  %v59 = vld [vmem:[%s0 + $0x30] sm:$0xff]
  %v60 = vld [vmem:[%s0 + $0x38] sm:$0xf]
  %v61 = vld [vmem:[%s0 + $0x3c] sm:$0xff]
  %v62 = vld [vmem:[%s0 + $0x44] sm:$0xf]
  %v63 = vld [vmem:[%s0 + $0x48] sm:$0xff]
  %v64 = vld [vmem:[%s0 + $0x50] sm:$0xf]
  %v65 = vld [vmem:[%s0 + $0x54] sm:$0xff]
  %v66 = vld [vmem:[%s0 + $0x5c] sm:$0xf]
  %v67 = vld [vmem:[%s0 + $0x60] sm:$0xff]
  %v68 = vld [vmem:[%s0 + $0x68] sm:$0xf]
  %v69 = vld [vmem:[%s0 + $0x6c] sm:$0xff]
  %v70 = vld [vmem:[%s0 + $0x74] sm:$0xf]
  %v71 = vld [vmem:[%s0 + $0x78] sm:$0xff]
  %v72 = vld [vmem:[%s0 + $0x80] sm:$0xf]
  %v73 = vld [vmem:[%s0 + $0x84] sm:$0xff]
  %v74 = vld [vmem:[%s0 + $0x8c] sm:$0xf]
  %v75 = vld [vmem:[%s0 + $0x90] sm:$0x11]
  %v76 = vld [vmem:[%s0 + $0x98] sm:$0x1]
  %v103 = vunpack.c.l.b16 %v51
  %v104 = vunpack.c.h.b16 %v51
  %v105 = vunpack.c.l.b16 %v52
  %v106 = vunpack.c.l.b16 %v53
  %v107 = vunpack.c.h.b16 %v53
  %v108 = vunpack.c.l.b16 %v54
  %v109 = vunpack.c.l.b16 %v55
  %v110 = vunpack.c.h.b16 %v55
  %v111 = vunpack.c.l.b16 %v56
  %v112 = vunpack.c.l.b16 %v57
  %v113 = vunpack.c.h.b16 %v57
  %v114 = vunpack.c.l.b16 %v58
  %v115 = vunpack.c.l.b16 %v59
  %v116 = vunpack.c.h.b16 %v59
  %v117 = vunpack.c.l.b16 %v60
  %v118 = vunpack.c.l.b16 %v61
  %v119 = vunpack.c.h.b16 %v61
  %v120 = vunpack.c.l.b16 %v62
  %v121 = vunpack.c.l.b16 %v63
  %v122 = vunpack.c.h.b16 %v63
  %v123 = vunpack.c.l.b16 %v64
  %v124 = vunpack.c.l.b16 %v65
  %v125 = vunpack.c.h.b16 %v65
  %v126 = vunpack.c.l.b16 %v66
  %v127 = vunpack.c.l.b16 %v67
  %v128 = vunpack.c.h.b16 %v67
  %v129 = vunpack.c.l.b16 %v68
  %v130 = vunpack.c.l.b16 %v69
  %v131 = vunpack.c.h.b16 %v69
  %v132 = vunpack.c.l.b16 %v70
  %v133 = vunpack.c.l.b16 %v71
  %v134 = vunpack.c.h.b16 %v71
  %v135 = vunpack.c.l.b16 %v72
  %v136 = vunpack.c.l.b16 %v73
  %v137 = vunpack.c.h.b16 %v73
  %v138 = vunpack.c.l.b16 %v74
  %v139 = vunpack.c.l.b16 %v75
  %v140 = vunpack.c.h.b16 %v75
  %v141 = vunpack.c.l.b16 %v76
  %v142 = vpack.c.b16 %v106, %v103
  %v143 = vpack.c.b16 %v107, %v104
  %v144 = vpack.c.b16 %v108, %v105
  %v145 = vpack.c.b16 %v112, %v109
  %v146 = vpack.c.b16 %v113, %v110
  %v147 = vpack.c.b16 %v114, %v111
  %v148 = vpack.c.b16 %v118, %v115
  %v149 = vpack.c.b16 %v119, %v116
  %v150 = vpack.c.b16 %v120, %v117
  %v151 = vpack.c.b16 %v124, %v121
  %v152 = vpack.c.b16 %v125, %v122
  %v153 = vpack.c.b16 %v126, %v123
  %v154 = vpack.c.b16 %v130, %v127
  %v155 = vpack.c.b16 %v131, %v128
  %v156 = vpack.c.b16 %v132, %v129
  %v157 = vpack.c.b16 %v136, %v133
  %v158 = vpack.c.b16 %v137, %v134
  %v159 = vpack.c.b16 %v138, %v135
  %v160 = vpack.c.b16 %v139, %v139
  %v161 = vpack.c.b16 %v140, %v140
  %v162 = vpack.c.b16 %v141, %v141
  %v213 = vunpack.c.l.b16 %v15
  %v214 = vunpack.c.l.b16 %v16
  %v215 = vunpack.c.l.b16 %v17
  %v216 = vunpack.c.l.b16 %v18
  %v217 = vunpack.c.l.b16 %v19
  %v218 = vunpack.c.l.b16 %v20
  %v219 = vunpack.c.l.b16 %v21
  %v220 = vunpack.c.l.b16 %v22
  %v221 = vunpack.c.l.b16 %v23
  %v222 = vunpack.c.l.b16 %v24
  %v223 = vunpack.c.l.b16 %v25
  %v224 = vunpack.c.l.b16 %v26
  %v225 = vunpack.c.l.b16 %v27
  %v226 = vunpack.c.l.b16 %v28
  %v227 = vunpack.c.l.b16 %v29
  %v228 = vunpack.c.l.b16 %v30
  %v229 = vunpack.c.l.b16 %v31
  %v230 = vunpack.c.l.b16 %v32
  %v231 = vunpack.c.l.b16 %v33
  %v232 = vunpack.c.l.b16 %v34
  %v233 = vunpack.c.l.b16 %v35
  %v234 = vunpack.c.l.b16 %v36
  %v235 = vunpack.c.l.b16 %v37
  %v236 = vunpack.c.l.b16 %v38
  %v237 = vunpack.c.l.b16 %v39
  %v238 = vunpack.c.l.b16 %v40
  %v239 = vunpack.c.l.b16 %v41
  %v240 = vunpack.c.l.b16 %v42
  %v241 = vunpack.c.l.b16 %v43
  %v242 = vunpack.c.l.b16 %v44
  %v243 = vunpack.c.l.b16 %v45
  %v244 = vunpack.c.l.b16 %v46
  %v245 = vunpack.c.l.b16 %v47
  %v246 = vunpack.c.l.b16 %v48
  %v247 = vunpack.c.l.b16 %v49
  %v248 = vunpack.c.l.b16 %v50
  %v249 = vpack.c.b16 %v214, %v213
  %v250 = vpack.c.b16 %v216, %v215
  %v251 = vpack.c.b16 %v218, %v217
  %v252 = vpack.c.b16 %v220, %v219
  %v253 = vpack.c.b16 %v222, %v221
  %v254 = vpack.c.b16 %v224, %v223
  %v255 = vpack.c.b16 %v226, %v225
  %v256 = vpack.c.b16 %v228, %v227
  %v257 = vpack.c.b16 %v230, %v229
  %v258 = vpack.c.b16 %v232, %v231
  %v259 = vpack.c.b16 %v234, %v233
  %v260 = vpack.c.b16 %v236, %v235
  %v261 = vpack.c.b16 %v238, %v237
  %v262 = vpack.c.b16 %v240, %v239
  %v263 = vpack.c.b16 %v242, %v241
  %v264 = vpack.c.b16 %v244, %v243
  %v265 = vpack.c.b16 %v246, %v245
  %v266 = vpack.c.b16 %v248, %v247
  %vm285 = vcmask 261120
  %v287 = vsel %vm285, %v144, 0
  %v290 = vsel %vm285, %v147, 0
  %v293 = vsel %vm285, %v150, 0
  %v296 = vsel %vm285, %v153, 0
  %v299 = vsel %vm285, %v156, 0
  %v302 = vsel %vm285, %v159, 0
  %v305 = vsel %vm285, %v162, 0
  %307 = vmatprep.subr.bf16.mxu0 0
  %308 = vmatpush1.bf16.msra.mxu0 %v249
  %309 = vmatprep.subr.bf16.mxu0 0
  %310 = vmatpush1.bf16.msra.mxu0 %v250
  %311 = vmatprep.subr.bf16.mxu0 0
  %312 = vmatpush1.bf16.msra.mxu0 %v251
  %313 = vmatprep.subr.bf16.mxu0 0
  %314 = vmatpush1.bf16.msra.mxu0 %v252
  %315 = vmatprep.subr.bf16.mxu0 0
  %316 = vmatpush1.bf16.msra.mxu0 %v253
  %317 = vmatprep.subr.bf16.mxu0 0
  %318 = vmatpush1.bf16.msra.mxu0 %v254
  %319 = vmatprep.subr.bf16.mxu0 0
  %320 = vmatpush1.bf16.msra.mxu0 %v255
  %321 = vmatprep.subr.bf16.mxu0 0
  %322 = vmatpush1.bf16.msra.mxu0 %v256
  %323 = vmatprep.subr.bf16.mxu0 0
  %324 = vmatpush1.bf16.msra.mxu0 %v257
  %325 = vmatprep.subr.bf16.mxu0 0
  %326 = vmatpush1.bf16.msra.mxu0 %v258
  %327 = vmatprep.subr.bf16.mxu0 0
  %328 = vmatpush1.bf16.msra.mxu0 %v259
  %329 = vmatprep.subr.bf16.mxu0 0
  %330 = vmatpush1.bf16.msra.mxu0 %v260
  %331 = vmatprep.subr.bf16.mxu0 0
  %332 = vmatpush1.bf16.msra.mxu0 %v261
  %333 = vmatprep.subr.bf16.mxu0 0
  %334 = vmatpush1.bf16.msra.mxu0 %v262
  %335 = vmatprep.subr.bf16.mxu0 0
  %336 = vmatpush1.bf16.msra.mxu0 %v263
  %337 = vmatprep.subr.bf16.mxu0 0
  %338 = vmatpush1.bf16.msra.mxu0 %v264
  %339 = vmatprep.mubr.bf16.mxu0 %v143
  %340 = vmatmul.mubr.bf16.gmra.mrb[0].mxu0 %v142
  %v341 = vpop.f32.mrb[0].mxu0
  %v342 = vadd.f32 0.0, %v341
  %v343 = vpop.f32.mrb[0].mxu0
  %v344 = vpop.f32.mrb[0].mxu0
  %v345 = vadd.f32 0.0, %v344
  %v346 = vpop.f32.mrb[0].mxu0
  %347 = vmatprep.mubr.bf16.mxu0 %v146
  %348 = vmatmul.mubr.bf16.gmra.mrb[0].mxu0 %v145
  %v349 = vpop.f32.mrb[0].mxu0
  %v350 = vadd.f32 0.0, %v349
  %v351 = vpop.f32.mrb[0].mxu0
  %v352 = vpop.f32.mrb[0].mxu0
  %v353 = vadd.f32 0.0, %v352
  %v354 = vpop.f32.mrb[0].mxu0
  %355 = vmatprep.mubr.bf16.mxu0 %v149
  %356 = vmatmul.mubr.bf16.gmra.mrb[0].mxu0 %v148
  %v357 = vpop.f32.mrb[0].mxu0
  %v358 = vadd.f32 0.0, %v357
  %v359 = vpop.f32.mrb[0].mxu0
  %v360 = vpop.f32.mrb[0].mxu0
  %v361 = vadd.f32 0.0, %v360
  %v362 = vpop.f32.mrb[0].mxu0
  %363 = vmatprep.mubr.bf16.mxu0 %v152
  %364 = vmatmul.mubr.bf16.gmra.mrb[0].mxu0 %v151
  %v365 = vpop.f32.mrb[0].mxu0
  %v366 = vadd.f32 0.0, %v365
  %v367 = vpop.f32.mrb[0].mxu0
  %v368 = vpop.f32.mrb[0].mxu0
  %v369 = vadd.f32 0.0, %v368
  %v370 = vpop.f32.mrb[0].mxu0
  %371 = vmatprep.mubr.bf16.mxu0 %v155
  %372 = vmatmul.mubr.bf16.gmra.mrb[0].mxu0 %v154
  %v373 = vpop.f32.mrb[0].mxu0
  %v374 = vadd.f32 0.0, %v373
  %v375 = vpop.f32.mrb[0].mxu0
  %v376 = vpop.f32.mrb[0].mxu0
  %v377 = vadd.f32 0.0, %v376
  %v378 = vpop.f32.mrb[0].mxu0
  %379 = vmatprep.mubr.bf16.mxu0 %v158
  %380 = vmatmul.mubr.bf16.gmra.mrb[0].mxu0 %v157
  %v381 = vpop.f32.mrb[0].mxu0
  %v382 = vadd.f32 0.0, %v381
  %v383 = vpop.f32.mrb[0].mxu0
  %v384 = vpop.f32.mrb[0].mxu0
  %v385 = vadd.f32 0.0, %v384
  %v386 = vpop.f32.mrb[0].mxu0
  %387 = vmatprep.mubr.bf16.mxu0 %v161
  %388 = vmatmul.mubr.bf16.gmra.mrb[0].mxu0 %v160
  %v389 = vpop.f32.mrb[0].mxu0
  %v390 = vadd.f32 0.0, %v389
  %v391 = vpop.f32.mrb[0].mxu0
  %v392 = vpop.f32.mrb[0].mxu0
  %v393 = vpop.f32.mrb[0].mxu0
  %394 = vdwg.mxu0
  %395 = vmatprep.subr.bf16.mxu0 0
  %396 = vmatpush1.bf16.msra.mxu0 %v265
  %397 = vmatprep.subr.bf16.mxu0 0
  %398 = vmatpush1.bf16.msra.mxu0 %v266
  %399 = vmatprep.subr.bf16.mxu0 0
  %400 = vmatpush1.bf16.msra.mxu0 0
  %401 = vmatprep.subr.bf16.mxu0 0
  %402 = vmatpush1.bf16.msra.mxu0 0
  %403 = vmatprep.subr.bf16.mxu0 0
  %404 = vmatpush1.bf16.msra.mxu0 0
  %405 = vmatprep.subr.bf16.mxu0 0
  %406 = vmatpush1.bf16.msra.mxu0 0
  %407 = vmatprep.subr.bf16.mxu0 0
  %408 = vmatpush1.bf16.msra.mxu0 0
  %409 = vmatprep.subr.bf16.mxu0 0
  %410 = vmatpush1.bf16.msra.mxu0 0
  %411 = vmatprep.subr.bf16.mxu0 0
  %412 = vmatpush1.bf16.msra.mxu0 0
  %413 = vmatprep.subr.bf16.mxu0 0
  %414 = vmatpush1.bf16.msra.mxu0 0
  %415 = vmatprep.subr.bf16.mxu0 0
  %416 = vmatpush1.bf16.msra.mxu0 0
  %417 = vmatprep.subr.bf16.mxu0 0
  %418 = vmatpush1.bf16.msra.mxu0 0
  %419 = vmatprep.subr.bf16.mxu0 0
  %420 = vmatpush1.bf16.msra.mxu0 0
  %421 = vmatprep.subr.bf16.mxu0 0
  %422 = vmatpush1.bf16.msra.mxu0 0
  %423 = vmatprep.subr.bf16.mxu0 0
  %424 = vmatpush1.bf16.msra.mxu0 0
  %425 = vmatprep.subr.bf16.mxu0 0
  %426 = vmatpush1.bf16.msra.mxu0 0
  %427 = vmatprep.mubr.bf16.mxu0 0
  %428 = vmatmul.mubr.bf16.gmra.mrb[0].mxu0 %v287
  %v429 = vpop.f32.mrb[0].mxu0
  %v430 = vadd.f32 %v342, %v429
  %v431 = vpop.f32.mrb[0].mxu0
  %v432 = vpop.f32.mrb[0].mxu0
  %v433 = vadd.f32 %v345, %v432
  %v434 = vpop.f32.mrb[0].mxu0
  %435 = vmatprep.mubr.bf16.mxu0 0
  %436 = vmatmul.mubr.bf16.gmra.mrb[0].mxu0 %v290
  %v437 = vpop.f32.mrb[0].mxu0
  %v438 = vadd.f32 %v350, %v437
  %v439 = vpop.f32.mrb[0].mxu0
  %v440 = vpop.f32.mrb[0].mxu0
  %v441 = vadd.f32 %v353, %v440
  %v442 = vpop.f32.mrb[0].mxu0
  %443 = vmatprep.mubr.bf16.mxu0 0
  %444 = vmatmul.mubr.bf16.gmra.mrb[0].mxu0 %v293
  %v445 = vpop.f32.mrb[0].mxu0
  %v446 = vadd.f32 %v358, %v445
  %v447 = vpop.f32.mrb[0].mxu0
  %v448 = vpop.f32.mrb[0].mxu0
  %v449 = vadd.f32 %v361, %v448
  %v450 = vpop.f32.mrb[0].mxu0
  %451 = vmatprep.mubr.bf16.mxu0 0
  %452 = vmatmul.mubr.bf16.gmra.mrb[0].mxu0 %v296
  %v453 = vpop.f32.mrb[0].mxu0
  %v454 = vadd.f32 %v366, %v453
  %v455 = vpop.f32.mrb[0].mxu0
  %v456 = vpop.f32.mrb[0].mxu0
  %v457 = vadd.f32 %v369, %v456
  %v458 = vpop.f32.mrb[0].mxu0
  %459 = vmatprep.mubr.bf16.mxu0 0
  %460 = vmatmul.mubr.bf16.gmra.mrb[0].mxu0 %v299
  %v461 = vpop.f32.mrb[0].mxu0
  %v462 = vadd.f32 %v374, %v461
  %v463 = vpop.f32.mrb[0].mxu0
  %v464 = vpop.f32.mrb[0].mxu0
  %v465 = vadd.f32 %v377, %v464
  %v466 = vpop.f32.mrb[0].mxu0
  %467 = vmatprep.mubr.bf16.mxu0 0
  %468 = vmatmul.mubr.bf16.gmra.mrb[0].mxu0 %v302
  %v469 = vpop.f32.mrb[0].mxu0
  %v470 = vadd.f32 %v382, %v469
  %v471 = vpop.f32.mrb[0].mxu0
  %v472 = vpop.f32.mrb[0].mxu0
  %v473 = vadd.f32 %v385, %v472
  %v474 = vpop.f32.mrb[0].mxu0
  %475 = vmatprep.mubr.bf16.mxu0 0
  %476 = vmatmul.mubr.bf16.gmra.mrb[0].mxu0 %v305
  %v477 = vpop.f32.mrb[0].mxu0
  %v478 = vadd.f32 %v390, %v477
  %v479 = vpop.f32.mrb[0].mxu0
  %v480 = vpop.f32.mrb[0].mxu0
  %v481 = vpop.f32.mrb[0].mxu0
  %482 = vdwg.mxu0
  %s483 = scalar_lea.vmem %s0, 156
  %v484 = vld [vmem:[%s483] sm:$0xff]
  %v485 = vld [vmem:[%s483 + $0x8] sm:$0xf]
  %v486 = vld [vmem:[%s483 + $0xc] sm:$0xff]
  %v487 = vld [vmem:[%s483 + $0x14] sm:$0xf]
  %v488 = vld [vmem:[%s483 + $0x18] sm:$0xff]
  %v489 = vld [vmem:[%s483 + $0x20] sm:$0xf]
  %v490 = vld [vmem:[%s483 + $0x24] sm:$0xff]
  %v491 = vld [vmem:[%s483 + $0x2c] sm:$0xf]
  %v492 = vld [vmem:[%s483 + $0x30] sm:$0xff]
  %v493 = vld [vmem:[%s483 + $0x38] sm:$0xf]
  %v494 = vld [vmem:[%s483 + $0x3c] sm:$0xff]
  %v495 = vld [vmem:[%s483 + $0x44] sm:$0xf]
  %v496 = vld [vmem:[%s483 + $0x48] sm:$0xff]
  %v497 = vld [vmem:[%s483 + $0x50] sm:$0xf]
  %v498 = vld [vmem:[%s483 + $0x54] sm:$0xff]
  %v499 = vld [vmem:[%s483 + $0x5c] sm:$0xf]
  %v500 = vld [vmem:[%s483 + $0x60] sm:$0xff]
  %v501 = vld [vmem:[%s483 + $0x68] sm:$0xf]
  %v502 = vld [vmem:[%s483 + $0x6c] sm:$0xff]
  %v503 = vld [vmem:[%s483 + $0x74] sm:$0xf]
  %v504 = vld [vmem:[%s483 + $0x78] sm:$0xff]
  %v505 = vld [vmem:[%s483 + $0x80] sm:$0xf]
  %v506 = vld [vmem:[%s483 + $0x84] sm:$0xff]
  %v507 = vld [vmem:[%s483 + $0x8c] sm:$0xf]
  %v508 = vld [vmem:[%s483 + $0x90] sm:$0x11]
  %v509 = vld [vmem:[%s483 + $0x98] sm:$0x1]
  %v536 = vunpack.c.l.b16 %v484
  %v537 = vunpack.c.h.b16 %v484
  %v538 = vunpack.c.l.b16 %v485
  %v539 = vunpack.c.l.b16 %v486
  %v540 = vunpack.c.h.b16 %v486
  %v541 = vunpack.c.l.b16 %v487
  %v542 = vunpack.c.l.b16 %v488
  %v543 = vunpack.c.h.b16 %v488
  %v544 = vunpack.c.l.b16 %v489
  %v545 = vunpack.c.l.b16 %v490
  %v546 = vunpack.c.h.b16 %v490
  %v547 = vunpack.c.l.b16 %v491
  %v548 = vunpack.c.l.b16 %v492
  %v549 = vunpack.c.h.b16 %v492
  %v550 = vunpack.c.l.b16 %v493
  %v551 = vunpack.c.l.b16 %v494
  %v552 = vunpack.c.h.b16 %v494
  %v553 = vunpack.c.l.b16 %v495
  %v554 = vunpack.c.l.b16 %v496
  %v555 = vunpack.c.h.b16 %v496
  %v556 = vunpack.c.l.b16 %v497
  %v557 = vunpack.c.l.b16 %v498
  %v558 = vunpack.c.h.b16 %v498
  %v559 = vunpack.c.l.b16 %v499
  %v560 = vunpack.c.l.b16 %v500
  %v561 = vunpack.c.h.b16 %v500
  %v562 = vunpack.c.l.b16 %v501
  %v563 = vunpack.c.l.b16 %v502
  %v564 = vunpack.c.h.b16 %v502
  %v565 = vunpack.c.l.b16 %v503
  %v566 = vunpack.c.l.b16 %v504
  %v567 = vunpack.c.h.b16 %v504
  %v568 = vunpack.c.l.b16 %v505
  %v569 = vunpack.c.l.b16 %v506
  %v570 = vunpack.c.h.b16 %v506
  %v571 = vunpack.c.l.b16 %v507
  %v572 = vunpack.c.l.b16 %v508
  %v573 = vunpack.c.h.b16 %v508
  %v574 = vunpack.c.l.b16 %v509
  %v575 = vpack.c.b16 %v539, %v536
  %v576 = vpack.c.b16 %v540, %v537
  %v577 = vpack.c.b16 %v541, %v538
  %v578 = vpack.c.b16 %v545, %v542
  %v579 = vpack.c.b16 %v546, %v543
  %v580 = vpack.c.b16 %v547, %v544
  %v581 = vpack.c.b16 %v551, %v548
  %v582 = vpack.c.b16 %v552, %v549
  %v583 = vpack.c.b16 %v553, %v550
  %v584 = vpack.c.b16 %v557, %v554
  %v585 = vpack.c.b16 %v558, %v555
  %v586 = vpack.c.b16 %v559, %v556
  %v587 = vpack.c.b16 %v563, %v560
  %v588 = vpack.c.b16 %v564, %v561
  %v589 = vpack.c.b16 %v565, %v562
  %v590 = vpack.c.b16 %v569, %v566
  %v591 = vpack.c.b16 %v570, %v567
  %v592 = vpack.c.b16 %v571, %v568
  %v593 = vpack.c.b16 %v572, %v572
  %v594 = vpack.c.b16 %v573, %v573
  %v595 = vpack.c.b16 %v574, %v574
  %v611 = vsel %vm285, %v577, 0
  %v614 = vsel %vm285, %v580, 0
  %v617 = vsel %vm285, %v583, 0
  %v620 = vsel %vm285, %v586, 0
  %v623 = vsel %vm285, %v589, 0
  %v626 = vsel %vm285, %v592, 0
  %v629 = vsel %vm285, %v595, 0
  %631 = vmatprep.subr.bf16.mxu0 0
  %632 = vmatpush1.bf16.msra.mxu0 %v249
  %633 = vmatprep.subr.bf16.mxu0 0
  %634 = vmatpush1.bf16.msra.mxu0 %v250
  %635 = vmatprep.subr.bf16.mxu0 0
  %636 = vmatpush1.bf16.msra.mxu0 %v251
  %637 = vmatprep.subr.bf16.mxu0 0
  %638 = vmatpush1.bf16.msra.mxu0 %v252
  %639 = vmatprep.subr.bf16.mxu0 0
  %640 = vmatpush1.bf16.msra.mxu0 %v253
  %641 = vmatprep.subr.bf16.mxu0 0
  %642 = vmatpush1.bf16.msra.mxu0 %v254
  %643 = vmatprep.subr.bf16.mxu0 0
  %644 = vmatpush1.bf16.msra.mxu0 %v255
  %645 = vmatprep.subr.bf16.mxu0 0
  %646 = vmatpush1.bf16.msra.mxu0 %v256
  %647 = vmatprep.subr.bf16.mxu0 0
  %648 = vmatpush1.bf16.msra.mxu0 %v257
  %649 = vmatprep.subr.bf16.mxu0 0
  %650 = vmatpush1.bf16.msra.mxu0 %v258
  %651 = vmatprep.subr.bf16.mxu0 0
  %652 = vmatpush1.bf16.msra.mxu0 %v259
  %653 = vmatprep.subr.bf16.mxu0 0
  %654 = vmatpush1.bf16.msra.mxu0 %v260
  %655 = vmatprep.subr.bf16.mxu0 0
  %656 = vmatpush1.bf16.msra.mxu0 %v261
  %657 = vmatprep.subr.bf16.mxu0 0
  %658 = vmatpush1.bf16.msra.mxu0 %v262
  %659 = vmatprep.subr.bf16.mxu0 0
  %660 = vmatpush1.bf16.msra.mxu0 %v263
  %661 = vmatprep.subr.bf16.mxu0 0
  %662 = vmatpush1.bf16.msra.mxu0 %v264
  %663 = vmatprep.mubr.bf16.mxu0 %v576
  %664 = vmatmul.mubr.bf16.gmra.mrb[0].mxu0 %v575
  %v665 = vpop.f32.mrb[0].mxu0
  %v666 = vadd.f32 0.0, %v665
  %v667 = vpop.f32.mrb[0].mxu0
  %v668 = vpop.f32.mrb[0].mxu0
  %v669 = vadd.f32 0.0, %v668
  %v670 = vpop.f32.mrb[0].mxu0
  %671 = vmatprep.mubr.bf16.mxu0 %v579
  %672 = vmatmul.mubr.bf16.gmra.mrb[0].mxu0 %v578
  %v673 = vpop.f32.mrb[0].mxu0
  %v674 = vadd.f32 0.0, %v673
  %v675 = vpop.f32.mrb[0].mxu0
  %v676 = vpop.f32.mrb[0].mxu0
  %v677 = vadd.f32 0.0, %v676
  %v678 = vpop.f32.mrb[0].mxu0
  %679 = vmatprep.mubr.bf16.mxu0 %v582
  %680 = vmatmul.mubr.bf16.gmra.mrb[0].mxu0 %v581
  %v681 = vpop.f32.mrb[0].mxu0
  %v682 = vadd.f32 0.0, %v681
  %v683 = vpop.f32.mrb[0].mxu0
  %v684 = vpop.f32.mrb[0].mxu0
  %v685 = vadd.f32 0.0, %v684
  %v686 = vpop.f32.mrb[0].mxu0
  %687 = vmatprep.mubr.bf16.mxu0 %v585
  %688 = vmatmul.mubr.bf16.gmra.mrb[0].mxu0 %v584
  %v689 = vpop.f32.mrb[0].mxu0
  %v690 = vadd.f32 0.0, %v689
  %v691 = vpop.f32.mrb[0].mxu0
  %v692 = vpop.f32.mrb[0].mxu0
  %v693 = vadd.f32 0.0, %v692
  %v694 = vpop.f32.mrb[0].mxu0
  %695 = vmatprep.mubr.bf16.mxu0 %v588
  %696 = vmatmul.mubr.bf16.gmra.mrb[0].mxu0 %v587
  %v697 = vpop.f32.mrb[0].mxu0
  %v698 = vadd.f32 0.0, %v697
  %v699 = vpop.f32.mrb[0].mxu0
  %v700 = vpop.f32.mrb[0].mxu0
  %v701 = vadd.f32 0.0, %v700
  %v702 = vpop.f32.mrb[0].mxu0
  %703 = vmatprep.mubr.bf16.mxu0 %v591
  %704 = vmatmul.mubr.bf16.gmra.mrb[0].mxu0 %v590
  %v705 = vpop.f32.mrb[0].mxu0
  %v706 = vadd.f32 0.0, %v705
  %v707 = vpop.f32.mrb[0].mxu0
  %v708 = vpop.f32.mrb[0].mxu0
  %v709 = vadd.f32 0.0, %v708
  %v710 = vpop.f32.mrb[0].mxu0
  %711 = vmatprep.mubr.bf16.mxu0 %v594
  %712 = vmatmul.mubr.bf16.gmra.mrb[0].mxu0 %v593
  %v713 = vpop.f32.mrb[0].mxu0
  %v714 = vadd.f32 0.0, %v713
  %v715 = vpop.f32.mrb[0].mxu0
  %v716 = vpop.f32.mrb[0].mxu0
  %v717 = vpop.f32.mrb[0].mxu0
  %718 = vdwg.mxu0
  %719 = vmatprep.subr.bf16.mxu0 0
  %720 = vmatpush1.bf16.msra.mxu0 %v265
  %721 = vmatprep.subr.bf16.mxu0 0
  %722 = vmatpush1.bf16.msra.mxu0 %v266
  %723 = vmatprep.subr.bf16.mxu0 0
  %724 = vmatpush1.bf16.msra.mxu0 0
  %725 = vmatprep.subr.bf16.mxu0 0
  %726 = vmatpush1.bf16.msra.mxu0 0
  %727 = vmatprep.subr.bf16.mxu0 0
  %728 = vmatpush1.bf16.msra.mxu0 0
  %729 = vmatprep.subr.bf16.mxu0 0
  %730 = vmatpush1.bf16.msra.mxu0 0
  %731 = vmatprep.subr.bf16.mxu0 0
  %732 = vmatpush1.bf16.msra.mxu0 0
  %733 = vmatprep.subr.bf16.mxu0 0
  %734 = vmatpush1.bf16.msra.mxu0 0
  %735 = vmatprep.subr.bf16.mxu0 0
  %736 = vmatpush1.bf16.msra.mxu0 0
  %737 = vmatprep.subr.bf16.mxu0 0
  %738 = vmatpush1.bf16.msra.mxu0 0
  %739 = vmatprep.subr.bf16.mxu0 0
  %740 = vmatpush1.bf16.msra.mxu0 0
  %741 = vmatprep.subr.bf16.mxu0 0
  %742 = vmatpush1.bf16.msra.mxu0 0
  %743 = vmatprep.subr.bf16.mxu0 0
  %744 = vmatpush1.bf16.msra.mxu0 0
  %745 = vmatprep.subr.bf16.mxu0 0
  %746 = vmatpush1.bf16.msra.mxu0 0
  %747 = vmatprep.subr.bf16.mxu0 0
  %748 = vmatpush1.bf16.msra.mxu0 0
  %749 = vmatprep.subr.bf16.mxu0 0
  %750 = vmatpush1.bf16.msra.mxu0 0
  %751 = vmatprep.mubr.bf16.mxu0 0
  %752 = vmatmul.mubr.bf16.gmra.mrb[0].mxu0 %v611
  %v753 = vpop.f32.mrb[0].mxu0
  %v754 = vadd.f32 %v666, %v753
  %v755 = vpop.f32.mrb[0].mxu0
  %v756 = vpop.f32.mrb[0].mxu0
  %v757 = vadd.f32 %v669, %v756
  %v758 = vpop.f32.mrb[0].mxu0
  %759 = vmatprep.mubr.bf16.mxu0 0
  %760 = vmatmul.mubr.bf16.gmra.mrb[0].mxu0 %v614
  %v761 = vpop.f32.mrb[0].mxu0
  %v762 = vadd.f32 %v674, %v761
  %v763 = vpop.f32.mrb[0].mxu0
  %v764 = vpop.f32.mrb[0].mxu0
  %v765 = vadd.f32 %v677, %v764
  %v766 = vpop.f32.mrb[0].mxu0
  %767 = vmatprep.mubr.bf16.mxu0 0
  %768 = vmatmul.mubr.bf16.gmra.mrb[0].mxu0 %v617
  %v769 = vpop.f32.mrb[0].mxu0
  %v770 = vadd.f32 %v682, %v769
  %v771 = vpop.f32.mrb[0].mxu0
  %v772 = vpop.f32.mrb[0].mxu0
  %v773 = vadd.f32 %v685, %v772
  %v774 = vpop.f32.mrb[0].mxu0
  %775 = vmatprep.mubr.bf16.mxu0 0
  %776 = vmatmul.mubr.bf16.gmra.mrb[0].mxu0 %v620
  %v777 = vpop.f32.mrb[0].mxu0
  %v778 = vadd.f32 %v690, %v777
  %v779 = vpop.f32.mrb[0].mxu0
  %v780 = vpop.f32.mrb[0].mxu0
  %v781 = vadd.f32 %v693, %v780
  %v782 = vpop.f32.mrb[0].mxu0
  %783 = vmatprep.mubr.bf16.mxu0 0
  %784 = vmatmul.mubr.bf16.gmra.mrb[0].mxu0 %v623
  %v785 = vpop.f32.mrb[0].mxu0
  %v786 = vadd.f32 %v698, %v785
  %v787 = vpop.f32.mrb[0].mxu0
  %v788 = vpop.f32.mrb[0].mxu0
  %v789 = vadd.f32 %v701, %v788
  %v790 = vpop.f32.mrb[0].mxu0
  %791 = vmatprep.mubr.bf16.mxu0 0
  %792 = vmatmul.mubr.bf16.gmra.mrb[0].mxu0 %v626
  %v793 = vpop.f32.mrb[0].mxu0
  %v794 = vadd.f32 %v706, %v793
  %v795 = vpop.f32.mrb[0].mxu0
  %v796 = vpop.f32.mrb[0].mxu0
  %v797 = vadd.f32 %v709, %v796
  %v798 = vpop.f32.mrb[0].mxu0
  %799 = vmatprep.mubr.bf16.mxu0 0
  %800 = vmatmul.mubr.bf16.gmra.mrb[0].mxu0 %v629
  %v801 = vpop.f32.mrb[0].mxu0
  %v802 = vadd.f32 %v714, %v801
  %v803 = vpop.f32.mrb[0].mxu0
  %v804 = vpop.f32.mrb[0].mxu0
  %v805 = vpop.f32.mrb[0].mxu0
  %806 = vdwg.mxu0
  %s807 = scalar_lea.vmem %s0, 312
  %v808 = vld [vmem:[%s807] sm:$0xff]
  %v809 = vld [vmem:[%s807 + $0x8] sm:$0xf]
  %v810 = vld [vmem:[%s807 + $0xc] sm:$0xff]
  %v811 = vld [vmem:[%s807 + $0x14] sm:$0xf]
  %v812 = vld [vmem:[%s807 + $0x18] sm:$0xff]
  %v813 = vld [vmem:[%s807 + $0x20] sm:$0xf]
  %v814 = vld [vmem:[%s807 + $0x24] sm:$0xff]
  %v815 = vld [vmem:[%s807 + $0x2c] sm:$0xf]
  %v816 = vld [vmem:[%s807 + $0x30] sm:$0xff]
  %v817 = vld [vmem:[%s807 + $0x38] sm:$0xf]
  %v818 = vld [vmem:[%s807 + $0x3c] sm:$0xff]
  %v819 = vld [vmem:[%s807 + $0x44] sm:$0xf]
  %v820 = vld [vmem:[%s807 + $0x48] sm:$0xff]
  %v821 = vld [vmem:[%s807 + $0x50] sm:$0xf]
  %v822 = vld [vmem:[%s807 + $0x54] sm:$0xff]
  %v823 = vld [vmem:[%s807 + $0x5c] sm:$0xf]
  %v824 = vld [vmem:[%s807 + $0x60] sm:$0xff]
  %v825 = vld [vmem:[%s807 + $0x68] sm:$0xf]
  %v826 = vld [vmem:[%s807 + $0x6c] sm:$0xff]
  %v827 = vld [vmem:[%s807 + $0x74] sm:$0xf]
  %v828 = vld [vmem:[%s807 + $0x78] sm:$0xff]
  %v829 = vld [vmem:[%s807 + $0x80] sm:$0xf]
  %v830 = vld [vmem:[%s807 + $0x84] sm:$0xff]
  %v831 = vld [vmem:[%s807 + $0x8c] sm:$0xf]
  %v832 = vld [vmem:[%s807 + $0x90] sm:$0x11]
  %v833 = vld [vmem:[%s807 + $0x98] sm:$0x1]
  %v860 = vunpack.c.l.b16 %v808
  %v861 = vunpack.c.h.b16 %v808
  %v862 = vunpack.c.l.b16 %v809
  %v863 = vunpack.c.l.b16 %v810
  %v864 = vunpack.c.h.b16 %v810
  %v865 = vunpack.c.l.b16 %v811
  %v866 = vunpack.c.l.b16 %v812
  %v867 = vunpack.c.h.b16 %v812
  %v868 = vunpack.c.l.b16 %v813
  %v869 = vunpack.c.l.b16 %v814
  %v870 = vunpack.c.h.b16 %v814
  %v871 = vunpack.c.l.b16 %v815
  %v872 = vunpack.c.l.b16 %v816
  %v873 = vunpack.c.h.b16 %v816
  %v874 = vunpack.c.l.b16 %v817
  %v875 = vunpack.c.l.b16 %v818
  %v876 = vunpack.c.h.b16 %v818
  %v877 = vunpack.c.l.b16 %v819
  %v878 = vunpack.c.l.b16 %v820
  %v879 = vunpack.c.h.b16 %v820
  %v880 = vunpack.c.l.b16 %v821
  %v881 = vunpack.c.l.b16 %v822
  %v882 = vunpack.c.h.b16 %v822
  %v883 = vunpack.c.l.b16 %v823
  %v884 = vunpack.c.l.b16 %v824
  %v885 = vunpack.c.h.b16 %v824
  %v886 = vunpack.c.l.b16 %v825
  %v887 = vunpack.c.l.b16 %v826
  %v888 = vunpack.c.h.b16 %v826
  %v889 = vunpack.c.l.b16 %v827
  %v890 = vunpack.c.l.b16 %v828
  %v891 = vunpack.c.h.b16 %v828
  %v892 = vunpack.c.l.b16 %v829
  %v893 = vunpack.c.l.b16 %v830
  %v894 = vunpack.c.h.b16 %v830
  %v895 = vunpack.c.l.b16 %v831
  %v896 = vunpack.c.l.b16 %v832
  %v897 = vunpack.c.h.b16 %v832
  %v898 = vunpack.c.l.b16 %v833
  %v899 = vpack.c.b16 %v863, %v860
  %v900 = vpack.c.b16 %v864, %v861
  %v901 = vpack.c.b16 %v865, %v862
  %v902 = vpack.c.b16 %v869, %v866
  %v903 = vpack.c.b16 %v870, %v867
  %v904 = vpack.c.b16 %v871, %v868
  %v905 = vpack.c.b16 %v875, %v872
  %v906 = vpack.c.b16 %v876, %v873
  %v907 = vpack.c.b16 %v877, %v874
  %v908 = vpack.c.b16 %v881, %v878
  %v909 = vpack.c.b16 %v882, %v879
  %v910 = vpack.c.b16 %v883, %v880
  %v911 = vpack.c.b16 %v887, %v884
  %v912 = vpack.c.b16 %v888, %v885
  %v913 = vpack.c.b16 %v889, %v886
  %v914 = vpack.c.b16 %v893, %v890
  %v915 = vpack.c.b16 %v894, %v891
  %v916 = vpack.c.b16 %v895, %v892
  %v917 = vpack.c.b16 %v896, %v896
  %v918 = vpack.c.b16 %v897, %v897
  %v919 = vpack.c.b16 %v898, %v898
  %v935 = vsel %vm285, %v901, 0
  %v938 = vsel %vm285, %v904, 0
  %v941 = vsel %vm285, %v907, 0
  %v944 = vsel %vm285, %v910, 0
  %v947 = vsel %vm285, %v913, 0
  %v950 = vsel %vm285, %v916, 0
  %v953 = vsel %vm285, %v919, 0
  %955 = vmatprep.subr.bf16.mxu0 0
  %956 = vmatpush1.bf16.msra.mxu0 %v249
  %957 = vmatprep.subr.bf16.mxu0 0
  %958 = vmatpush1.bf16.msra.mxu0 %v250
  %959 = vmatprep.subr.bf16.mxu0 0
  %960 = vmatpush1.bf16.msra.mxu0 %v251
  %961 = vmatprep.subr.bf16.mxu0 0
  %962 = vmatpush1.bf16.msra.mxu0 %v252
  %963 = vmatprep.subr.bf16.mxu0 0
  %964 = vmatpush1.bf16.msra.mxu0 %v253
  %965 = vmatprep.subr.bf16.mxu0 0
  %966 = vmatpush1.bf16.msra.mxu0 %v254
  %967 = vmatprep.subr.bf16.mxu0 0
  %968 = vmatpush1.bf16.msra.mxu0 %v255
  %969 = vmatprep.subr.bf16.mxu0 0
  %970 = vmatpush1.bf16.msra.mxu0 %v256
  %971 = vmatprep.subr.bf16.mxu0 0
  %972 = vmatpush1.bf16.msra.mxu0 %v257
  %973 = vmatprep.subr.bf16.mxu0 0
  %974 = vmatpush1.bf16.msra.mxu0 %v258
  %975 = vmatprep.subr.bf16.mxu0 0
  %976 = vmatpush1.bf16.msra.mxu0 %v259
  %977 = vmatprep.subr.bf16.mxu0 0
  %978 = vmatpush1.bf16.msra.mxu0 %v260
  %979 = vmatprep.subr.bf16.mxu0 0
  %980 = vmatpush1.bf16.msra.mxu0 %v261
  %981 = vmatprep.subr.bf16.mxu0 0
  %982 = vmatpush1.bf16.msra.mxu0 %v262
  %983 = vmatprep.subr.bf16.mxu0 0
  %984 = vmatpush1.bf16.msra.mxu0 %v263
  %985 = vmatprep.subr.bf16.mxu0 0
  %986 = vmatpush1.bf16.msra.mxu0 %v264
  %987 = vmatprep.mubr.bf16.mxu0 %v900
  %988 = vmatmul.mubr.bf16.gmra.mrb[0].mxu0 %v899
  %v989 = vpop.f32.mrb[0].mxu0
  %v990 = vadd.f32 0.0, %v989
  %v991 = vpop.f32.mrb[0].mxu0
  %v992 = vpop.f32.mrb[0].mxu0
  %v993 = vadd.f32 0.0, %v992
  %v994 = vpop.f32.mrb[0].mxu0
  %995 = vmatprep.mubr.bf16.mxu0 %v903
  %996 = vmatmul.mubr.bf16.gmra.mrb[0].mxu0 %v902
  %v997 = vpop.f32.mrb[0].mxu0
  %v998 = vadd.f32 0.0, %v997
  %v999 = vpop.f32.mrb[0].mxu0
  %v1000 = vpop.f32.mrb[0].mxu0
  %v1001 = vadd.f32 0.0, %v1000
  %v1002 = vpop.f32.mrb[0].mxu0
  %1003 = vmatprep.mubr.bf16.mxu0 %v906
  %1004 = vmatmul.mubr.bf16.gmra.mrb[0].mxu0 %v905
  %v1005 = vpop.f32.mrb[0].mxu0
  %v1006 = vadd.f32 0.0, %v1005
  %v1007 = vpop.f32.mrb[0].mxu0
  %v1008 = vpop.f32.mrb[0].mxu0
  %v1009 = vadd.f32 0.0, %v1008
  %v1010 = vpop.f32.mrb[0].mxu0
  %1011 = vmatprep.mubr.bf16.mxu0 %v909
  %1012 = vmatmul.mubr.bf16.gmra.mrb[0].mxu0 %v908
  %v1013 = vpop.f32.mrb[0].mxu0
  %v1014 = vadd.f32 0.0, %v1013
  %v1015 = vpop.f32.mrb[0].mxu0
  %v1016 = vpop.f32.mrb[0].mxu0
  %v1017 = vadd.f32 0.0, %v1016
  %v1018 = vpop.f32.mrb[0].mxu0
  %1019 = vmatprep.mubr.bf16.mxu0 %v912
  %1020 = vmatmul.mubr.bf16.gmra.mrb[0].mxu0 %v911
  %v1021 = vpop.f32.mrb[0].mxu0
  %v1022 = vadd.f32 0.0, %v1021
  %v1023 = vpop.f32.mrb[0].mxu0
  %v1024 = vpop.f32.mrb[0].mxu0
  %v1025 = vadd.f32 0.0, %v1024
  %v1026 = vpop.f32.mrb[0].mxu0
  %1027 = vmatprep.mubr.bf16.mxu0 %v915
  %1028 = vmatmul.mubr.bf16.gmra.mrb[0].mxu0 %v914
  %v1029 = vpop.f32.mrb[0].mxu0
  %v1030 = vadd.f32 0.0, %v1029
  %v1031 = vpop.f32.mrb[0].mxu0
  %v1032 = vpop.f32.mrb[0].mxu0
  %v1033 = vadd.f32 0.0, %v1032
  %v1034 = vpop.f32.mrb[0].mxu0
  %1035 = vmatprep.mubr.bf16.mxu0 %v918
  %1036 = vmatmul.mubr.bf16.gmra.mrb[0].mxu0 %v917
  %v1037 = vpop.f32.mrb[0].mxu0
  %v1038 = vadd.f32 0.0, %v1037
  %v1039 = vpop.f32.mrb[0].mxu0
  %v1040 = vpop.f32.mrb[0].mxu0
  %v1041 = vpop.f32.mrb[0].mxu0
  %1042 = vdwg.mxu0
  %1043 = vmatprep.subr.bf16.mxu0 0
  %1044 = vmatpush1.bf16.msra.mxu0 %v265
  %1045 = vmatprep.subr.bf16.mxu0 0
  %1046 = vmatpush1.bf16.msra.mxu0 %v266
  %1047 = vmatprep.subr.bf16.mxu0 0
  %1048 = vmatpush1.bf16.msra.mxu0 0
  %1049 = vmatprep.subr.bf16.mxu0 0
  %1050 = vmatpush1.bf16.msra.mxu0 0
  %1051 = vmatprep.subr.bf16.mxu0 0
  %1052 = vmatpush1.bf16.msra.mxu0 0
  %1053 = vmatprep.subr.bf16.mxu0 0
  %1054 = vmatpush1.bf16.msra.mxu0 0
  %1055 = vmatprep.subr.bf16.mxu0 0
  %1056 = vmatpush1.bf16.msra.mxu0 0
  %1057 = vmatprep.subr.bf16.mxu0 0
  %1058 = vmatpush1.bf16.msra.mxu0 0
  %1059 = vmatprep.subr.bf16.mxu0 0
  %1060 = vmatpush1.bf16.msra.mxu0 0
  %1061 = vmatprep.subr.bf16.mxu0 0
  %1062 = vmatpush1.bf16.msra.mxu0 0
  %1063 = vmatprep.subr.bf16.mxu0 0
  %1064 = vmatpush1.bf16.msra.mxu0 0
  %1065 = vmatprep.subr.bf16.mxu0 0
  %1066 = vmatpush1.bf16.msra.mxu0 0
  %1067 = vmatprep.subr.bf16.mxu0 0
  %1068 = vmatpush1.bf16.msra.mxu0 0
  %1069 = vmatprep.subr.bf16.mxu0 0
  %1070 = vmatpush1.bf16.msra.mxu0 0
  %1071 = vmatprep.subr.bf16.mxu0 0
  %1072 = vmatpush1.bf16.msra.mxu0 0
  %1073 = vmatprep.subr.bf16.mxu0 0
  %1074 = vmatpush1.bf16.msra.mxu0 0
  %1075 = vmatprep.mubr.bf16.mxu0 0
  %1076 = vmatmul.mubr.bf16.gmra.mrb[0].mxu0 %v935
  %v1077 = vpop.f32.mrb[0].mxu0
  %v1078 = vadd.f32 %v990, %v1077
  %v1079 = vpop.f32.mrb[0].mxu0
  %v1080 = vpop.f32.mrb[0].mxu0
  %v1081 = vadd.f32 %v993, %v1080
  %v1082 = vpop.f32.mrb[0].mxu0
  %1083 = vmatprep.mubr.bf16.mxu0 0
  %1084 = vmatmul.mubr.bf16.gmra.mrb[0].mxu0 %v938
  %v1085 = vpop.f32.mrb[0].mxu0
  %v1086 = vadd.f32 %v998, %v1085
  %v1087 = vpop.f32.mrb[0].mxu0
  %v1088 = vpop.f32.mrb[0].mxu0
  %v1089 = vadd.f32 %v1001, %v1088
  %v1090 = vpop.f32.mrb[0].mxu0
  %1091 = vmatprep.mubr.bf16.mxu0 0
  %1092 = vmatmul.mubr.bf16.gmra.mrb[0].mxu0 %v941
  %v1093 = vpop.f32.mrb[0].mxu0
  %v1094 = vadd.f32 %v1006, %v1093
  %v1095 = vpop.f32.mrb[0].mxu0
  %v1096 = vpop.f32.mrb[0].mxu0
  %v1097 = vadd.f32 %v1009, %v1096
  %v1098 = vpop.f32.mrb[0].mxu0
  %1099 = vmatprep.mubr.bf16.mxu0 0
  %1100 = vmatmul.mubr.bf16.gmra.mrb[0].mxu0 %v944
  %v1101 = vpop.f32.mrb[0].mxu0
  %v1102 = vadd.f32 %v1014, %v1101
  %v1103 = vpop.f32.mrb[0].mxu0
  %v1104 = vpop.f32.mrb[0].mxu0
  %v1105 = vadd.f32 %v1017, %v1104
  %v1106 = vpop.f32.mrb[0].mxu0
  %1107 = vmatprep.mubr.bf16.mxu0 0
  %1108 = vmatmul.mubr.bf16.gmra.mrb[0].mxu0 %v947
  %v1109 = vpop.f32.mrb[0].mxu0
  %v1110 = vadd.f32 %v1022, %v1109
  %v1111 = vpop.f32.mrb[0].mxu0
  %v1112 = vpop.f32.mrb[0].mxu0
  %v1113 = vadd.f32 %v1025, %v1112
  %v1114 = vpop.f32.mrb[0].mxu0
  %1115 = vmatprep.mubr.bf16.mxu0 0
  %1116 = vmatmul.mubr.bf16.gmra.mrb[0].mxu0 %v950
  %v1117 = vpop.f32.mrb[0].mxu0
  %v1118 = vadd.f32 %v1030, %v1117
  %v1119 = vpop.f32.mrb[0].mxu0
  %v1120 = vpop.f32.mrb[0].mxu0
  %v1121 = vadd.f32 %v1033, %v1120
  %v1122 = vpop.f32.mrb[0].mxu0
  %1123 = vmatprep.mubr.bf16.mxu0 0
  %1124 = vmatmul.mubr.bf16.gmra.mrb[0].mxu0 %v953
  %v1125 = vpop.f32.mrb[0].mxu0
  %v1126 = vadd.f32 %v1038, %v1125
  %v1127 = vpop.f32.mrb[0].mxu0
  %v1128 = vpop.f32.mrb[0].mxu0
  %v1129 = vpop.f32.mrb[0].mxu0
  %1130 = vdwg.mxu0
  %s1131 = scalar_lea.vmem %s0, 468
  %v1132 = vld [vmem:[%s1131] sm:$0xff]
  %v1133 = vld [vmem:[%s1131 + $0x8] sm:$0xf]
  %v1134 = vld [vmem:[%s1131 + $0xc] sm:$0xff]
  %v1135 = vld [vmem:[%s1131 + $0x14] sm:$0xf]
  %v1136 = vld [vmem:[%s1131 + $0x18] sm:$0xff]
  %v1137 = vld [vmem:[%s1131 + $0x20] sm:$0xf]
  %v1138 = vld [vmem:[%s1131 + $0x24] sm:$0xff]
  %v1139 = vld [vmem:[%s1131 + $0x2c] sm:$0xf]
  %v1140 = vld [vmem:[%s1131 + $0x30] sm:$0xff]
  %v1141 = vld [vmem:[%s1131 + $0x38] sm:$0xf]
  %v1142 = vld [vmem:[%s1131 + $0x3c] sm:$0xff]
  %v1143 = vld [vmem:[%s1131 + $0x44] sm:$0xf]
  %v1144 = vld [vmem:[%s1131 + $0x48] sm:$0xff]
  %v1145 = vld [vmem:[%s1131 + $0x50] sm:$0xf]
  %v1146 = vld [vmem:[%s1131 + $0x54] sm:$0xff]
  %v1147 = vld [vmem:[%s1131 + $0x5c] sm:$0xf]
  %v1148 = vld [vmem:[%s1131 + $0x60] sm:$0xff]
  %v1149 = vld [vmem:[%s1131 + $0x68] sm:$0xf]
  %v1150 = vld [vmem:[%s1131 + $0x6c] sm:$0xff]
  %v1151 = vld [vmem:[%s1131 + $0x74] sm:$0xf]
  %v1152 = vld [vmem:[%s1131 + $0x78] sm:$0xff]
  %v1153 = vld [vmem:[%s1131 + $0x80] sm:$0xf]
  %v1154 = vld [vmem:[%s1131 + $0x84] sm:$0xff]
  %v1155 = vld [vmem:[%s1131 + $0x8c] sm:$0xf]
  %v1156 = vld [vmem:[%s1131 + $0x90] sm:$0x11]
  %v1157 = vld [vmem:[%s1131 + $0x98] sm:$0x1]
  %v1184 = vunpack.c.l.b16 %v1132
  %v1185 = vunpack.c.h.b16 %v1132
  %v1186 = vunpack.c.l.b16 %v1133
  %v1187 = vunpack.c.l.b16 %v1134
  %v1188 = vunpack.c.h.b16 %v1134
  %v1189 = vunpack.c.l.b16 %v1135
  %v1190 = vunpack.c.l.b16 %v1136
  %v1191 = vunpack.c.h.b16 %v1136
  %v1192 = vunpack.c.l.b16 %v1137
  %v1193 = vunpack.c.l.b16 %v1138
  %v1194 = vunpack.c.h.b16 %v1138
  %v1195 = vunpack.c.l.b16 %v1139
  %v1196 = vunpack.c.l.b16 %v1140
  %v1197 = vunpack.c.h.b16 %v1140
  %v1198 = vunpack.c.l.b16 %v1141
  %v1199 = vunpack.c.l.b16 %v1142
  %v1200 = vunpack.c.h.b16 %v1142
  %v1201 = vunpack.c.l.b16 %v1143
  %v1202 = vunpack.c.l.b16 %v1144
  %v1203 = vunpack.c.h.b16 %v1144
  %v1204 = vunpack.c.l.b16 %v1145
  %v1205 = vunpack.c.l.b16 %v1146
  %v1206 = vunpack.c.h.b16 %v1146
  %v1207 = vunpack.c.l.b16 %v1147
  %v1208 = vunpack.c.l.b16 %v1148
  %v1209 = vunpack.c.h.b16 %v1148
  %v1210 = vunpack.c.l.b16 %v1149
  %v1211 = vunpack.c.l.b16 %v1150
  %v1212 = vunpack.c.h.b16 %v1150
  %v1213 = vunpack.c.l.b16 %v1151
  %v1214 = vunpack.c.l.b16 %v1152
  %v1215 = vunpack.c.h.b16 %v1152
  %v1216 = vunpack.c.l.b16 %v1153
  %v1217 = vunpack.c.l.b16 %v1154
  %v1218 = vunpack.c.h.b16 %v1154
  %v1219 = vunpack.c.l.b16 %v1155
  %v1220 = vunpack.c.l.b16 %v1156
  %v1221 = vunpack.c.h.b16 %v1156
  %v1222 = vunpack.c.l.b16 %v1157
  %v1223 = vpack.c.b16 %v1187, %v1184
  %v1224 = vpack.c.b16 %v1188, %v1185
  %v1225 = vpack.c.b16 %v1189, %v1186
  %v1226 = vpack.c.b16 %v1193, %v1190
  %v1227 = vpack.c.b16 %v1194, %v1191
  %v1228 = vpack.c.b16 %v1195, %v1192
  %v1229 = vpack.c.b16 %v1199, %v1196
  %v1230 = vpack.c.b16 %v1200, %v1197
  %v1231 = vpack.c.b16 %v1201, %v1198
  %v1232 = vpack.c.b16 %v1205, %v1202
  %v1233 = vpack.c.b16 %v1206, %v1203
  %v1234 = vpack.c.b16 %v1207, %v1204
  %v1235 = vpack.c.b16 %v1211, %v1208
  %v1236 = vpack.c.b16 %v1212, %v1209
  %v1237 = vpack.c.b16 %v1213, %v1210
  %v1238 = vpack.c.b16 %v1217, %v1214
  %v1239 = vpack.c.b16 %v1218, %v1215
  %v1240 = vpack.c.b16 %v1219, %v1216
  %v1241 = vpack.c.b16 %v1220, %v1220
  %v1242 = vpack.c.b16 %v1221, %v1221
  %v1243 = vpack.c.b16 %v1222, %v1222
  %v1259 = vsel %vm285, %v1225, 0
  %v1262 = vsel %vm285, %v1228, 0
  %v1265 = vsel %vm285, %v1231, 0
  %v1268 = vsel %vm285, %v1234, 0
  %v1271 = vsel %vm285, %v1237, 0
  %v1274 = vsel %vm285, %v1240, 0
  %v1277 = vsel %vm285, %v1243, 0
  %1279 = vmatprep.subr.bf16.mxu0 0
  %1280 = vmatpush1.bf16.msra.mxu0 %v249
  %1281 = vmatprep.subr.bf16.mxu0 0
  %1282 = vmatpush1.bf16.msra.mxu0 %v250
  %1283 = vmatprep.subr.bf16.mxu0 0
  %1284 = vmatpush1.bf16.msra.mxu0 %v251
  %1285 = vmatprep.subr.bf16.mxu0 0
  %1286 = vmatpush1.bf16.msra.mxu0 %v252
  %1287 = vmatprep.subr.bf16.mxu0 0
  %1288 = vmatpush1.bf16.msra.mxu0 %v253
  %1289 = vmatprep.subr.bf16.mxu0 0
  %1290 = vmatpush1.bf16.msra.mxu0 %v254
  %1291 = vmatprep.subr.bf16.mxu0 0
  %1292 = vmatpush1.bf16.msra.mxu0 %v255
  %1293 = vmatprep.subr.bf16.mxu0 0
  %1294 = vmatpush1.bf16.msra.mxu0 %v256
  %1295 = vmatprep.subr.bf16.mxu0 0
  %1296 = vmatpush1.bf16.msra.mxu0 %v257
  %1297 = vmatprep.subr.bf16.mxu0 0
  %1298 = vmatpush1.bf16.msra.mxu0 %v258
  %1299 = vmatprep.subr.bf16.mxu0 0
  %1300 = vmatpush1.bf16.msra.mxu0 %v259
  %1301 = vmatprep.subr.bf16.mxu0 0
  %1302 = vmatpush1.bf16.msra.mxu0 %v260
  %1303 = vmatprep.subr.bf16.mxu0 0
  %1304 = vmatpush1.bf16.msra.mxu0 %v261
  %1305 = vmatprep.subr.bf16.mxu0 0
  %1306 = vmatpush1.bf16.msra.mxu0 %v262
  %1307 = vmatprep.subr.bf16.mxu0 0
  %1308 = vmatpush1.bf16.msra.mxu0 %v263
  %1309 = vmatprep.subr.bf16.mxu0 0
  %1310 = vmatpush1.bf16.msra.mxu0 %v264
  %1311 = vmatprep.mubr.bf16.mxu0 %v1224
  %1312 = vmatmul.mubr.bf16.gmra.mrb[0].mxu0 %v1223
  %v1313 = vpop.f32.mrb[0].mxu0
  %v1314 = vadd.f32 0.0, %v1313
  %v1315 = vpop.f32.mrb[0].mxu0
  %v1316 = vpop.f32.mrb[0].mxu0
  %v1317 = vadd.f32 0.0, %v1316
  %v1318 = vpop.f32.mrb[0].mxu0
  %1319 = vmatprep.mubr.bf16.mxu0 %v1227
  %1320 = vmatmul.mubr.bf16.gmra.mrb[0].mxu0 %v1226
  %v1321 = vpop.f32.mrb[0].mxu0
  %v1322 = vadd.f32 0.0, %v1321
  %v1323 = vpop.f32.mrb[0].mxu0
  %v1324 = vpop.f32.mrb[0].mxu0
  %v1325 = vadd.f32 0.0, %v1324
  %v1326 = vpop.f32.mrb[0].mxu0
  %1327 = vmatprep.mubr.bf16.mxu0 %v1230
  %1328 = vmatmul.mubr.bf16.gmra.mrb[0].mxu0 %v1229
  %v1329 = vpop.f32.mrb[0].mxu0
  %v1330 = vadd.f32 0.0, %v1329
  %v1331 = vpop.f32.mrb[0].mxu0
  %v1332 = vpop.f32.mrb[0].mxu0
  %v1333 = vadd.f32 0.0, %v1332
  %v1334 = vpop.f32.mrb[0].mxu0
  %1335 = vmatprep.mubr.bf16.mxu0 %v1233
  %1336 = vmatmul.mubr.bf16.gmra.mrb[0].mxu0 %v1232
  %v1337 = vpop.f32.mrb[0].mxu0
  %v1338 = vadd.f32 0.0, %v1337
  %v1339 = vpop.f32.mrb[0].mxu0
  %v1340 = vpop.f32.mrb[0].mxu0
  %v1341 = vadd.f32 0.0, %v1340
  %v1342 = vpop.f32.mrb[0].mxu0
  %1343 = vmatprep.mubr.bf16.mxu0 %v1236
  %1344 = vmatmul.mubr.bf16.gmra.mrb[0].mxu0 %v1235
  %v1345 = vpop.f32.mrb[0].mxu0
  %v1346 = vadd.f32 0.0, %v1345
  %v1347 = vpop.f32.mrb[0].mxu0
  %v1348 = vpop.f32.mrb[0].mxu0
  %v1349 = vadd.f32 0.0, %v1348
  %v1350 = vpop.f32.mrb[0].mxu0
  %1351 = vmatprep.mubr.bf16.mxu0 %v1239
  %1352 = vmatmul.mubr.bf16.gmra.mrb[0].mxu0 %v1238
  %v1353 = vpop.f32.mrb[0].mxu0
  %v1354 = vadd.f32 0.0, %v1353
  %v1355 = vpop.f32.mrb[0].mxu0
  %v1356 = vpop.f32.mrb[0].mxu0
  %v1357 = vadd.f32 0.0, %v1356
  %v1358 = vpop.f32.mrb[0].mxu0
  %1359 = vmatprep.mubr.bf16.mxu0 %v1242
  %1360 = vmatmul.mubr.bf16.gmra.mrb[0].mxu0 %v1241
  %v1361 = vpop.f32.mrb[0].mxu0
  %v1362 = vadd.f32 0.0, %v1361
  %v1363 = vpop.f32.mrb[0].mxu0
  %v1364 = vpop.f32.mrb[0].mxu0
  %v1365 = vpop.f32.mrb[0].mxu0
  %1366 = vdwg.mxu0
  %1367 = vmatprep.subr.bf16.mxu0 0
  %1368 = vmatpush1.bf16.msra.mxu0 %v265
  %1369 = vmatprep.subr.bf16.mxu0 0
  %1370 = vmatpush1.bf16.msra.mxu0 %v266
  %1371 = vmatprep.subr.bf16.mxu0 0
  %1372 = vmatpush1.bf16.msra.mxu0 0
  %1373 = vmatprep.subr.bf16.mxu0 0
  %1374 = vmatpush1.bf16.msra.mxu0 0
  %1375 = vmatprep.subr.bf16.mxu0 0
  %1376 = vmatpush1.bf16.msra.mxu0 0
  %1377 = vmatprep.subr.bf16.mxu0 0
  %1378 = vmatpush1.bf16.msra.mxu0 0
  %1379 = vmatprep.subr.bf16.mxu0 0
  %1380 = vmatpush1.bf16.msra.mxu0 0
  %1381 = vmatprep.subr.bf16.mxu0 0
  %1382 = vmatpush1.bf16.msra.mxu0 0
  %1383 = vmatprep.subr.bf16.mxu0 0
  %1384 = vmatpush1.bf16.msra.mxu0 0
  %1385 = vmatprep.subr.bf16.mxu0 0
  %1386 = vmatpush1.bf16.msra.mxu0 0
  %1387 = vmatprep.subr.bf16.mxu0 0
  %1388 = vmatpush1.bf16.msra.mxu0 0
  %1389 = vmatprep.subr.bf16.mxu0 0
  %1390 = vmatpush1.bf16.msra.mxu0 0
  %1391 = vmatprep.subr.bf16.mxu0 0
  %1392 = vmatpush1.bf16.msra.mxu0 0
  %1393 = vmatprep.subr.bf16.mxu0 0
  %1394 = vmatpush1.bf16.msra.mxu0 0
  %1395 = vmatprep.subr.bf16.mxu0 0
  %1396 = vmatpush1.bf16.msra.mxu0 0
  %1397 = vmatprep.subr.bf16.mxu0 0
  %1398 = vmatpush1.bf16.msra.mxu0 0
  %1399 = vmatprep.mubr.bf16.mxu0 0
  %1400 = vmatmul.mubr.bf16.gmra.mrb[0].mxu0 %v1259
  %v1401 = vpop.f32.mrb[0].mxu0
  %v1402 = vadd.f32 %v1314, %v1401
  %v1403 = vpop.f32.mrb[0].mxu0
  %v1404 = vpop.f32.mrb[0].mxu0
  %v1405 = vadd.f32 %v1317, %v1404
  %v1406 = vpop.f32.mrb[0].mxu0
  %1407 = vmatprep.mubr.bf16.mxu0 0
  %1408 = vmatmul.mubr.bf16.gmra.mrb[0].mxu0 %v1262
  %v1409 = vpop.f32.mrb[0].mxu0
  %v1410 = vadd.f32 %v1322, %v1409
  %v1411 = vpop.f32.mrb[0].mxu0
  %v1412 = vpop.f32.mrb[0].mxu0
  %v1413 = vadd.f32 %v1325, %v1412
  %v1414 = vpop.f32.mrb[0].mxu0
  %1415 = vmatprep.mubr.bf16.mxu0 0
  %1416 = vmatmul.mubr.bf16.gmra.mrb[0].mxu0 %v1265
  %v1417 = vpop.f32.mrb[0].mxu0
  %v1418 = vadd.f32 %v1330, %v1417
  %v1419 = vpop.f32.mrb[0].mxu0
  %v1420 = vpop.f32.mrb[0].mxu0
  %v1421 = vadd.f32 %v1333, %v1420
  %v1422 = vpop.f32.mrb[0].mxu0
  %1423 = vmatprep.mubr.bf16.mxu0 0
  %1424 = vmatmul.mubr.bf16.gmra.mrb[0].mxu0 %v1268
  %v1425 = vpop.f32.mrb[0].mxu0
  %v1426 = vadd.f32 %v1338, %v1425
  %v1427 = vpop.f32.mrb[0].mxu0
  %v1428 = vpop.f32.mrb[0].mxu0
  %v1429 = vadd.f32 %v1341, %v1428
  %v1430 = vpop.f32.mrb[0].mxu0
  %1431 = vmatprep.mubr.bf16.mxu0 0
  %1432 = vmatmul.mubr.bf16.gmra.mrb[0].mxu0 %v1271
  %v1433 = vpop.f32.mrb[0].mxu0
  %v1434 = vadd.f32 %v1346, %v1433
  %v1435 = vpop.f32.mrb[0].mxu0
  %v1436 = vpop.f32.mrb[0].mxu0
  %v1437 = vadd.f32 %v1349, %v1436
  %v1438 = vpop.f32.mrb[0].mxu0
  %1439 = vmatprep.mubr.bf16.mxu0 0
  %1440 = vmatmul.mubr.bf16.gmra.mrb[0].mxu0 %v1274
  %v1441 = vpop.f32.mrb[0].mxu0
  %v1442 = vadd.f32 %v1354, %v1441
  %v1443 = vpop.f32.mrb[0].mxu0
  %v1444 = vpop.f32.mrb[0].mxu0
  %v1445 = vadd.f32 %v1357, %v1444
  %v1446 = vpop.f32.mrb[0].mxu0
  %1447 = vmatprep.mubr.bf16.mxu0 0
  %1448 = vmatmul.mubr.bf16.gmra.mrb[0].mxu0 %v1277
  %v1449 = vpop.f32.mrb[0].mxu0
  %v1450 = vadd.f32 %v1362, %v1449
  %v1451 = vpop.f32.mrb[0].mxu0
  %v1452 = vpop.f32.mrb[0].mxu0
  %v1453 = vpop.f32.mrb[0].mxu0
  %1454 = vdwg.mxu0
  %v1455 = vmax.f32 %v430, %v754
  %v1456 = vmax.f32 %v433, %v757
  %v1457 = vmax.f32 %v438, %v762
  %v1458 = vmax.f32 %v441, %v765
  %v1459 = vmax.f32 %v446, %v770
  %v1460 = vmax.f32 %v449, %v773
  %v1461 = vmax.f32 %v454, %v778
  %v1462 = vmax.f32 %v457, %v781
  %v1463 = vmax.f32 %v462, %v786
  %v1464 = vmax.f32 %v465, %v789
  %v1465 = vmax.f32 %v470, %v794
  %v1466 = vmax.f32 %v473, %v797
  %v1467 = vmax.f32 %v478, %v802
  %v1468 = vmax.f32 %v1078, %v1402
  %v1469 = vmax.f32 %v1081, %v1405
  %v1470 = vmax.f32 %v1086, %v1410
  %v1471 = vmax.f32 %v1089, %v1413
  %v1472 = vmax.f32 %v1094, %v1418
  %v1473 = vmax.f32 %v1097, %v1421
  %v1474 = vmax.f32 %v1102, %v1426
  %v1475 = vmax.f32 %v1105, %v1429
  %v1476 = vmax.f32 %v1110, %v1434
  %v1477 = vmax.f32 %v1113, %v1437
  %v1478 = vmax.f32 %v1118, %v1442
  %v1479 = vmax.f32 %v1121, %v1445
  %v1480 = vmax.f32 %v1126, %v1450
  %v1481 = vmax.f32 %v1455, %v1468
  %v1482 = vmax.f32 %v1456, %v1469
  %v1483 = vmax.f32 %v1457, %v1470
  %v1484 = vmax.f32 %v1458, %v1471
  %v1485 = vmax.f32 %v1459, %v1472
  %v1486 = vmax.f32 %v1460, %v1473
  %v1487 = vmax.f32 %v1461, %v1474
  %v1488 = vmax.f32 %v1462, %v1475
  %v1489 = vmax.f32 %v1463, %v1476
  %v1490 = vmax.f32 %v1464, %v1477
  %v1491 = vmax.f32 %v1465, %v1478
  %v1492 = vmax.f32 %v1466, %v1479
  %v1493 = vmax.f32 %v1467, %v1480
  %v1494 = vld [vmem:[%s2] sm:$0x1]
  %v1496 = vlaneseq
  %v1497 = vshrl.u32 %v1496, 7
  %v1498 = vsub.s32 0, %v1497
  %v1499 = vrot.slane %v1494, %v1498
  %v1501 = vadd.f32 %v1481, %v1499
  %v1502 = vadd.f32 %v1482, %v1499
  %v1503 = vadd.f32 %v1483, %v1499
  %v1504 = vadd.f32 %v1484, %v1499
  %v1505 = vadd.f32 %v1485, %v1499
  %v1506 = vadd.f32 %v1486, %v1499
  %v1507 = vadd.f32 %v1487, %v1499
  %v1508 = vadd.f32 %v1488, %v1499
  %v1509 = vadd.f32 %v1489, %v1499
  %v1510 = vadd.f32 %v1490, %v1499
  %v1511 = vadd.f32 %v1491, %v1499
  %v1512 = vadd.f32 %v1492, %v1499
  %v1513 = vadd.f32 %v1493, %v1499
  %v1514 = vmax.f32 %v1501, 0.0
  %v1515 = vmax.f32 %v1502, 0.0
  %v1516 = vmax.f32 %v1503, 0.0
  %v1517 = vmax.f32 %v1504, 0.0
  %v1518 = vmax.f32 %v1505, 0.0
  %v1519 = vmax.f32 %v1506, 0.0
  %v1520 = vmax.f32 %v1507, 0.0
  %v1521 = vmax.f32 %v1508, 0.0
  %v1522 = vmax.f32 %v1509, 0.0
  %v1523 = vmax.f32 %v1510, 0.0
  %v1524 = vmax.f32 %v1511, 0.0
  %v1525 = vmax.f32 %v1512, 0.0
  %v1526 = vmax.f32 %v1513, 0.0
  %vm1527 = vcmask 523264
  %1528 = vst.msk [vmem:[%s3] sm:$0xff] %vm1527, %v1514
  %1529 = vst.msk [vmem:[%s3 + $0x8] sm:$0xff] %vm1527, %v1515
  %1530 = vst.msk [vmem:[%s3 + $0x10] sm:$0xff] %vm1527, %v1516
  %1531 = vst.msk [vmem:[%s3 + $0x18] sm:$0xff] %vm1527, %v1517
  %1532 = vst.msk [vmem:[%s3 + $0x20] sm:$0xff] %vm1527, %v1518
  %1533 = vst.msk [vmem:[%s3 + $0x28] sm:$0xff] %vm1527, %v1519
  %1534 = vst.msk [vmem:[%s3 + $0x30] sm:$0xff] %vm1527, %v1520
  %1535 = vst.msk [vmem:[%s3 + $0x38] sm:$0xff] %vm1527, %v1521
  %1536 = vst.msk [vmem:[%s3 + $0x40] sm:$0xff] %vm1527, %v1522
  %1537 = vst.msk [vmem:[%s3 + $0x48] sm:$0xff] %vm1527, %v1523
  %1538 = vst.msk [vmem:[%s3 + $0x50] sm:$0xff] %vm1527, %v1524
  %1539 = vst.msk [vmem:[%s3 + $0x58] sm:$0xff] %vm1527, %v1525
  %vm1540 = vcmask 517120
  %1541 = vst.msk [vmem:[%s3 + $0x60] sm:$0x3] %vm1540, %v1526
  // Predicated region
  $region14: #{mnist_cnn_forward.4} parent=0 // pred_check
    _
  $region15: #{mnist_cnn_forward.4} parent=0 // pred_check_branch
    %1543 = sbr.rel (0) target = $region17
  $region16: #{mnist_cnn_forward.4} parent=0 // pred_region
    _
  $region17: #{mnist_cnn_forward.4} parent=0 // pred_fallthru
    _
  // Predicated region
  $region18: #{mnist_cnn_forward.4} parent=0 // pred_check
    _
  $region19: #{mnist_cnn_forward.4} parent=0 // pred_check_branch
    %1545 = sbr.rel (0) target = $region21
  $region20: #{mnist_cnn_forward.4} parent=0 // pred_region
    _
  $region21: #{mnist_cnn_forward.4} parent=0 // pred_fallthru
    _

// kernel: mnist_cnn_forward.5
$region0: #{mnist_cnn_forward.5}
  #allocation0 [shape = 'u32[]', space=smem, size = 0x4, offset = 0x4, fixed_abs, tag = 'smem constant byte address 0x4 - core index']
  #allocation1 [shape = 'u32[144,128]{1,0:T(1,128)}', space=vmem, size = 0x12000, scoped, tag = 'internal scratch']
  %s0 = inlined_call_operand.vmem [shape: bf16[2,3136], index: 0, kind: input, shape index: {}]
  %s1 = inlined_call_operand.vmem [shape: bf16[3136,128], index: 1, kind: input, shape index: {}]
  %s2 = inlined_call_operand.vmem [shape: f32[1,128], index: 2, kind: input, shape index: {}]
  %s3 = inlined_call_operand.vmem [shape: bf16[128,10], index: 3, kind: input, shape index: {}]
  %s4 = inlined_call_operand.vmem [shape: f32[1,10], index: 4, kind: input, shape index: {}]
  %s5 = inlined_call_operand.hbm [shape: f32[2,10], index: 5, kind: output, shape index: {}]
  %s6 = sld [smem:[#allocation0]]
  $region30: #{mnist_cnn_forward.5} parent=0
    _
  %s8 = ssub.s32 1, %s6
  %s9 = scalar_select 0, %s8, %s6
  $region1: #{mnist_cnn_forward.5} parent=0
    #allocation2 [shape = 'u8[1024]{0}', space=vmem, size = 0x400, scoped, tag = 'output window, operand 0, single buffered']
    #allocation3 [shape = 's32[1]{0}', space=sflag, size = 0x4, scoped, tag = 'scoped memory for mnist_cnn_forward.5']
    %10 = vsyncpa [#allocation3], 0
    // Predicated region
    $region2: #{mnist_cnn_forward.5} parent=1 // pred_check
      _
    $region3: #{mnist_cnn_forward.5} parent=1 // pred_check_branch
      %12 = sbr.rel (0) target = $region5
    $region4: #{mnist_cnn_forward.5} parent=1 // pred_region
      _
    $region5: #{mnist_cnn_forward.5} parent=1 // pred_fallthru
      _
    // Predicated region
    $region6: #{mnist_cnn_forward.5} parent=1 // pred_check
      _
    $region7: #{mnist_cnn_forward.5} parent=1 // pred_check_branch
      %14 = sbr.rel (0) target = $region9
    $region8: #{mnist_cnn_forward.5} parent=1 // pred_region
      _
    $region9: #{mnist_cnn_forward.5} parent=1 // pred_fallthru
      _
    // Predicated region
    $region10: #{mnist_cnn_forward.5} parent=1 // pred_check
      _
    $region11: #{mnist_cnn_forward.5} parent=1 // pred_check_branch
      %16 = sbr.rel (0) target = $region13
    $region12: #{mnist_cnn_forward.5} parent=1 // pred_region
      _
    $region13: #{mnist_cnn_forward.5} parent=1 // pred_fallthru
      _
    // Predicated region
    $region14: #{mnist_cnn_forward.5} parent=1 // pred_check
      _
    $region15: #{mnist_cnn_forward.5} parent=1 // pred_check_branch
      %18 = sbr.rel (0) target = $region17
    $region16: #{mnist_cnn_forward.5} parent=1 // pred_region
      _
    $region17: #{mnist_cnn_forward.5} parent=1 // pred_fallthru
      _
    // Predicated region
    $region18: #{mnist_cnn_forward.5} parent=1 // pred_check
      _
    $region19: #{mnist_cnn_forward.5} parent=1 // pred_check_branch
      %20 = sbr.rel (0) target = $region21
    $region20: #{mnist_cnn_forward.5} parent=1 // pred_region
      _
    $region21: #{mnist_cnn_forward.5} parent=1 // pred_fallthru
      _
    %v22 = vld [vmem:[%s0] sm:$0xff]
    %v23 = vld [vmem:[%s0 + $0x8] sm:$0xff]
    %v24 = vld [vmem:[%s0 + $0x10] sm:$0xff]
    %v25 = vld [vmem:[%s0 + $0x18] sm:$0x1]
    %v26 = vld [vmem:[%s1] sm:$0xf]
    %v27 = vld [vmem:[%s1 + $0x4] sm:$0xf]
    %v28 = vld [vmem:[%s1 + $0x8] sm:$0xf]
    %v29 = vld [vmem:[%s1 + $0xc] sm:$0xf]
    %v30 = vld [vmem:[%s1 + $0x10] sm:$0xf]
    %v31 = vld [vmem:[%s1 + $0x14] sm:$0xf]
    %v32 = vld [vmem:[%s1 + $0x18] sm:$0xf]
    %v33 = vld [vmem:[%s1 + $0x1c] sm:$0xf]
    %v34 = vld [vmem:[%s1 + $0x20] sm:$0xf]
    %v35 = vld [vmem:[%s1 + $0x24] sm:$0xf]
    %v36 = vld [vmem:[%s1 + $0x28] sm:$0xf]
    %v37 = vld [vmem:[%s1 + $0x2c] sm:$0xf]
    %v38 = vld [vmem:[%s1 + $0x30] sm:$0xf]
    %v39 = vld [vmem:[%s1 + $0x34] sm:$0xf]
    %v40 = vld [vmem:[%s1 + $0x38] sm:$0xf]
    %v41 = vld [vmem:[%s1 + $0x3c] sm:$0xf]
    %v42 = vld [vmem:[%s1 + $0x40] sm:$0xf]
    %v43 = vld [vmem:[%s1 + $0x44] sm:$0xf]
    %v44 = vld [vmem:[%s1 + $0x48] sm:$0xf]
    %v45 = vld [vmem:[%s1 + $0x4c] sm:$0xf]
    %v46 = vld [vmem:[%s1 + $0x50] sm:$0xf]
    %v47 = vld [vmem:[%s1 + $0x54] sm:$0xf]
    %v48 = vld [vmem:[%s1 + $0x58] sm:$0xf]
    %v49 = vld [vmem:[%s1 + $0x5c] sm:$0xf]
    %v50 = vld [vmem:[%s1 + $0x60] sm:$0xf]
    %v51 = vld [vmem:[%s1 + $0x64] sm:$0xf]
    %v52 = vld [vmem:[%s1 + $0x68] sm:$0xf]
    %v53 = vld [vmem:[%s1 + $0x6c] sm:$0xf]
    %v54 = vld [vmem:[%s1 + $0x70] sm:$0xf]
    %v55 = vld [vmem:[%s1 + $0x74] sm:$0xf]
    %v56 = vld [vmem:[%s1 + $0x78] sm:$0xf]
    %v57 = vld [vmem:[%s1 + $0x7c] sm:$0xf]
    %v58 = vld [vmem:[%s1 + $0x80] sm:$0xf]
    %v59 = vld [vmem:[%s1 + $0x84] sm:$0xf]
    %v60 = vld [vmem:[%s1 + $0x88] sm:$0xf]
    %v61 = vld [vmem:[%s1 + $0x8c] sm:$0xf]
    %v62 = vld [vmem:[%s1 + $0x90] sm:$0xf]
    %v63 = vld [vmem:[%s1 + $0x94] sm:$0xf]
    %v64 = vld [vmem:[%s1 + $0x98] sm:$0xf]
    %v65 = vld [vmem:[%s1 + $0x9c] sm:$0xf]
    %v66 = vld [vmem:[%s1 + $0xa0] sm:$0xf]
    %v67 = vld [vmem:[%s1 + $0xa4] sm:$0xf]
    %v68 = vld [vmem:[%s1 + $0xa8] sm:$0xf]
    %v69 = vld [vmem:[%s1 + $0xac] sm:$0xf]
    %v70 = vld [vmem:[%s1 + $0xb0] sm:$0xf]
    %v71 = vld [vmem:[%s1 + $0xb4] sm:$0xf]
    %v72 = vld [vmem:[%s1 + $0xb8] sm:$0xf]
    %v73 = vld [vmem:[%s1 + $0xbc] sm:$0xf]
    %v74 = vld [vmem:[%s1 + $0xc0] sm:$0xf]
    %v75 = vld [vmem:[%s1 + $0xc4] sm:$0xf]
    %v76 = vld [vmem:[%s1 + $0xc8] sm:$0xf]
    %v77 = vld [vmem:[%s1 + $0xcc] sm:$0xf]
    %v78 = vld [vmem:[%s1 + $0xd0] sm:$0xf]
    %v79 = vld [vmem:[%s1 + $0xd4] sm:$0xf]
    %v80 = vld [vmem:[%s1 + $0xd8] sm:$0xf]
    %v81 = vld [vmem:[%s1 + $0xdc] sm:$0xf]
    %v82 = vld [vmem:[%s1 + $0xe0] sm:$0xf]
    %v83 = vld [vmem:[%s1 + $0xe4] sm:$0xf]
    %v84 = vld [vmem:[%s1 + $0xe8] sm:$0xf]
    %v85 = vld [vmem:[%s1 + $0xec] sm:$0xf]
    %v86 = vld [vmem:[%s1 + $0xf0] sm:$0xf]
    %v87 = vld [vmem:[%s1 + $0xf4] sm:$0xf]
    %v88 = vld [vmem:[%s1 + $0xf8] sm:$0xf]
    %v89 = vld [vmem:[%s1 + $0xfc] sm:$0xf]
    %v90 = vld [vmem:[%s1 + $0x100] sm:$0xf]
    %v91 = vld [vmem:[%s1 + $0x104] sm:$0xf]
    %v92 = vld [vmem:[%s1 + $0x108] sm:$0xf]
    %v93 = vld [vmem:[%s1 + $0x10c] sm:$0xf]
    %v94 = vld [vmem:[%s1 + $0x110] sm:$0xf]
    %v95 = vld [vmem:[%s1 + $0x114] sm:$0xf]
    %v96 = vld [vmem:[%s1 + $0x118] sm:$0xf]
    %v97 = vld [vmem:[%s1 + $0x11c] sm:$0xf]
    %v98 = vld [vmem:[%s1 + $0x120] sm:$0xf]
    %v99 = vld [vmem:[%s1 + $0x124] sm:$0xf]
    %v100 = vld [vmem:[%s1 + $0x128] sm:$0xf]
    %v101 = vld [vmem:[%s1 + $0x12c] sm:$0xf]
    %v102 = vld [vmem:[%s1 + $0x130] sm:$0xf]
    %v103 = vld [vmem:[%s1 + $0x134] sm:$0xf]
    %v104 = vld [vmem:[%s1 + $0x138] sm:$0xf]
    %v105 = vld [vmem:[%s1 + $0x13c] sm:$0xf]
    %v106 = vld [vmem:[%s1 + $0x140] sm:$0xf]
    %v107 = vld [vmem:[%s1 + $0x144] sm:$0xf]
    %v108 = vld [vmem:[%s1 + $0x148] sm:$0xf]
    %v109 = vld [vmem:[%s1 + $0x14c] sm:$0xf]
    %v110 = vld [vmem:[%s1 + $0x150] sm:$0xf]
    %v111 = vld [vmem:[%s1 + $0x154] sm:$0xf]
    %v112 = vld [vmem:[%s1 + $0x158] sm:$0xf]
    %v113 = vld [vmem:[%s1 + $0x15c] sm:$0xf]
    %v114 = vld [vmem:[%s1 + $0x160] sm:$0xf]
    %v115 = vld [vmem:[%s1 + $0x164] sm:$0xf]
    %v116 = vld [vmem:[%s1 + $0x168] sm:$0xf]
    %v117 = vld [vmem:[%s1 + $0x16c] sm:$0xf]
    %v118 = vld [vmem:[%s1 + $0x170] sm:$0xf]
    %v119 = vld [vmem:[%s1 + $0x174] sm:$0xf]
    %v120 = vld [vmem:[%s1 + $0x178] sm:$0xf]
    %v121 = vld [vmem:[%s1 + $0x17c] sm:$0xf]
    %v122 = vld [vmem:[%s1 + $0x180] sm:$0xf]
    %v123 = vld [vmem:[%s1 + $0x184] sm:$0xf]
    %v124 = vld [vmem:[%s1 + $0x188] sm:$0xf]
    %v125 = vld [vmem:[%s1 + $0x18c] sm:$0xf]
    %v126 = vld [vmem:[%s1 + $0x190] sm:$0xf]
    %v127 = vld [vmem:[%s1 + $0x194] sm:$0xf]
    %v128 = vld [vmem:[%s1 + $0x198] sm:$0xf]
    %v129 = vld [vmem:[%s1 + $0x19c] sm:$0xf]
    %v130 = vld [vmem:[%s1 + $0x1a0] sm:$0xf]
    %v131 = vld [vmem:[%s1 + $0x1a4] sm:$0xf]
    %v132 = vld [vmem:[%s1 + $0x1a8] sm:$0xf]
    %v133 = vld [vmem:[%s1 + $0x1ac] sm:$0xf]
    %v134 = vld [vmem:[%s1 + $0x1b0] sm:$0xf]
    %v135 = vld [vmem:[%s1 + $0x1b4] sm:$0xf]
    %v136 = vld [vmem:[%s1 + $0x1b8] sm:$0xf]
    %v137 = vld [vmem:[%s1 + $0x1bc] sm:$0xf]
    %v138 = vld [vmem:[%s1 + $0x1c0] sm:$0xf]
    %v139 = vld [vmem:[%s1 + $0x1c4] sm:$0xf]
    %v140 = vld [vmem:[%s1 + $0x1c8] sm:$0xf]
    %v141 = vld [vmem:[%s1 + $0x1cc] sm:$0xf]
    %v142 = vld [vmem:[%s1 + $0x1d0] sm:$0xf]
    %v143 = vld [vmem:[%s1 + $0x1d4] sm:$0xf]
    %v144 = vld [vmem:[%s1 + $0x1d8] sm:$0xf]
    %v145 = vld [vmem:[%s1 + $0x1dc] sm:$0xf]
    %v146 = vld [vmem:[%s1 + $0x1e0] sm:$0xf]
    %v147 = vld [vmem:[%s1 + $0x1e4] sm:$0xf]
    %v148 = vld [vmem:[%s1 + $0x1e8] sm:$0xf]
    %v149 = vld [vmem:[%s1 + $0x1ec] sm:$0xf]
    %v150 = vld [vmem:[%s1 + $0x1f0] sm:$0xf]
    %v151 = vld [vmem:[%s1 + $0x1f4] sm:$0xf]
    %v152 = vld [vmem:[%s1 + $0x1f8] sm:$0xf]
    %v153 = vld [vmem:[%s1 + $0x1fc] sm:$0xf]
    %v154 = vld [vmem:[%s1 + $0x200] sm:$0xf]
    %v155 = vld [vmem:[%s1 + $0x204] sm:$0xf]
    %v156 = vld [vmem:[%s1 + $0x208] sm:$0xf]
    %v157 = vld [vmem:[%s1 + $0x20c] sm:$0xf]
    %v158 = vld [vmem:[%s1 + $0x210] sm:$0xf]
    %v159 = vld [vmem:[%s1 + $0x214] sm:$0xf]
    %v160 = vld [vmem:[%s1 + $0x218] sm:$0xf]
    %v161 = vld [vmem:[%s1 + $0x21c] sm:$0xf]
    %v162 = vld [vmem:[%s1 + $0x220] sm:$0xf]
    %v163 = vld [vmem:[%s1 + $0x224] sm:$0xf]
    %v164 = vld [vmem:[%s1 + $0x228] sm:$0xf]
    %v165 = vld [vmem:[%s1 + $0x22c] sm:$0xf]
    %v166 = vld [vmem:[%s1 + $0x230] sm:$0xf]
    %v167 = vld [vmem:[%s1 + $0x234] sm:$0xf]
    %v168 = vld [vmem:[%s1 + $0x238] sm:$0xf]
    %v169 = vld [vmem:[%s1 + $0x23c] sm:$0xf]
    %v170 = vld [vmem:[%s1 + $0x240] sm:$0xf]
    %v171 = vld [vmem:[%s1 + $0x244] sm:$0xf]
    %v172 = vld [vmem:[%s1 + $0x248] sm:$0xf]
    %v173 = vld [vmem:[%s1 + $0x24c] sm:$0xf]
    %v174 = vld [vmem:[%s1 + $0x250] sm:$0xf]
    %v175 = vld [vmem:[%s1 + $0x254] sm:$0xf]
    %v176 = vld [vmem:[%s1 + $0x258] sm:$0xf]
    %v177 = vld [vmem:[%s1 + $0x25c] sm:$0xf]
    %v178 = vld [vmem:[%s1 + $0x260] sm:$0xf]
    %v179 = vld [vmem:[%s1 + $0x264] sm:$0xf]
    %v180 = vld [vmem:[%s1 + $0x268] sm:$0xf]
    %v181 = vld [vmem:[%s1 + $0x26c] sm:$0xf]
    %v182 = vld [vmem:[%s1 + $0x270] sm:$0xf]
    %v183 = vld [vmem:[%s1 + $0x274] sm:$0xf]
    %v184 = vld [vmem:[%s1 + $0x278] sm:$0xf]
    %v185 = vld [vmem:[%s1 + $0x27c] sm:$0xf]
    %v186 = vld [vmem:[%s1 + $0x280] sm:$0xf]
    %v187 = vld [vmem:[%s1 + $0x284] sm:$0xf]
    %v188 = vld [vmem:[%s1 + $0x288] sm:$0xf]
    %v189 = vld [vmem:[%s1 + $0x28c] sm:$0xf]
    %v190 = vld [vmem:[%s1 + $0x290] sm:$0xf]
    %v191 = vld [vmem:[%s1 + $0x294] sm:$0xf]
    %v192 = vld [vmem:[%s1 + $0x298] sm:$0xf]
    %v193 = vld [vmem:[%s1 + $0x29c] sm:$0xf]
    %v194 = vld [vmem:[%s1 + $0x2a0] sm:$0xf]
    %v195 = vld [vmem:[%s1 + $0x2a4] sm:$0xf]
    %v196 = vld [vmem:[%s1 + $0x2a8] sm:$0xf]
    %v197 = vld [vmem:[%s1 + $0x2ac] sm:$0xf]
    %v198 = vld [vmem:[%s1 + $0x2b0] sm:$0xf]
    %v199 = vld [vmem:[%s1 + $0x2b4] sm:$0xf]
    %v200 = vld [vmem:[%s1 + $0x2b8] sm:$0xf]
    %v201 = vld [vmem:[%s1 + $0x2bc] sm:$0xf]
    %v202 = vld [vmem:[%s1 + $0x2c0] sm:$0xf]
    %v203 = vld [vmem:[%s1 + $0x2c4] sm:$0xf]
    %v204 = vld [vmem:[%s1 + $0x2c8] sm:$0xf]
    %v205 = vld [vmem:[%s1 + $0x2cc] sm:$0xf]
    %v206 = vld [vmem:[%s1 + $0x2d0] sm:$0xf]
    %v207 = vld [vmem:[%s1 + $0x2d4] sm:$0xf]
    %v208 = vld [vmem:[%s1 + $0x2d8] sm:$0xf]
    %v209 = vld [vmem:[%s1 + $0x2dc] sm:$0xf]
    %v210 = vld [vmem:[%s1 + $0x2e0] sm:$0xf]
    %v211 = vld [vmem:[%s1 + $0x2e4] sm:$0xf]
    %v212 = vld [vmem:[%s1 + $0x2e8] sm:$0xf]
    %v213 = vld [vmem:[%s1 + $0x2ec] sm:$0xf]
    %v214 = vld [vmem:[%s1 + $0x2f0] sm:$0xf]
    %v215 = vld [vmem:[%s1 + $0x2f4] sm:$0xf]
    %v216 = vld [vmem:[%s1 + $0x2f8] sm:$0xf]
    %v217 = vld [vmem:[%s1 + $0x2fc] sm:$0xf]
    %v218 = vld [vmem:[%s1 + $0x300] sm:$0xf]
    %v219 = vld [vmem:[%s1 + $0x304] sm:$0xf]
    %v220 = vld [vmem:[%s1 + $0x308] sm:$0xf]
    %v221 = vld [vmem:[%s1 + $0x30c] sm:$0xf]
    %v222 = vld [vmem:[%s1 + $0x310] sm:$0xf]
    %v223 = vld [vmem:[%s1 + $0x314] sm:$0xf]
    %v224 = vld [vmem:[%s1 + $0x318] sm:$0xf]
    %v225 = vld [vmem:[%s1 + $0x31c] sm:$0xf]
    %v226 = vld [vmem:[%s1 + $0x320] sm:$0xf]
    %v227 = vld [vmem:[%s1 + $0x324] sm:$0xf]
    %v228 = vld [vmem:[%s1 + $0x328] sm:$0xf]
    %v229 = vld [vmem:[%s1 + $0x32c] sm:$0xf]
    %v230 = vld [vmem:[%s1 + $0x330] sm:$0xf]
    %v231 = vld [vmem:[%s1 + $0x334] sm:$0xf]
    %v232 = vld [vmem:[%s1 + $0x338] sm:$0xf]
    %v233 = vld [vmem:[%s1 + $0x33c] sm:$0xf]
    %v234 = vld [vmem:[%s1 + $0x340] sm:$0xf]
    %v235 = vld [vmem:[%s1 + $0x344] sm:$0xf]
    %v236 = vld [vmem:[%s1 + $0x348] sm:$0xf]
    %v237 = vld [vmem:[%s1 + $0x34c] sm:$0xf]
    %v238 = vld [vmem:[%s1 + $0x350] sm:$0xf]
    %v239 = vld [vmem:[%s1 + $0x354] sm:$0xf]
    %v240 = vld [vmem:[%s1 + $0x358] sm:$0xf]
    %v241 = vld [vmem:[%s1 + $0x35c] sm:$0xf]
    %v242 = vld [vmem:[%s1 + $0x360] sm:$0xf]
    %v243 = vld [vmem:[%s1 + $0x364] sm:$0xf]
    %v244 = vld [vmem:[%s1 + $0x368] sm:$0xf]
    %v245 = vld [vmem:[%s1 + $0x36c] sm:$0xf]
    %v246 = vld [vmem:[%s1 + $0x370] sm:$0xf]
    %v247 = vld [vmem:[%s1 + $0x374] sm:$0xf]
    %v248 = vld [vmem:[%s1 + $0x378] sm:$0xf]
    %v249 = vld [vmem:[%s1 + $0x37c] sm:$0xf]
    %v250 = vld [vmem:[%s1 + $0x380] sm:$0xf]
    %v251 = vld [vmem:[%s1 + $0x384] sm:$0xf]
    %v252 = vld [vmem:[%s1 + $0x388] sm:$0xf]
    %v253 = vld [vmem:[%s1 + $0x38c] sm:$0xf]
    %v254 = vld [vmem:[%s1 + $0x390] sm:$0xf]
    %v255 = vld [vmem:[%s1 + $0x394] sm:$0xf]
    %v256 = vld [vmem:[%s1 + $0x398] sm:$0xf]
    %v257 = vld [vmem:[%s1 + $0x39c] sm:$0xf]
    %v258 = vld [vmem:[%s1 + $0x3a0] sm:$0xf]
    %v259 = vld [vmem:[%s1 + $0x3a4] sm:$0xf]
    %v260 = vld [vmem:[%s1 + $0x3a8] sm:$0xf]
    %v261 = vld [vmem:[%s1 + $0x3ac] sm:$0xf]
    %v262 = vld [vmem:[%s1 + $0x3b0] sm:$0xf]
    %v263 = vld [vmem:[%s1 + $0x3b4] sm:$0xf]
    %v264 = vld [vmem:[%s1 + $0x3b8] sm:$0xf]
    %v265 = vld [vmem:[%s1 + $0x3bc] sm:$0xf]
    %v266 = vld [vmem:[%s1 + $0x3c0] sm:$0xf]
    %v267 = vld [vmem:[%s1 + $0x3c4] sm:$0xf]
    %v268 = vld [vmem:[%s1 + $0x3c8] sm:$0xf]
    %v269 = vld [vmem:[%s1 + $0x3cc] sm:$0xf]
    %v270 = vld [vmem:[%s1 + $0x3d0] sm:$0xf]
    %v271 = vld [vmem:[%s1 + $0x3d4] sm:$0xf]
    %v272 = vld [vmem:[%s1 + $0x3d8] sm:$0xf]
    %v273 = vld [vmem:[%s1 + $0x3dc] sm:$0xf]
    %v274 = vld [vmem:[%s1 + $0x3e0] sm:$0xf]
    %v275 = vld [vmem:[%s1 + $0x3e4] sm:$0xf]
    %v276 = vld [vmem:[%s1 + $0x3e8] sm:$0xf]
    %v277 = vld [vmem:[%s1 + $0x3ec] sm:$0xf]
    %v278 = vld [vmem:[%s1 + $0x3f0] sm:$0xf]
    %v279 = vld [vmem:[%s1 + $0x3f4] sm:$0xf]
    %v280 = vld [vmem:[%s1 + $0x3f8] sm:$0xf]
    %v281 = vld [vmem:[%s1 + $0x3fc] sm:$0xf]
    %v282 = vld [vmem:[%s1 + $0x400] sm:$0xf]
    %v283 = vld [vmem:[%s1 + $0x404] sm:$0xf]
    %v284 = vld [vmem:[%s1 + $0x408] sm:$0xf]
    %v285 = vld [vmem:[%s1 + $0x40c] sm:$0xf]
    %v286 = vld [vmem:[%s1 + $0x410] sm:$0xf]
    %v287 = vld [vmem:[%s1 + $0x414] sm:$0xf]
    %v288 = vld [vmem:[%s1 + $0x418] sm:$0xf]
    %v289 = vld [vmem:[%s1 + $0x41c] sm:$0xf]
    %v290 = vld [vmem:[%s1 + $0x420] sm:$0xf]
    %v291 = vld [vmem:[%s1 + $0x424] sm:$0xf]
    %v292 = vld [vmem:[%s1 + $0x428] sm:$0xf]
    %v293 = vld [vmem:[%s1 + $0x42c] sm:$0xf]
    %v294 = vld [vmem:[%s1 + $0x430] sm:$0xf]
    %v295 = vld [vmem:[%s1 + $0x434] sm:$0xf]
    %v296 = vld [vmem:[%s1 + $0x438] sm:$0xf]
    %v297 = vld [vmem:[%s1 + $0x43c] sm:$0xf]
    %v298 = vld [vmem:[%s1 + $0x440] sm:$0xf]
    %v299 = vld [vmem:[%s1 + $0x444] sm:$0xf]
    %v300 = vld [vmem:[%s1 + $0x448] sm:$0xf]
    %v301 = vld [vmem:[%s1 + $0x44c] sm:$0xf]
    %v302 = vld [vmem:[%s1 + $0x450] sm:$0xf]
    %v303 = vld [vmem:[%s1 + $0x454] sm:$0xf]
    %v304 = vld [vmem:[%s1 + $0x458] sm:$0xf]
    %v305 = vld [vmem:[%s1 + $0x45c] sm:$0xf]
    %v306 = vld [vmem:[%s1 + $0x460] sm:$0xf]
    %v307 = vld [vmem:[%s1 + $0x464] sm:$0xf]
    %v308 = vld [vmem:[%s1 + $0x468] sm:$0xf]
    %v309 = vld [vmem:[%s1 + $0x46c] sm:$0xf]
    %v310 = vld [vmem:[%s1 + $0x470] sm:$0xf]
    %v311 = vld [vmem:[%s1 + $0x474] sm:$0xf]
    %v312 = vld [vmem:[%s1 + $0x478] sm:$0xf]
    %v313 = vld [vmem:[%s1 + $0x47c] sm:$0xf]
    %v314 = vld [vmem:[%s1 + $0x480] sm:$0xf]
    %v315 = vld [vmem:[%s1 + $0x484] sm:$0xf]
    %v316 = vld [vmem:[%s1 + $0x488] sm:$0xf]
    %v317 = vld [vmem:[%s1 + $0x48c] sm:$0xf]
    %v318 = vld [vmem:[%s1 + $0x490] sm:$0xf]
    %v319 = vld [vmem:[%s1 + $0x494] sm:$0xf]
    %v320 = vld [vmem:[%s1 + $0x498] sm:$0xf]
    %v321 = vld [vmem:[%s1 + $0x49c] sm:$0xf]
    %v322 = vld [vmem:[%s1 + $0x4a0] sm:$0xf]
    %v323 = vld [vmem:[%s1 + $0x4a4] sm:$0xf]
    %v324 = vld [vmem:[%s1 + $0x4a8] sm:$0xf]
    %v325 = vld [vmem:[%s1 + $0x4ac] sm:$0xf]
    %v326 = vld [vmem:[%s1 + $0x4b0] sm:$0xf]
    %v327 = vld [vmem:[%s1 + $0x4b4] sm:$0xf]
    %v328 = vld [vmem:[%s1 + $0x4b8] sm:$0xf]
    %v329 = vld [vmem:[%s1 + $0x4bc] sm:$0xf]
    %v330 = vld [vmem:[%s1 + $0x4c0] sm:$0xf]
    %v331 = vld [vmem:[%s1 + $0x4c4] sm:$0xf]
    %v332 = vld [vmem:[%s1 + $0x4c8] sm:$0xf]
    %v333 = vld [vmem:[%s1 + $0x4cc] sm:$0xf]
    %v334 = vld [vmem:[%s1 + $0x4d0] sm:$0xf]
    %v335 = vld [vmem:[%s1 + $0x4d4] sm:$0xf]
    %v336 = vld [vmem:[%s1 + $0x4d8] sm:$0xf]
    %v337 = vld [vmem:[%s1 + $0x4dc] sm:$0xf]
    %v338 = vld [vmem:[%s1 + $0x4e0] sm:$0xf]
    %v339 = vld [vmem:[%s1 + $0x4e4] sm:$0xf]
    %v340 = vld [vmem:[%s1 + $0x4e8] sm:$0xf]
    %v341 = vld [vmem:[%s1 + $0x4ec] sm:$0xf]
    %v342 = vld [vmem:[%s1 + $0x4f0] sm:$0xf]
    %v343 = vld [vmem:[%s1 + $0x4f4] sm:$0xf]
    %v344 = vld [vmem:[%s1 + $0x4f8] sm:$0xf]
    %v345 = vld [vmem:[%s1 + $0x4fc] sm:$0xf]
    %v346 = vld [vmem:[%s1 + $0x500] sm:$0xf]
    %v347 = vld [vmem:[%s1 + $0x504] sm:$0xf]
    %v348 = vld [vmem:[%s1 + $0x508] sm:$0xf]
    %v349 = vld [vmem:[%s1 + $0x50c] sm:$0xf]
    %v350 = vld [vmem:[%s1 + $0x510] sm:$0xf]
    %v351 = vld [vmem:[%s1 + $0x514] sm:$0xf]
    %v352 = vld [vmem:[%s1 + $0x518] sm:$0xf]
    %v353 = vld [vmem:[%s1 + $0x51c] sm:$0xf]
    %v354 = vld [vmem:[%s1 + $0x520] sm:$0xf]
    %v355 = vld [vmem:[%s1 + $0x524] sm:$0xf]
    %v356 = vld [vmem:[%s1 + $0x528] sm:$0xf]
    %v357 = vld [vmem:[%s1 + $0x52c] sm:$0xf]
    %v358 = vld [vmem:[%s1 + $0x530] sm:$0xf]
    %v359 = vld [vmem:[%s1 + $0x534] sm:$0xf]
    %v360 = vld [vmem:[%s1 + $0x538] sm:$0xf]
    %v361 = vld [vmem:[%s1 + $0x53c] sm:$0xf]
    %v362 = vld [vmem:[%s1 + $0x540] sm:$0xf]
    %v363 = vld [vmem:[%s1 + $0x544] sm:$0xf]
    %v364 = vld [vmem:[%s1 + $0x548] sm:$0xf]
    %v365 = vld [vmem:[%s1 + $0x54c] sm:$0xf]
    %v366 = vld [vmem:[%s1 + $0x550] sm:$0xf]
    %v367 = vld [vmem:[%s1 + $0x554] sm:$0xf]
    %v368 = vld [vmem:[%s1 + $0x558] sm:$0xf]
    %v369 = vld [vmem:[%s1 + $0x55c] sm:$0xf]
    %v370 = vld [vmem:[%s1 + $0x560] sm:$0xf]
    %v371 = vld [vmem:[%s1 + $0x564] sm:$0xf]
    %v372 = vld [vmem:[%s1 + $0x568] sm:$0xf]
    %v373 = vld [vmem:[%s1 + $0x56c] sm:$0xf]
    %v374 = vld [vmem:[%s1 + $0x570] sm:$0xf]
    %v375 = vld [vmem:[%s1 + $0x574] sm:$0xf]
    %v376 = vld [vmem:[%s1 + $0x578] sm:$0xf]
    %v377 = vld [vmem:[%s1 + $0x57c] sm:$0xf]
    %v378 = vld [vmem:[%s1 + $0x580] sm:$0xf]
    %v379 = vld [vmem:[%s1 + $0x584] sm:$0xf]
    %v380 = vld [vmem:[%s1 + $0x588] sm:$0xf]
    %v381 = vld [vmem:[%s1 + $0x58c] sm:$0xf]
    %v382 = vld [vmem:[%s1 + $0x590] sm:$0xf]
    %v383 = vld [vmem:[%s1 + $0x594] sm:$0xf]
    %v384 = vld [vmem:[%s1 + $0x598] sm:$0xf]
    %v385 = vld [vmem:[%s1 + $0x59c] sm:$0xf]
    %v386 = vld [vmem:[%s1 + $0x5a0] sm:$0xf]
    %v387 = vld [vmem:[%s1 + $0x5a4] sm:$0xf]
    %v388 = vld [vmem:[%s1 + $0x5a8] sm:$0xf]
    %v389 = vld [vmem:[%s1 + $0x5ac] sm:$0xf]
    %v390 = vld [vmem:[%s1 + $0x5b0] sm:$0xf]
    %v391 = vld [vmem:[%s1 + $0x5b4] sm:$0xf]
    %v392 = vld [vmem:[%s1 + $0x5b8] sm:$0xf]
    %v393 = vld [vmem:[%s1 + $0x5bc] sm:$0xf]
    %v394 = vld [vmem:[%s1 + $0x5c0] sm:$0xf]
    %v395 = vld [vmem:[%s1 + $0x5c4] sm:$0xf]
    %v396 = vld [vmem:[%s1 + $0x5c8] sm:$0xf]
    %v397 = vld [vmem:[%s1 + $0x5cc] sm:$0xf]
    %v398 = vld [vmem:[%s1 + $0x5d0] sm:$0xf]
    %v399 = vld [vmem:[%s1 + $0x5d4] sm:$0xf]
    %v400 = vld [vmem:[%s1 + $0x5d8] sm:$0xf]
    %v401 = vld [vmem:[%s1 + $0x5dc] sm:$0xf]
    %v402 = vld [vmem:[%s1 + $0x5e0] sm:$0xf]
    %v403 = vld [vmem:[%s1 + $0x5e4] sm:$0xf]
    %v404 = vld [vmem:[%s1 + $0x5e8] sm:$0xf]
    %v405 = vld [vmem:[%s1 + $0x5ec] sm:$0xf]
    %v406 = vld [vmem:[%s1 + $0x5f0] sm:$0xf]
    %v407 = vld [vmem:[%s1 + $0x5f4] sm:$0xf]
    %v408 = vld [vmem:[%s1 + $0x5f8] sm:$0xf]
    %v409 = vld [vmem:[%s1 + $0x5fc] sm:$0xf]
    %v410 = vld [vmem:[%s1 + $0x600] sm:$0xf]
    %v411 = vld [vmem:[%s1 + $0x604] sm:$0xf]
    %v412 = vld [vmem:[%s1 + $0x608] sm:$0xf]
    %v413 = vld [vmem:[%s1 + $0x60c] sm:$0xf]
    %v414 = vld [vmem:[%s1 + $0x610] sm:$0xf]
    %v415 = vld [vmem:[%s1 + $0x614] sm:$0xf]
    %v416 = vld [vmem:[%s1 + $0x618] sm:$0xf]
    %v417 = vld [vmem:[%s1 + $0x61c] sm:$0xf]
    %v418 = vld [vmem:[%s2] sm:$0x1]
    %v420 = vlaneseq
    %v421 = vshrl.u32 %v420, 7
    %v422 = vsub.s32 0, %v421
    %v423 = vrot.slane %v418, %v422
    %v429 = vcombine.high %v22, %v22
    %v431 = vunpack.c.l.s4 1966171168
    %v432 = vunpack.c.0.s8 %v431
    %v433 = vlaneseq
    %v434 = vshrl.u32 %v433, 7
    %v435 = vsub.s32 %v432, %v434
    %v436 = vrot.slane %v22, %v435
    %v438 = vunpack.c.l.s4 1966171168
    %v439 = vunpack.c.0.s8 %v438
    %v440 = vlaneseq
    %v441 = vshrl.u32 %v440, 7
    %v442 = vsub.s32 %v439, %v441
    %v443 = vrot.slane %v429, %v442
    %v444 = vcombine.high %v436, %v436
    %v445 = vcombine.high %v443, %v443
    %v447 = vunpack.c.l.s4 1966171168
    %v448 = vunpack.c.0.s8 %v447
    %v449 = vlaneseq
    %v450 = vshrl.u32 %v449, 7
    %v451 = vsub.s32 %v448, %v450
    %v452 = vrot.slane %v436, %v451
    %v454 = vunpack.c.l.s4 1966171168
    %v455 = vunpack.c.0.s8 %v454
    %v456 = vlaneseq
    %v457 = vshrl.u32 %v456, 7
    %v458 = vsub.s32 %v455, %v457
    %v459 = vrot.slane %v443, %v458
    %v461 = vunpack.c.l.s4 1966171168
    %v462 = vunpack.c.0.s8 %v461
    %v463 = vlaneseq
    %v464 = vshrl.u32 %v463, 7
    %v465 = vsub.s32 %v462, %v464
    %v466 = vrot.slane %v444, %v465
    %v468 = vunpack.c.l.s4 1966171168
    %v469 = vunpack.c.0.s8 %v468
    %v470 = vlaneseq
    %v471 = vshrl.u32 %v470, 7
    %v472 = vsub.s32 %v469, %v471
    %v473 = vrot.slane %v445, %v472
    %v474 = vcombine.high %v452, %v452
    %v475 = vcombine.high %v459, %v459
    %v476 = vcombine.high %v466, %v466
    %v477 = vcombine.high %v473, %v473
    %v478 = vcombine.high %v23, %v23
    %v480 = vunpack.c.l.s4 1966171168
    %v481 = vunpack.c.0.s8 %v480
    %v482 = vlaneseq
    %v483 = vshrl.u32 %v482, 7
    %v484 = vsub.s32 %v481, %v483
    %v485 = vrot.slane %v23, %v484
    %v487 = vunpack.c.l.s4 1966171168
    %v488 = vunpack.c.0.s8 %v487
    %v489 = vlaneseq
    %v490 = vshrl.u32 %v489, 7
    %v491 = vsub.s32 %v488, %v490
    %v492 = vrot.slane %v478, %v491
    %v493 = vcombine.high %v485, %v485
    %v494 = vcombine.high %v492, %v492
    %v496 = vunpack.c.l.s4 1966171168
    %v497 = vunpack.c.0.s8 %v496
    %v498 = vlaneseq
    %v499 = vshrl.u32 %v498, 7
    %v500 = vsub.s32 %v497, %v499
    %v501 = vrot.slane %v485, %v500
    %v503 = vunpack.c.l.s4 1966171168
    %v504 = vunpack.c.0.s8 %v503
    %v505 = vlaneseq
    %v506 = vshrl.u32 %v505, 7
    %v507 = vsub.s32 %v504, %v506
    %v508 = vrot.slane %v492, %v507
    %v510 = vunpack.c.l.s4 1966171168
    %v511 = vunpack.c.0.s8 %v510
    %v512 = vlaneseq
    %v513 = vshrl.u32 %v512, 7
    %v514 = vsub.s32 %v511, %v513
    %v515 = vrot.slane %v493, %v514
    %v517 = vunpack.c.l.s4 1966171168
    %v518 = vunpack.c.0.s8 %v517
    %v519 = vlaneseq
    %v520 = vshrl.u32 %v519, 7
    %v521 = vsub.s32 %v518, %v520
    %v522 = vrot.slane %v494, %v521
    %v523 = vcombine.high %v501, %v501
    %v524 = vcombine.high %v508, %v508
    %v525 = vcombine.high %v515, %v515
    %v526 = vcombine.high %v522, %v522
    %v527 = vcombine.high %v24, %v24
    %v529 = vunpack.c.l.s4 1966171168
    %v530 = vunpack.c.0.s8 %v529
    %v531 = vlaneseq
    %v532 = vshrl.u32 %v531, 7
    %v533 = vsub.s32 %v530, %v532
    %v534 = vrot.slane %v24, %v533
    %v536 = vunpack.c.l.s4 1966171168
    %v537 = vunpack.c.0.s8 %v536
    %v538 = vlaneseq
    %v539 = vshrl.u32 %v538, 7
    %v540 = vsub.s32 %v537, %v539
    %v541 = vrot.slane %v527, %v540
    %v542 = vcombine.high %v534, %v534
    %v543 = vcombine.high %v541, %v541
    %v545 = vunpack.c.l.s4 1966171168
    %v546 = vunpack.c.0.s8 %v545
    %v547 = vlaneseq
    %v548 = vshrl.u32 %v547, 7
    %v549 = vsub.s32 %v546, %v548
    %v550 = vrot.slane %v534, %v549
    %v552 = vunpack.c.l.s4 1966171168
    %v553 = vunpack.c.0.s8 %v552
    %v554 = vlaneseq
    %v555 = vshrl.u32 %v554, 7
    %v556 = vsub.s32 %v553, %v555
    %v557 = vrot.slane %v541, %v556
    %v559 = vunpack.c.l.s4 1966171168
    %v560 = vunpack.c.0.s8 %v559
    %v561 = vlaneseq
    %v562 = vshrl.u32 %v561, 7
    %v563 = vsub.s32 %v560, %v562
    %v564 = vrot.slane %v542, %v563
    %v566 = vunpack.c.l.s4 1966171168
    %v567 = vunpack.c.0.s8 %v566
    %v568 = vlaneseq
    %v569 = vshrl.u32 %v568, 7
    %v570 = vsub.s32 %v567, %v569
    %v571 = vrot.slane %v543, %v570
    %v572 = vcombine.high %v550, %v550
    %v573 = vcombine.high %v557, %v557
    %v574 = vcombine.high %v564, %v564
    %v575 = vcombine.high %v571, %v571
    %v577 = vunpack.c.l.s4 1966171168
    %v578 = vunpack.c.0.s8 %v577
    %v579 = vlaneseq
    %v580 = vshrl.u32 %v579, 7
    %v581 = vsub.s32 %v578, %v580
    %v582 = vrot.slane %v25, %v581
    %v584 = vunpack.c.l.s4 1966171168
    %v585 = vunpack.c.0.s8 %v584
    %v586 = vlaneseq
    %v587 = vshrl.u32 %v586, 7
    %v588 = vsub.s32 %v585, %v587
    %v589 = vrot.slane %v582, %v588
    %v1006 = vunpack.c.l.b16 %v26
    %v1007 = vunpack.c.l.b16 %v27
    %v1008 = vunpack.c.l.b16 %v28
    %v1009 = vunpack.c.l.b16 %v29
    %v1010 = vunpack.c.l.b16 %v30
    %v1011 = vunpack.c.l.b16 %v31
    %v1012 = vunpack.c.l.b16 %v32
    %v1013 = vunpack.c.l.b16 %v33
    %v1014 = vunpack.c.l.b16 %v34
    %v1015 = vunpack.c.l.b16 %v35
    %v1016 = vunpack.c.l.b16 %v36
    %v1017 = vunpack.c.l.b16 %v37
    %v1018 = vunpack.c.l.b16 %v38
    %v1019 = vunpack.c.l.b16 %v39
    %v1020 = vunpack.c.l.b16 %v40
    %v1021 = vunpack.c.l.b16 %v41
    %v1022 = vunpack.c.l.b16 %v42
    %v1023 = vunpack.c.l.b16 %v43
    %v1024 = vunpack.c.l.b16 %v44
    %v1025 = vunpack.c.l.b16 %v45
    %v1026 = vunpack.c.l.b16 %v46
    %v1027 = vunpack.c.l.b16 %v47
    %v1028 = vunpack.c.l.b16 %v48
    %v1029 = vunpack.c.l.b16 %v49
    %v1030 = vunpack.c.l.b16 %v50
    %v1031 = vunpack.c.l.b16 %v51
    %v1032 = vunpack.c.l.b16 %v52
    %v1033 = vunpack.c.l.b16 %v53
    %v1034 = vunpack.c.l.b16 %v54
    %v1035 = vunpack.c.l.b16 %v55
    %v1036 = vunpack.c.l.b16 %v56
    %v1037 = vunpack.c.l.b16 %v57
    %v1038 = vunpack.c.l.b16 %v58
    %v1039 = vunpack.c.l.b16 %v59
    %v1040 = vunpack.c.l.b16 %v60
    %v1041 = vunpack.c.l.b16 %v61
    %v1042 = vunpack.c.l.b16 %v62
    %v1043 = vunpack.c.l.b16 %v63
    %v1044 = vunpack.c.l.b16 %v64
    %v1045 = vunpack.c.l.b16 %v65
    %v1046 = vunpack.c.l.b16 %v66
    %v1047 = vunpack.c.l.b16 %v67
    %v1048 = vunpack.c.l.b16 %v68
    %v1049 = vunpack.c.l.b16 %v69
    %v1050 = vunpack.c.l.b16 %v70
    %v1051 = vunpack.c.l.b16 %v71
    %v1052 = vunpack.c.l.b16 %v72
    %v1053 = vunpack.c.l.b16 %v73
    %v1054 = vunpack.c.l.b16 %v74
    %v1055 = vunpack.c.l.b16 %v75
    %v1056 = vunpack.c.l.b16 %v76
    %v1057 = vunpack.c.l.b16 %v77
    %v1058 = vunpack.c.l.b16 %v78
    %v1059 = vunpack.c.l.b16 %v79
    %v1060 = vunpack.c.l.b16 %v80
    %v1061 = vunpack.c.l.b16 %v81
    %v1062 = vunpack.c.l.b16 %v82
    %v1063 = vunpack.c.l.b16 %v83
    %v1064 = vunpack.c.l.b16 %v84
    %v1065 = vunpack.c.l.b16 %v85
    %v1066 = vunpack.c.l.b16 %v86
    %v1067 = vunpack.c.l.b16 %v87
    %v1068 = vunpack.c.l.b16 %v88
    %v1069 = vunpack.c.l.b16 %v89
    %v1070 = vunpack.c.l.b16 %v90
    %v1071 = vunpack.c.l.b16 %v91
    %v1072 = vunpack.c.l.b16 %v92
    %v1073 = vunpack.c.l.b16 %v93
    %v1074 = vunpack.c.l.b16 %v94
    %v1075 = vunpack.c.l.b16 %v95
    %v1076 = vunpack.c.l.b16 %v96
    %v1077 = vunpack.c.l.b16 %v97
    %v1078 = vunpack.c.l.b16 %v98
    %v1079 = vunpack.c.l.b16 %v99
    %v1080 = vunpack.c.l.b16 %v100
    %v1081 = vunpack.c.l.b16 %v101
    %v1082 = vunpack.c.l.b16 %v102
    %v1083 = vunpack.c.l.b16 %v103
    %v1084 = vunpack.c.l.b16 %v104
    %v1085 = vunpack.c.l.b16 %v105
    %v1086 = vunpack.c.l.b16 %v106
    %v1087 = vunpack.c.l.b16 %v107
    %v1088 = vunpack.c.l.b16 %v108
    %v1089 = vunpack.c.l.b16 %v109
    %v1090 = vunpack.c.l.b16 %v110
    %v1091 = vunpack.c.l.b16 %v111
    %v1092 = vunpack.c.l.b16 %v112
    %v1093 = vunpack.c.l.b16 %v113
    %v1094 = vunpack.c.l.b16 %v114
    %v1095 = vunpack.c.l.b16 %v115
    %v1096 = vunpack.c.l.b16 %v116
    %v1097 = vunpack.c.l.b16 %v117
    %v1098 = vunpack.c.l.b16 %v118
    %v1099 = vunpack.c.l.b16 %v119
    %v1100 = vunpack.c.l.b16 %v120
    %v1101 = vunpack.c.l.b16 %v121
    %v1102 = vunpack.c.l.b16 %v122
    %v1103 = vunpack.c.l.b16 %v123
    %v1104 = vunpack.c.l.b16 %v124
    %v1105 = vunpack.c.l.b16 %v125
    %v1106 = vunpack.c.l.b16 %v126
    %v1107 = vunpack.c.l.b16 %v127
    %v1108 = vunpack.c.l.b16 %v128
    %v1109 = vunpack.c.l.b16 %v129
    %v1110 = vunpack.c.l.b16 %v130
    %v1111 = vunpack.c.l.b16 %v131
    %v1112 = vunpack.c.l.b16 %v132
    %v1113 = vunpack.c.l.b16 %v133
    %v1114 = vunpack.c.l.b16 %v134
    %v1115 = vunpack.c.l.b16 %v135
    %v1116 = vunpack.c.l.b16 %v136
    %v1117 = vunpack.c.l.b16 %v137
    %v1118 = vunpack.c.l.b16 %v138
    %v1119 = vunpack.c.l.b16 %v139
    %v1120 = vunpack.c.l.b16 %v140
    %v1121 = vunpack.c.l.b16 %v141
    %v1122 = vunpack.c.l.b16 %v142
    %v1123 = vunpack.c.l.b16 %v143
    %v1124 = vunpack.c.l.b16 %v144
    %v1125 = vunpack.c.l.b16 %v145
    %v1126 = vunpack.c.l.b16 %v146
    %v1127 = vunpack.c.l.b16 %v147
    %v1128 = vunpack.c.l.b16 %v148
    %v1129 = vunpack.c.l.b16 %v149
    %v1130 = vunpack.c.l.b16 %v150
    %v1131 = vunpack.c.l.b16 %v151
    %v1132 = vunpack.c.l.b16 %v152
    %v1133 = vunpack.c.l.b16 %v153
    %v1134 = vunpack.c.l.b16 %v154
    %v1135 = vunpack.c.l.b16 %v155
    %v1136 = vunpack.c.l.b16 %v156
    %v1137 = vunpack.c.l.b16 %v157
    %v1138 = vunpack.c.l.b16 %v158
    %v1139 = vunpack.c.l.b16 %v159
    %v1140 = vunpack.c.l.b16 %v160
    %v1141 = vunpack.c.l.b16 %v161
    %v1142 = vunpack.c.l.b16 %v162
    %v1143 = vunpack.c.l.b16 %v163
    %v1144 = vunpack.c.l.b16 %v164
    %v1145 = vunpack.c.l.b16 %v165
    %v1146 = vunpack.c.l.b16 %v166
    %v1147 = vunpack.c.l.b16 %v167
    %v1148 = vunpack.c.l.b16 %v168
    %v1149 = vunpack.c.l.b16 %v169
    %v1150 = vunpack.c.l.b16 %v170
    %v1151 = vunpack.c.l.b16 %v171
    %v1152 = vunpack.c.l.b16 %v172
    %v1153 = vunpack.c.l.b16 %v173
    %v1154 = vunpack.c.l.b16 %v174
    %v1155 = vunpack.c.l.b16 %v175
    %v1156 = vunpack.c.l.b16 %v176
    %v1157 = vunpack.c.l.b16 %v177
    %v1158 = vunpack.c.l.b16 %v178
    %v1159 = vunpack.c.l.b16 %v179
    %v1160 = vunpack.c.l.b16 %v180
    %v1161 = vunpack.c.l.b16 %v181
    %v1162 = vunpack.c.l.b16 %v182
    %v1163 = vunpack.c.l.b16 %v183
    %v1164 = vunpack.c.l.b16 %v184
    %v1165 = vunpack.c.l.b16 %v185
    %v1166 = vunpack.c.l.b16 %v186
    %v1167 = vunpack.c.l.b16 %v187
    %v1168 = vunpack.c.l.b16 %v188
    %v1169 = vunpack.c.l.b16 %v189
    %v1170 = vunpack.c.l.b16 %v190
    %v1171 = vunpack.c.l.b16 %v191
    %v1172 = vunpack.c.l.b16 %v192
    %v1173 = vunpack.c.l.b16 %v193
    %v1174 = vunpack.c.l.b16 %v194
    %v1175 = vunpack.c.l.b16 %v195
    %v1176 = vunpack.c.l.b16 %v196
    %v1177 = vunpack.c.l.b16 %v197
    %v1178 = vunpack.c.l.b16 %v198
    %v1179 = vunpack.c.l.b16 %v199
    %v1180 = vunpack.c.l.b16 %v200
    %v1181 = vunpack.c.l.b16 %v201
    %v1182 = vunpack.c.l.b16 %v202
    %v1183 = vunpack.c.l.b16 %v203
    %v1184 = vunpack.c.l.b16 %v204
    %v1185 = vunpack.c.l.b16 %v205
    %v1186 = vunpack.c.l.b16 %v206
    %v1187 = vunpack.c.l.b16 %v207
    %v1188 = vunpack.c.l.b16 %v208
    %v1189 = vunpack.c.l.b16 %v209
    %v1190 = vunpack.c.l.b16 %v210
    %v1191 = vunpack.c.l.b16 %v211
    %v1192 = vunpack.c.l.b16 %v212
    %v1193 = vunpack.c.l.b16 %v213
    %v1194 = vunpack.c.l.b16 %v214
    %v1195 = vunpack.c.l.b16 %v215
    %v1196 = vunpack.c.l.b16 %v216
    %v1197 = vunpack.c.l.b16 %v217
    %v1198 = vunpack.c.l.b16 %v218
    %v1199 = vunpack.c.l.b16 %v219
    %v1200 = vunpack.c.l.b16 %v220
    %v1201 = vunpack.c.l.b16 %v221
    %v1202 = vunpack.c.l.b16 %v222
    %v1203 = vunpack.c.l.b16 %v223
    %v1204 = vunpack.c.l.b16 %v224
    %v1205 = vunpack.c.l.b16 %v225
    %v1206 = vunpack.c.l.b16 %v226
    %v1207 = vunpack.c.l.b16 %v227
    %v1208 = vunpack.c.l.b16 %v228
    %v1209 = vunpack.c.l.b16 %v229
    %v1210 = vunpack.c.l.b16 %v230
    %v1211 = vunpack.c.l.b16 %v231
    %v1212 = vunpack.c.l.b16 %v232
    %v1213 = vunpack.c.l.b16 %v233
    %v1214 = vunpack.c.l.b16 %v234
    %v1215 = vunpack.c.l.b16 %v235
    %v1216 = vunpack.c.l.b16 %v236
    %v1217 = vunpack.c.l.b16 %v237
    %v1218 = vunpack.c.l.b16 %v238
    %v1219 = vunpack.c.l.b16 %v239
    %v1220 = vunpack.c.l.b16 %v240
    %v1221 = vunpack.c.l.b16 %v241
    %v1222 = vunpack.c.l.b16 %v242
    %v1223 = vunpack.c.l.b16 %v243
    %v1224 = vunpack.c.l.b16 %v244
    %v1225 = vunpack.c.l.b16 %v245
    %v1226 = vunpack.c.l.b16 %v246
    %v1227 = vunpack.c.l.b16 %v247
    %v1228 = vunpack.c.l.b16 %v248
    %v1229 = vunpack.c.l.b16 %v249
    %v1230 = vunpack.c.l.b16 %v250
    %v1231 = vunpack.c.l.b16 %v251
    %v1232 = vunpack.c.l.b16 %v252
    %v1233 = vunpack.c.l.b16 %v253
    %v1234 = vunpack.c.l.b16 %v254
    %v1235 = vunpack.c.l.b16 %v255
    %v1236 = vunpack.c.l.b16 %v256
    %v1237 = vunpack.c.l.b16 %v257
    %v1238 = vunpack.c.l.b16 %v258
    %v1239 = vunpack.c.l.b16 %v259
    %v1240 = vunpack.c.l.b16 %v260
    %v1241 = vunpack.c.l.b16 %v261
    %v1242 = vunpack.c.l.b16 %v262
    %v1243 = vunpack.c.l.b16 %v263
    %v1244 = vunpack.c.l.b16 %v264
    %v1245 = vunpack.c.l.b16 %v265
    %v1246 = vunpack.c.l.b16 %v266
    %v1247 = vunpack.c.l.b16 %v267
    %v1248 = vunpack.c.l.b16 %v268
    %v1249 = vunpack.c.l.b16 %v269
    %v1250 = vunpack.c.l.b16 %v270
    %v1251 = vunpack.c.l.b16 %v271
    %v1252 = vunpack.c.l.b16 %v272
    %v1253 = vunpack.c.l.b16 %v273
    %v1254 = vunpack.c.l.b16 %v274
    %v1255 = vunpack.c.l.b16 %v275
    %v1256 = vunpack.c.l.b16 %v276
    %v1257 = vunpack.c.l.b16 %v277
    %v1258 = vunpack.c.l.b16 %v278
    %v1259 = vunpack.c.l.b16 %v279
    %v1260 = vunpack.c.l.b16 %v280
    %v1261 = vunpack.c.l.b16 %v281
    %v1262 = vunpack.c.l.b16 %v282
    %v1263 = vunpack.c.l.b16 %v283
    %v1264 = vunpack.c.l.b16 %v284
    %v1265 = vunpack.c.l.b16 %v285
    %v1266 = vunpack.c.l.b16 %v286
    %v1267 = vunpack.c.l.b16 %v287
    %v1268 = vunpack.c.l.b16 %v288
    %v1269 = vunpack.c.l.b16 %v289
    %v1270 = vunpack.c.l.b16 %v290
    %v1271 = vunpack.c.l.b16 %v291
    %v1272 = vunpack.c.l.b16 %v292
    %v1273 = vunpack.c.l.b16 %v293
    %v1274 = vunpack.c.l.b16 %v294
    %v1275 = vunpack.c.l.b16 %v295
    %v1276 = vunpack.c.l.b16 %v296
    %v1277 = vunpack.c.l.b16 %v297
    %v1278 = vunpack.c.l.b16 %v298
    %v1279 = vunpack.c.l.b16 %v299
    %v1280 = vunpack.c.l.b16 %v300
    %v1281 = vunpack.c.l.b16 %v301
    %v1282 = vunpack.c.l.b16 %v302
    %v1283 = vunpack.c.l.b16 %v303
    %v1284 = vunpack.c.l.b16 %v304
    %v1285 = vunpack.c.l.b16 %v305
    %v1286 = vunpack.c.l.b16 %v306
    %v1287 = vunpack.c.l.b16 %v307
    %v1288 = vunpack.c.l.b16 %v308
    %v1289 = vunpack.c.l.b16 %v309
    %v1290 = vunpack.c.l.b16 %v310
    %v1291 = vunpack.c.l.b16 %v311
    %v1292 = vunpack.c.l.b16 %v312
    %v1293 = vunpack.c.l.b16 %v313
    %v1294 = vunpack.c.l.b16 %v314
    %v1295 = vunpack.c.l.b16 %v315
    %v1296 = vunpack.c.l.b16 %v316
    %v1297 = vunpack.c.l.b16 %v317
    %v1298 = vunpack.c.l.b16 %v318
    %v1299 = vunpack.c.l.b16 %v319
    %v1300 = vunpack.c.l.b16 %v320
    %v1301 = vunpack.c.l.b16 %v321
    %v1302 = vunpack.c.l.b16 %v322
    %v1303 = vunpack.c.l.b16 %v323
    %v1304 = vunpack.c.l.b16 %v324
    %v1305 = vunpack.c.l.b16 %v325
    %v1306 = vunpack.c.l.b16 %v326
    %v1307 = vunpack.c.l.b16 %v327
    %v1308 = vunpack.c.l.b16 %v328
    %v1309 = vunpack.c.l.b16 %v329
    %v1310 = vunpack.c.l.b16 %v330
    %v1311 = vunpack.c.l.b16 %v331
    %v1312 = vunpack.c.l.b16 %v332
    %v1313 = vunpack.c.l.b16 %v333
    %v1314 = vunpack.c.l.b16 %v334
    %v1315 = vunpack.c.l.b16 %v335
    %v1316 = vunpack.c.l.b16 %v336
    %v1317 = vunpack.c.l.b16 %v337
    %v1318 = vunpack.c.l.b16 %v338
    %v1319 = vunpack.c.l.b16 %v339
    %v1320 = vunpack.c.l.b16 %v340
    %v1321 = vunpack.c.l.b16 %v341
    %v1322 = vunpack.c.l.b16 %v342
    %v1323 = vunpack.c.l.b16 %v343
    %v1324 = vunpack.c.l.b16 %v344
    %v1325 = vunpack.c.l.b16 %v345
    %v1326 = vunpack.c.l.b16 %v346
    %v1327 = vunpack.c.l.b16 %v347
    %v1328 = vunpack.c.l.b16 %v348
    %v1329 = vunpack.c.l.b16 %v349
    %v1330 = vunpack.c.l.b16 %v350
    %v1331 = vunpack.c.l.b16 %v351
    %v1332 = vunpack.c.l.b16 %v352
    %v1333 = vunpack.c.l.b16 %v353
    %v1334 = vunpack.c.l.b16 %v354
    %v1335 = vunpack.c.l.b16 %v355
    %v1336 = vunpack.c.l.b16 %v356
    %v1337 = vunpack.c.l.b16 %v357
    %v1338 = vunpack.c.l.b16 %v358
    %v1339 = vunpack.c.l.b16 %v359
    %v1340 = vunpack.c.l.b16 %v360
    %v1341 = vunpack.c.l.b16 %v361
    %v1342 = vunpack.c.l.b16 %v362
    %v1343 = vunpack.c.l.b16 %v363
    %v1344 = vunpack.c.l.b16 %v364
    %v1345 = vunpack.c.l.b16 %v365
    %v1346 = vunpack.c.l.b16 %v366
    %v1347 = vunpack.c.l.b16 %v367
    %v1348 = vunpack.c.l.b16 %v368
    %v1349 = vunpack.c.l.b16 %v369
    %v1350 = vunpack.c.l.b16 %v370
    %v1351 = vunpack.c.l.b16 %v371
    %v1352 = vunpack.c.l.b16 %v372
    %v1353 = vunpack.c.l.b16 %v373
    %v1354 = vunpack.c.l.b16 %v374
    %v1355 = vunpack.c.l.b16 %v375
    %v1356 = vunpack.c.l.b16 %v376
    %v1357 = vunpack.c.l.b16 %v377
    %v1358 = vunpack.c.l.b16 %v378
    %v1359 = vunpack.c.l.b16 %v379
    %v1360 = vunpack.c.l.b16 %v380
    %v1361 = vunpack.c.l.b16 %v381
    %v1362 = vunpack.c.l.b16 %v382
    %v1363 = vunpack.c.l.b16 %v383
    %v1364 = vunpack.c.l.b16 %v384
    %v1365 = vunpack.c.l.b16 %v385
    %v1366 = vunpack.c.l.b16 %v386
    %v1367 = vunpack.c.l.b16 %v387
    %v1368 = vunpack.c.l.b16 %v388
    %v1369 = vunpack.c.l.b16 %v389
    %v1370 = vunpack.c.l.b16 %v390
    %v1371 = vunpack.c.l.b16 %v391
    %v1372 = vunpack.c.l.b16 %v392
    %v1373 = vunpack.c.l.b16 %v393
    %v1374 = vunpack.c.l.b16 %v394
    %v1375 = vunpack.c.l.b16 %v395
    %v1376 = vunpack.c.l.b16 %v396
    %v1377 = vunpack.c.l.b16 %v397
    %v1378 = vunpack.c.l.b16 %v398
    %v1379 = vunpack.c.l.b16 %v399
    %v1380 = vunpack.c.l.b16 %v400
    %v1381 = vunpack.c.l.b16 %v401
    %v1382 = vunpack.c.l.b16 %v402
    %v1383 = vunpack.c.l.b16 %v403
    %v1384 = vunpack.c.l.b16 %v404
    %v1385 = vunpack.c.l.b16 %v405
    %v1386 = vunpack.c.l.b16 %v406
    %v1387 = vunpack.c.l.b16 %v407
    %v1388 = vunpack.c.l.b16 %v408
    %v1389 = vunpack.c.l.b16 %v409
    %v1390 = vunpack.c.l.b16 %v410
    %v1391 = vunpack.c.l.b16 %v411
    %v1392 = vunpack.c.l.b16 %v412
    %v1393 = vunpack.c.l.b16 %v413
    %v1394 = vunpack.c.l.b16 %v414
    %v1395 = vunpack.c.l.b16 %v415
    %v1396 = vunpack.c.l.b16 %v416
    %v1397 = vunpack.c.l.b16 %v417
    %v1398 = vpack.c.b16 %v1007, %v1006
    %v1399 = vpack.c.b16 %v1009, %v1008
    %v1400 = vpack.c.b16 %v1011, %v1010
    %v1401 = vpack.c.b16 %v1013, %v1012
    %v1402 = vpack.c.b16 %v1015, %v1014
    %v1403 = vpack.c.b16 %v1017, %v1016
    %v1404 = vpack.c.b16 %v1019, %v1018
    %v1405 = vpack.c.b16 %v1021, %v1020
    %v1406 = vpack.c.b16 %v1023, %v1022
    %v1407 = vpack.c.b16 %v1025, %v1024
    %v1408 = vpack.c.b16 %v1027, %v1026
    %v1409 = vpack.c.b16 %v1029, %v1028
    %v1410 = vpack.c.b16 %v1031, %v1030
    %v1411 = vpack.c.b16 %v1033, %v1032
    %v1412 = vpack.c.b16 %v1035, %v1034
    %v1413 = vpack.c.b16 %v1037, %v1036
    %v1414 = vpack.c.b16 %v1039, %v1038
    %v1415 = vpack.c.b16 %v1041, %v1040
    %v1416 = vpack.c.b16 %v1043, %v1042
    %v1417 = vpack.c.b16 %v1045, %v1044
    %v1418 = vpack.c.b16 %v1047, %v1046
    %v1419 = vpack.c.b16 %v1049, %v1048
    %v1420 = vpack.c.b16 %v1051, %v1050
    %v1421 = vpack.c.b16 %v1053, %v1052
    %v1422 = vpack.c.b16 %v1055, %v1054
    %v1423 = vpack.c.b16 %v1057, %v1056
    %v1424 = vpack.c.b16 %v1059, %v1058
    %v1425 = vpack.c.b16 %v1061, %v1060
    %v1426 = vpack.c.b16 %v1063, %v1062
    %v1427 = vpack.c.b16 %v1065, %v1064
    %v1428 = vpack.c.b16 %v1067, %v1066
    %v1429 = vpack.c.b16 %v1069, %v1068
    %v1430 = vpack.c.b16 %v1071, %v1070
    %v1431 = vpack.c.b16 %v1073, %v1072
    %v1432 = vpack.c.b16 %v1075, %v1074
    %v1433 = vpack.c.b16 %v1077, %v1076
    %v1434 = vpack.c.b16 %v1079, %v1078
    %v1435 = vpack.c.b16 %v1081, %v1080
    %v1436 = vpack.c.b16 %v1083, %v1082
    %v1437 = vpack.c.b16 %v1085, %v1084
    %v1438 = vpack.c.b16 %v1087, %v1086
    %v1439 = vpack.c.b16 %v1089, %v1088
    %v1440 = vpack.c.b16 %v1091, %v1090
    %v1441 = vpack.c.b16 %v1093, %v1092
    %v1442 = vpack.c.b16 %v1095, %v1094
    %v1443 = vpack.c.b16 %v1097, %v1096
    %v1444 = vpack.c.b16 %v1099, %v1098
    %v1445 = vpack.c.b16 %v1101, %v1100
    %v1446 = vpack.c.b16 %v1103, %v1102
    %v1447 = vpack.c.b16 %v1105, %v1104
    %v1448 = vpack.c.b16 %v1107, %v1106
    %v1449 = vpack.c.b16 %v1109, %v1108
    %v1450 = vpack.c.b16 %v1111, %v1110
    %v1451 = vpack.c.b16 %v1113, %v1112
    %v1452 = vpack.c.b16 %v1115, %v1114
    %v1453 = vpack.c.b16 %v1117, %v1116
    %v1454 = vpack.c.b16 %v1119, %v1118
    %v1455 = vpack.c.b16 %v1121, %v1120
    %v1456 = vpack.c.b16 %v1123, %v1122
    %v1457 = vpack.c.b16 %v1125, %v1124
    %v1458 = vpack.c.b16 %v1127, %v1126
    %v1459 = vpack.c.b16 %v1129, %v1128
    %v1460 = vpack.c.b16 %v1131, %v1130
    %v1461 = vpack.c.b16 %v1133, %v1132
    %v1462 = vpack.c.b16 %v1135, %v1134
    %v1463 = vpack.c.b16 %v1137, %v1136
    %v1464 = vpack.c.b16 %v1139, %v1138
    %v1465 = vpack.c.b16 %v1141, %v1140
    %v1466 = vpack.c.b16 %v1143, %v1142
    %v1467 = vpack.c.b16 %v1145, %v1144
    %v1468 = vpack.c.b16 %v1147, %v1146
    %v1469 = vpack.c.b16 %v1149, %v1148
    %v1470 = vpack.c.b16 %v1151, %v1150
    %v1471 = vpack.c.b16 %v1153, %v1152
    %v1472 = vpack.c.b16 %v1155, %v1154
    %v1473 = vpack.c.b16 %v1157, %v1156
    %v1474 = vpack.c.b16 %v1159, %v1158
    %v1475 = vpack.c.b16 %v1161, %v1160
    %v1476 = vpack.c.b16 %v1163, %v1162
    %v1477 = vpack.c.b16 %v1165, %v1164
    %v1478 = vpack.c.b16 %v1167, %v1166
    %v1479 = vpack.c.b16 %v1169, %v1168
    %v1480 = vpack.c.b16 %v1171, %v1170
    %v1481 = vpack.c.b16 %v1173, %v1172
    %v1482 = vpack.c.b16 %v1175, %v1174
    %v1483 = vpack.c.b16 %v1177, %v1176
    %v1484 = vpack.c.b16 %v1179, %v1178
    %v1485 = vpack.c.b16 %v1181, %v1180
    %v1486 = vpack.c.b16 %v1183, %v1182
    %v1487 = vpack.c.b16 %v1185, %v1184
    %v1488 = vpack.c.b16 %v1187, %v1186
    %v1489 = vpack.c.b16 %v1189, %v1188
    %v1490 = vpack.c.b16 %v1191, %v1190
    %v1491 = vpack.c.b16 %v1193, %v1192
    %v1492 = vpack.c.b16 %v1195, %v1194
    %v1493 = vpack.c.b16 %v1197, %v1196
    %v1494 = vpack.c.b16 %v1199, %v1198
    %v1495 = vpack.c.b16 %v1201, %v1200
    %v1496 = vpack.c.b16 %v1203, %v1202
    %v1497 = vpack.c.b16 %v1205, %v1204
    %v1498 = vpack.c.b16 %v1207, %v1206
    %v1499 = vpack.c.b16 %v1209, %v1208
    %v1500 = vpack.c.b16 %v1211, %v1210
    %v1501 = vpack.c.b16 %v1213, %v1212
    %v1502 = vpack.c.b16 %v1215, %v1214
    %v1503 = vpack.c.b16 %v1217, %v1216
    %v1504 = vpack.c.b16 %v1219, %v1218
    %v1505 = vpack.c.b16 %v1221, %v1220
    %v1506 = vpack.c.b16 %v1223, %v1222
    %v1507 = vpack.c.b16 %v1225, %v1224
    %v1508 = vpack.c.b16 %v1227, %v1226
    %v1509 = vpack.c.b16 %v1229, %v1228
    %v1510 = vpack.c.b16 %v1231, %v1230
    %v1511 = vpack.c.b16 %v1233, %v1232
    %v1512 = vpack.c.b16 %v1235, %v1234
    %v1513 = vpack.c.b16 %v1237, %v1236
    %v1514 = vpack.c.b16 %v1239, %v1238
    %v1515 = vpack.c.b16 %v1241, %v1240
    %v1516 = vpack.c.b16 %v1243, %v1242
    %v1517 = vpack.c.b16 %v1245, %v1244
    %v1518 = vpack.c.b16 %v1247, %v1246
    %v1519 = vpack.c.b16 %v1249, %v1248
    %v1520 = vpack.c.b16 %v1251, %v1250
    %v1521 = vpack.c.b16 %v1253, %v1252
    %v1522 = vpack.c.b16 %v1255, %v1254
    %v1523 = vpack.c.b16 %v1257, %v1256
    %v1524 = vpack.c.b16 %v1259, %v1258
    %v1525 = vpack.c.b16 %v1261, %v1260
    %v1526 = vpack.c.b16 %v1263, %v1262
    %v1527 = vpack.c.b16 %v1265, %v1264
    %v1528 = vpack.c.b16 %v1267, %v1266
    %v1529 = vpack.c.b16 %v1269, %v1268
    %v1530 = vpack.c.b16 %v1271, %v1270
    %v1531 = vpack.c.b16 %v1273, %v1272
    %v1532 = vpack.c.b16 %v1275, %v1274
    %v1533 = vpack.c.b16 %v1277, %v1276
    %v1534 = vpack.c.b16 %v1279, %v1278
    %v1535 = vpack.c.b16 %v1281, %v1280
    %v1536 = vpack.c.b16 %v1283, %v1282
    %v1537 = vpack.c.b16 %v1285, %v1284
    %v1538 = vpack.c.b16 %v1287, %v1286
    %v1539 = vpack.c.b16 %v1289, %v1288
    %v1540 = vpack.c.b16 %v1291, %v1290
    %v1541 = vpack.c.b16 %v1293, %v1292
    %v1542 = vpack.c.b16 %v1295, %v1294
    %v1543 = vpack.c.b16 %v1297, %v1296
    %v1544 = vpack.c.b16 %v1299, %v1298
    %v1545 = vpack.c.b16 %v1301, %v1300
    %v1546 = vpack.c.b16 %v1303, %v1302
    %v1547 = vpack.c.b16 %v1305, %v1304
    %v1548 = vpack.c.b16 %v1307, %v1306
    %v1549 = vpack.c.b16 %v1309, %v1308
    %v1550 = vpack.c.b16 %v1311, %v1310
    %v1551 = vpack.c.b16 %v1313, %v1312
    %v1552 = vpack.c.b16 %v1315, %v1314
    %v1553 = vpack.c.b16 %v1317, %v1316
    %v1554 = vpack.c.b16 %v1319, %v1318
    %v1555 = vpack.c.b16 %v1321, %v1320
    %v1556 = vpack.c.b16 %v1323, %v1322
    %v1557 = vpack.c.b16 %v1325, %v1324
    %v1558 = vpack.c.b16 %v1327, %v1326
    %v1559 = vpack.c.b16 %v1329, %v1328
    %v1560 = vpack.c.b16 %v1331, %v1330
    %v1561 = vpack.c.b16 %v1333, %v1332
    %v1562 = vpack.c.b16 %v1335, %v1334
    %v1563 = vpack.c.b16 %v1337, %v1336
    %v1564 = vpack.c.b16 %v1339, %v1338
    %v1565 = vpack.c.b16 %v1341, %v1340
    %v1566 = vpack.c.b16 %v1343, %v1342
    %v1567 = vpack.c.b16 %v1345, %v1344
    %v1568 = vpack.c.b16 %v1347, %v1346
    %v1569 = vpack.c.b16 %v1349, %v1348
    %v1570 = vpack.c.b16 %v1351, %v1350
    %v1571 = vpack.c.b16 %v1353, %v1352
    %v1572 = vpack.c.b16 %v1355, %v1354
    %v1573 = vpack.c.b16 %v1357, %v1356
    %v1574 = vpack.c.b16 %v1359, %v1358
    %v1575 = vpack.c.b16 %v1361, %v1360
    %v1576 = vpack.c.b16 %v1363, %v1362
    %v1577 = vpack.c.b16 %v1365, %v1364
    %v1578 = vpack.c.b16 %v1367, %v1366
    %v1579 = vpack.c.b16 %v1369, %v1368
    %v1580 = vpack.c.b16 %v1371, %v1370
    %v1581 = vpack.c.b16 %v1373, %v1372
    %v1582 = vpack.c.b16 %v1375, %v1374
    %v1583 = vpack.c.b16 %v1377, %v1376
    %v1584 = vpack.c.b16 %v1379, %v1378
    %v1585 = vpack.c.b16 %v1381, %v1380
    %v1586 = vpack.c.b16 %v1383, %v1382
    %v1587 = vpack.c.b16 %v1385, %v1384
    %v1588 = vpack.c.b16 %v1387, %v1386
    %v1589 = vpack.c.b16 %v1389, %v1388
    %v1590 = vpack.c.b16 %v1391, %v1390
    %v1591 = vpack.c.b16 %v1393, %v1392
    %v1592 = vpack.c.b16 %v1395, %v1394
    %v1593 = vpack.c.b16 %v1397, %v1396
    %vm1790 = vcmask 523264
    %v1792 = vsel %vm1790, %v589, 0
    %1794 = vmatprep.subr.bf16.mxu0 0
    %1795 = vmatpush1.bf16.msra.mxu0 %v1398
    %1796 = vmatprep.subr.bf16.mxu0 0
    %1797 = vmatpush1.bf16.msra.mxu0 %v1399
    %1798 = vmatprep.subr.bf16.mxu0 0
    %1799 = vmatpush1.bf16.msra.mxu0 %v1400
    %1800 = vmatprep.subr.bf16.mxu0 0
    %1801 = vmatpush1.bf16.msra.mxu0 %v1401
    %1802 = vmatprep.subr.bf16.mxu0 0
    %1803 = vmatpush1.bf16.msra.mxu0 %v1402
    %1804 = vmatprep.subr.bf16.mxu0 0
    %1805 = vmatpush1.bf16.msra.mxu0 %v1403
    %1806 = vmatprep.subr.bf16.mxu0 0
    %1807 = vmatpush1.bf16.msra.mxu0 %v1404
    %1808 = vmatprep.subr.bf16.mxu0 0
    %1809 = vmatpush1.bf16.msra.mxu0 %v1405
    %1810 = vmatprep.subr.bf16.mxu0 0
    %1811 = vmatpush1.bf16.msra.mxu0 %v1406
    %1812 = vmatprep.subr.bf16.mxu0 0
    %1813 = vmatpush1.bf16.msra.mxu0 %v1407
    %1814 = vmatprep.subr.bf16.mxu0 0
    %1815 = vmatpush1.bf16.msra.mxu0 %v1408
    %1816 = vmatprep.subr.bf16.mxu0 0
    %1817 = vmatpush1.bf16.msra.mxu0 %v1409
    %1818 = vmatprep.subr.bf16.mxu0 0
    %1819 = vmatpush1.bf16.msra.mxu0 %v1410
    %1820 = vmatprep.subr.bf16.mxu0 0
    %1821 = vmatpush1.bf16.msra.mxu0 %v1411
    %1822 = vmatprep.subr.bf16.mxu0 0
    %1823 = vmatpush1.bf16.msra.mxu0 %v1412
    %1824 = vmatprep.subr.bf16.mxu0 0
    %1825 = vmatpush1.bf16.msra.mxu0 %v1413
    %1826 = vmatprep.mubr.bf16.mxu0 %v466
    %1827 = vmatmul.mubr.bf16.gmra.mrb[0].mxu0 %v452
    %v1828 = vpop.f32.mrb[0].mxu0
    %v1829 = vadd.f32 %v423, %v1828
    %v1830 = vpop.f32.mrb[0].mxu0
    %v1831 = vpop.f32.mrb[0].mxu0
    %v1832 = vpop.f32.mrb[0].mxu0
    %1833 = vdwg.mxu0
    %1834 = vmatprep.subr.bf16.mxu0 0
    %1835 = vmatpush1.bf16.msra.mxu0 %v1414
    %1836 = vmatprep.subr.bf16.mxu0 0
    %1837 = vmatpush1.bf16.msra.mxu0 %v1415
    %1838 = vmatprep.subr.bf16.mxu0 0
    %1839 = vmatpush1.bf16.msra.mxu0 %v1416
    %1840 = vmatprep.subr.bf16.mxu0 0
    %1841 = vmatpush1.bf16.msra.mxu0 %v1417
    %1842 = vmatprep.subr.bf16.mxu0 0
    %1843 = vmatpush1.bf16.msra.mxu0 %v1418
    %1844 = vmatprep.subr.bf16.mxu0 0
    %1845 = vmatpush1.bf16.msra.mxu0 %v1419
    %1846 = vmatprep.subr.bf16.mxu0 0
    %1847 = vmatpush1.bf16.msra.mxu0 %v1420
    %1848 = vmatprep.subr.bf16.mxu0 0
    %1849 = vmatpush1.bf16.msra.mxu0 %v1421
    %1850 = vmatprep.subr.bf16.mxu0 0
    %1851 = vmatpush1.bf16.msra.mxu0 %v1422
    %1852 = vmatprep.subr.bf16.mxu0 0
    %1853 = vmatpush1.bf16.msra.mxu0 %v1423
    %1854 = vmatprep.subr.bf16.mxu0 0
    %1855 = vmatpush1.bf16.msra.mxu0 %v1424
    %1856 = vmatprep.subr.bf16.mxu0 0
    %1857 = vmatpush1.bf16.msra.mxu0 %v1425
    %1858 = vmatprep.subr.bf16.mxu0 0
    %1859 = vmatpush1.bf16.msra.mxu0 %v1426
    %1860 = vmatprep.subr.bf16.mxu0 0
    %1861 = vmatpush1.bf16.msra.mxu0 %v1427
    %1862 = vmatprep.subr.bf16.mxu0 0
    %1863 = vmatpush1.bf16.msra.mxu0 %v1428
    %1864 = vmatprep.subr.bf16.mxu0 0
    %1865 = vmatpush1.bf16.msra.mxu0 %v1429
    %1866 = vmatprep.mubr.bf16.mxu0 %v476
    %1867 = vmatmul.mubr.bf16.gmra.mrb[0].mxu0 %v474
    %v1868 = vpop.f32.mrb[0].mxu0
    %v1869 = vadd.f32 %v1829, %v1868
    %v1870 = vpop.f32.mrb[0].mxu0
    %v1871 = vpop.f32.mrb[0].mxu0
    %v1872 = vpop.f32.mrb[0].mxu0
    %1873 = vdwg.mxu0
    %1874 = vmatprep.subr.bf16.mxu0 0
    %1875 = vmatpush1.bf16.msra.mxu0 %v1430
    %1876 = vmatprep.subr.bf16.mxu0 0
    %1877 = vmatpush1.bf16.msra.mxu0 %v1431
    %1878 = vmatprep.subr.bf16.mxu0 0
    %1879 = vmatpush1.bf16.msra.mxu0 %v1432
    %1880 = vmatprep.subr.bf16.mxu0 0
    %1881 = vmatpush1.bf16.msra.mxu0 %v1433
    %1882 = vmatprep.subr.bf16.mxu0 0
    %1883 = vmatpush1.bf16.msra.mxu0 %v1434
    %1884 = vmatprep.subr.bf16.mxu0 0
    %1885 = vmatpush1.bf16.msra.mxu0 %v1435
    %1886 = vmatprep.subr.bf16.mxu0 0
    %1887 = vmatpush1.bf16.msra.mxu0 %v1436
    %1888 = vmatprep.subr.bf16.mxu0 0
    %1889 = vmatpush1.bf16.msra.mxu0 %v1437
    %1890 = vmatprep.subr.bf16.mxu0 0
    %1891 = vmatpush1.bf16.msra.mxu0 %v1438
    %1892 = vmatprep.subr.bf16.mxu0 0
    %1893 = vmatpush1.bf16.msra.mxu0 %v1439
    %1894 = vmatprep.subr.bf16.mxu0 0
    %1895 = vmatpush1.bf16.msra.mxu0 %v1440
    %1896 = vmatprep.subr.bf16.mxu0 0
    %1897 = vmatpush1.bf16.msra.mxu0 %v1441
    %1898 = vmatprep.subr.bf16.mxu0 0
    %1899 = vmatpush1.bf16.msra.mxu0 %v1442
    %1900 = vmatprep.subr.bf16.mxu0 0
    %1901 = vmatpush1.bf16.msra.mxu0 %v1443
    %1902 = vmatprep.subr.bf16.mxu0 0
    %1903 = vmatpush1.bf16.msra.mxu0 %v1444
    %1904 = vmatprep.subr.bf16.mxu0 0
    %1905 = vmatpush1.bf16.msra.mxu0 %v1445
    %1906 = vmatprep.mubr.bf16.mxu0 %v473
    %1907 = vmatmul.mubr.bf16.gmra.mrb[0].mxu0 %v459
    %v1908 = vpop.f32.mrb[0].mxu0
    %v1909 = vadd.f32 %v1869, %v1908
    %v1910 = vpop.f32.mrb[0].mxu0
    %v1911 = vpop.f32.mrb[0].mxu0
    %v1912 = vpop.f32.mrb[0].mxu0
    %1913 = vdwg.mxu0
    %1914 = vmatprep.subr.bf16.mxu0 0
    %1915 = vmatpush1.bf16.msra.mxu0 %v1446
    %1916 = vmatprep.subr.bf16.mxu0 0
    %1917 = vmatpush1.bf16.msra.mxu0 %v1447
    %1918 = vmatprep.subr.bf16.mxu0 0
    %1919 = vmatpush1.bf16.msra.mxu0 %v1448
    %1920 = vmatprep.subr.bf16.mxu0 0
    %1921 = vmatpush1.bf16.msra.mxu0 %v1449
    %1922 = vmatprep.subr.bf16.mxu0 0
    %1923 = vmatpush1.bf16.msra.mxu0 %v1450
    %1924 = vmatprep.subr.bf16.mxu0 0
    %1925 = vmatpush1.bf16.msra.mxu0 %v1451
    %1926 = vmatprep.subr.bf16.mxu0 0
    %1927 = vmatpush1.bf16.msra.mxu0 %v1452
    %1928 = vmatprep.subr.bf16.mxu0 0
    %1929 = vmatpush1.bf16.msra.mxu0 %v1453
    %1930 = vmatprep.subr.bf16.mxu0 0
    %1931 = vmatpush1.bf16.msra.mxu0 %v1454
    %1932 = vmatprep.subr.bf16.mxu0 0
    %1933 = vmatpush1.bf16.msra.mxu0 %v1455
    %1934 = vmatprep.subr.bf16.mxu0 0
    %1935 = vmatpush1.bf16.msra.mxu0 %v1456
    %1936 = vmatprep.subr.bf16.mxu0 0
    %1937 = vmatpush1.bf16.msra.mxu0 %v1457
    %1938 = vmatprep.subr.bf16.mxu0 0
    %1939 = vmatpush1.bf16.msra.mxu0 %v1458
    %1940 = vmatprep.subr.bf16.mxu0 0
    %1941 = vmatpush1.bf16.msra.mxu0 %v1459
    %1942 = vmatprep.subr.bf16.mxu0 0
    %1943 = vmatpush1.bf16.msra.mxu0 %v1460
    %1944 = vmatprep.subr.bf16.mxu0 0
    %1945 = vmatpush1.bf16.msra.mxu0 %v1461
    %1946 = vmatprep.mubr.bf16.mxu0 %v477
    %1947 = vmatmul.mubr.bf16.gmra.mrb[0].mxu0 %v475
    %v1948 = vpop.f32.mrb[0].mxu0
    %v1949 = vadd.f32 %v1909, %v1948
    %v1950 = vpop.f32.mrb[0].mxu0
    %v1951 = vpop.f32.mrb[0].mxu0
    %v1952 = vpop.f32.mrb[0].mxu0
    %1953 = vdwg.mxu0
    %1954 = vmatprep.subr.bf16.mxu0 0
    %1955 = vmatpush1.bf16.msra.mxu0 %v1462
    %1956 = vmatprep.subr.bf16.mxu0 0
    %1957 = vmatpush1.bf16.msra.mxu0 %v1463
    %1958 = vmatprep.subr.bf16.mxu0 0
    %1959 = vmatpush1.bf16.msra.mxu0 %v1464
    %1960 = vmatprep.subr.bf16.mxu0 0
    %1961 = vmatpush1.bf16.msra.mxu0 %v1465
    %1962 = vmatprep.subr.bf16.mxu0 0
    %1963 = vmatpush1.bf16.msra.mxu0 %v1466
    %1964 = vmatprep.subr.bf16.mxu0 0
    %1965 = vmatpush1.bf16.msra.mxu0 %v1467
    %1966 = vmatprep.subr.bf16.mxu0 0
    %1967 = vmatpush1.bf16.msra.mxu0 %v1468
    %1968 = vmatprep.subr.bf16.mxu0 0
    %1969 = vmatpush1.bf16.msra.mxu0 %v1469
    %1970 = vmatprep.subr.bf16.mxu0 0
    %1971 = vmatpush1.bf16.msra.mxu0 %v1470
    %1972 = vmatprep.subr.bf16.mxu0 0
    %1973 = vmatpush1.bf16.msra.mxu0 %v1471
    %1974 = vmatprep.subr.bf16.mxu0 0
    %1975 = vmatpush1.bf16.msra.mxu0 %v1472
    %1976 = vmatprep.subr.bf16.mxu0 0
    %1977 = vmatpush1.bf16.msra.mxu0 %v1473
    %1978 = vmatprep.subr.bf16.mxu0 0
    %1979 = vmatpush1.bf16.msra.mxu0 %v1474
    %1980 = vmatprep.subr.bf16.mxu0 0
    %1981 = vmatpush1.bf16.msra.mxu0 %v1475
    %1982 = vmatprep.subr.bf16.mxu0 0
    %1983 = vmatpush1.bf16.msra.mxu0 %v1476
    %1984 = vmatprep.subr.bf16.mxu0 0
    %1985 = vmatpush1.bf16.msra.mxu0 %v1477
    %1986 = vmatprep.mubr.bf16.mxu0 %v515
    %1987 = vmatmul.mubr.bf16.gmra.mrb[0].mxu0 %v501
    %v1988 = vpop.f32.mrb[0].mxu0
    %v1989 = vadd.f32 %v1949, %v1988
    %v1990 = vpop.f32.mrb[0].mxu0
    %v1991 = vpop.f32.mrb[0].mxu0
    %v1992 = vpop.f32.mrb[0].mxu0
    %1993 = vdwg.mxu0
    %1994 = vmatprep.subr.bf16.mxu0 0
    %1995 = vmatpush1.bf16.msra.mxu0 %v1478
    %1996 = vmatprep.subr.bf16.mxu0 0
    %1997 = vmatpush1.bf16.msra.mxu0 %v1479
    %1998 = vmatprep.subr.bf16.mxu0 0
    %1999 = vmatpush1.bf16.msra.mxu0 %v1480
    %2000 = vmatprep.subr.bf16.mxu0 0
    %2001 = vmatpush1.bf16.msra.mxu0 %v1481
    %2002 = vmatprep.subr.bf16.mxu0 0
    %2003 = vmatpush1.bf16.msra.mxu0 %v1482
    %2004 = vmatprep.subr.bf16.mxu0 0
    %2005 = vmatpush1.bf16.msra.mxu0 %v1483
    %2006 = vmatprep.subr.bf16.mxu0 0
    %2007 = vmatpush1.bf16.msra.mxu0 %v1484
    %2008 = vmatprep.subr.bf16.mxu0 0
    %2009 = vmatpush1.bf16.msra.mxu0 %v1485
    %2010 = vmatprep.subr.bf16.mxu0 0
    %2011 = vmatpush1.bf16.msra.mxu0 %v1486
    %2012 = vmatprep.subr.bf16.mxu0 0
    %2013 = vmatpush1.bf16.msra.mxu0 %v1487
    %2014 = vmatprep.subr.bf16.mxu0 0
    %2015 = vmatpush1.bf16.msra.mxu0 %v1488
    %2016 = vmatprep.subr.bf16.mxu0 0
    %2017 = vmatpush1.bf16.msra.mxu0 %v1489
    %2018 = vmatprep.subr.bf16.mxu0 0
    %2019 = vmatpush1.bf16.msra.mxu0 %v1490
    %2020 = vmatprep.subr.bf16.mxu0 0
    %2021 = vmatpush1.bf16.msra.mxu0 %v1491
    %2022 = vmatprep.subr.bf16.mxu0 0
    %2023 = vmatpush1.bf16.msra.mxu0 %v1492
    %2024 = vmatprep.subr.bf16.mxu0 0
    %2025 = vmatpush1.bf16.msra.mxu0 %v1493
    %2026 = vmatprep.mubr.bf16.mxu0 %v525
    %2027 = vmatmul.mubr.bf16.gmra.mrb[0].mxu0 %v523
    %v2028 = vpop.f32.mrb[0].mxu0
    %v2029 = vadd.f32 %v1989, %v2028
    %v2030 = vpop.f32.mrb[0].mxu0
    %v2031 = vpop.f32.mrb[0].mxu0
    %v2032 = vpop.f32.mrb[0].mxu0
    %2033 = vdwg.mxu0
    %2034 = vmatprep.subr.bf16.mxu0 0
    %2035 = vmatpush1.bf16.msra.mxu0 %v1494
    %2036 = vmatprep.subr.bf16.mxu0 0
    %2037 = vmatpush1.bf16.msra.mxu0 %v1495
    %2038 = vmatprep.subr.bf16.mxu0 0
    %2039 = vmatpush1.bf16.msra.mxu0 %v1496
    %2040 = vmatprep.subr.bf16.mxu0 0
    %2041 = vmatpush1.bf16.msra.mxu0 %v1497
    %2042 = vmatprep.subr.bf16.mxu0 0
    %2043 = vmatpush1.bf16.msra.mxu0 %v1498
    %2044 = vmatprep.subr.bf16.mxu0 0
    %2045 = vmatpush1.bf16.msra.mxu0 %v1499
    %2046 = vmatprep.subr.bf16.mxu0 0
    %2047 = vmatpush1.bf16.msra.mxu0 %v1500
    %2048 = vmatprep.subr.bf16.mxu0 0
    %2049 = vmatpush1.bf16.msra.mxu0 %v1501
    %2050 = vmatprep.subr.bf16.mxu0 0
    %2051 = vmatpush1.bf16.msra.mxu0 %v1502
    %2052 = vmatprep.subr.bf16.mxu0 0
    %2053 = vmatpush1.bf16.msra.mxu0 %v1503
    %2054 = vmatprep.subr.bf16.mxu0 0
    %2055 = vmatpush1.bf16.msra.mxu0 %v1504
    %2056 = vmatprep.subr.bf16.mxu0 0
    %2057 = vmatpush1.bf16.msra.mxu0 %v1505
    %2058 = vmatprep.subr.bf16.mxu0 0
    %2059 = vmatpush1.bf16.msra.mxu0 %v1506
    %2060 = vmatprep.subr.bf16.mxu0 0
    %2061 = vmatpush1.bf16.msra.mxu0 %v1507
    %2062 = vmatprep.subr.bf16.mxu0 0
    %2063 = vmatpush1.bf16.msra.mxu0 %v1508
    %2064 = vmatprep.subr.bf16.mxu0 0
    %2065 = vmatpush1.bf16.msra.mxu0 %v1509
    %2066 = vmatprep.mubr.bf16.mxu0 %v522
    %2067 = vmatmul.mubr.bf16.gmra.mrb[0].mxu0 %v508
    %v2068 = vpop.f32.mrb[0].mxu0
    %v2069 = vadd.f32 %v2029, %v2068
    %v2070 = vpop.f32.mrb[0].mxu0
    %v2071 = vpop.f32.mrb[0].mxu0
    %v2072 = vpop.f32.mrb[0].mxu0
    %2073 = vdwg.mxu0
    %2074 = vmatprep.subr.bf16.mxu0 0
    %2075 = vmatpush1.bf16.msra.mxu0 %v1510
    %2076 = vmatprep.subr.bf16.mxu0 0
    %2077 = vmatpush1.bf16.msra.mxu0 %v1511
    %2078 = vmatprep.subr.bf16.mxu0 0
    %2079 = vmatpush1.bf16.msra.mxu0 %v1512
    %2080 = vmatprep.subr.bf16.mxu0 0
    %2081 = vmatpush1.bf16.msra.mxu0 %v1513
    %2082 = vmatprep.subr.bf16.mxu0 0
    %2083 = vmatpush1.bf16.msra.mxu0 %v1514
    %2084 = vmatprep.subr.bf16.mxu0 0
    %2085 = vmatpush1.bf16.msra.mxu0 %v1515
    %2086 = vmatprep.subr.bf16.mxu0 0
    %2087 = vmatpush1.bf16.msra.mxu0 %v1516
    %2088 = vmatprep.subr.bf16.mxu0 0
    %2089 = vmatpush1.bf16.msra.mxu0 %v1517
    %2090 = vmatprep.subr.bf16.mxu0 0
    %2091 = vmatpush1.bf16.msra.mxu0 %v1518
    %2092 = vmatprep.subr.bf16.mxu0 0
    %2093 = vmatpush1.bf16.msra.mxu0 %v1519
    %2094 = vmatprep.subr.bf16.mxu0 0
    %2095 = vmatpush1.bf16.msra.mxu0 %v1520
    %2096 = vmatprep.subr.bf16.mxu0 0
    %2097 = vmatpush1.bf16.msra.mxu0 %v1521
    %2098 = vmatprep.subr.bf16.mxu0 0
    %2099 = vmatpush1.bf16.msra.mxu0 %v1522
    %2100 = vmatprep.subr.bf16.mxu0 0
    %2101 = vmatpush1.bf16.msra.mxu0 %v1523
    %2102 = vmatprep.subr.bf16.mxu0 0
    %2103 = vmatpush1.bf16.msra.mxu0 %v1524
    %2104 = vmatprep.subr.bf16.mxu0 0
    %2105 = vmatpush1.bf16.msra.mxu0 %v1525
    %2106 = vmatprep.mubr.bf16.mxu0 %v526
    %2107 = vmatmul.mubr.bf16.gmra.mrb[0].mxu0 %v524
    %v2108 = vpop.f32.mrb[0].mxu0
    %v2109 = vadd.f32 %v2069, %v2108
    %v2110 = vpop.f32.mrb[0].mxu0
    %v2111 = vpop.f32.mrb[0].mxu0
    %v2112 = vpop.f32.mrb[0].mxu0
    %2113 = vdwg.mxu0
    %2114 = vmatprep.subr.bf16.mxu0 0
    %2115 = vmatpush1.bf16.msra.mxu0 %v1526
    %2116 = vmatprep.subr.bf16.mxu0 0
    %2117 = vmatpush1.bf16.msra.mxu0 %v1527
    %2118 = vmatprep.subr.bf16.mxu0 0
    %2119 = vmatpush1.bf16.msra.mxu0 %v1528
    %2120 = vmatprep.subr.bf16.mxu0 0
    %2121 = vmatpush1.bf16.msra.mxu0 %v1529
    %2122 = vmatprep.subr.bf16.mxu0 0
    %2123 = vmatpush1.bf16.msra.mxu0 %v1530
    %2124 = vmatprep.subr.bf16.mxu0 0
    %2125 = vmatpush1.bf16.msra.mxu0 %v1531
    %2126 = vmatprep.subr.bf16.mxu0 0
    %2127 = vmatpush1.bf16.msra.mxu0 %v1532
    %2128 = vmatprep.subr.bf16.mxu0 0
    %2129 = vmatpush1.bf16.msra.mxu0 %v1533
    %2130 = vmatprep.subr.bf16.mxu0 0
    %2131 = vmatpush1.bf16.msra.mxu0 %v1534
    %2132 = vmatprep.subr.bf16.mxu0 0
    %2133 = vmatpush1.bf16.msra.mxu0 %v1535
    %2134 = vmatprep.subr.bf16.mxu0 0
    %2135 = vmatpush1.bf16.msra.mxu0 %v1536
    %2136 = vmatprep.subr.bf16.mxu0 0
    %2137 = vmatpush1.bf16.msra.mxu0 %v1537
    %2138 = vmatprep.subr.bf16.mxu0 0
    %2139 = vmatpush1.bf16.msra.mxu0 %v1538
    %2140 = vmatprep.subr.bf16.mxu0 0
    %2141 = vmatpush1.bf16.msra.mxu0 %v1539
    %2142 = vmatprep.subr.bf16.mxu0 0
    %2143 = vmatpush1.bf16.msra.mxu0 %v1540
    %2144 = vmatprep.subr.bf16.mxu0 0
    %2145 = vmatpush1.bf16.msra.mxu0 %v1541
    %2146 = vmatprep.mubr.bf16.mxu0 %v564
    %2147 = vmatmul.mubr.bf16.gmra.mrb[0].mxu0 %v550
    %v2148 = vpop.f32.mrb[0].mxu0
    %v2149 = vadd.f32 %v2109, %v2148
    %v2150 = vpop.f32.mrb[0].mxu0
    %v2151 = vpop.f32.mrb[0].mxu0
    %v2152 = vpop.f32.mrb[0].mxu0
    %2153 = vdwg.mxu0
    %2154 = vmatprep.subr.bf16.mxu0 0
    %2155 = vmatpush1.bf16.msra.mxu0 %v1542
    %2156 = vmatprep.subr.bf16.mxu0 0
    %2157 = vmatpush1.bf16.msra.mxu0 %v1543
    %2158 = vmatprep.subr.bf16.mxu0 0
    %2159 = vmatpush1.bf16.msra.mxu0 %v1544
    %2160 = vmatprep.subr.bf16.mxu0 0
    %2161 = vmatpush1.bf16.msra.mxu0 %v1545
    %2162 = vmatprep.subr.bf16.mxu0 0
    %2163 = vmatpush1.bf16.msra.mxu0 %v1546
    %2164 = vmatprep.subr.bf16.mxu0 0
    %2165 = vmatpush1.bf16.msra.mxu0 %v1547
    %2166 = vmatprep.subr.bf16.mxu0 0
    %2167 = vmatpush1.bf16.msra.mxu0 %v1548
    %2168 = vmatprep.subr.bf16.mxu0 0
    %2169 = vmatpush1.bf16.msra.mxu0 %v1549
    %2170 = vmatprep.subr.bf16.mxu0 0
    %2171 = vmatpush1.bf16.msra.mxu0 %v1550
    %2172 = vmatprep.subr.bf16.mxu0 0
    %2173 = vmatpush1.bf16.msra.mxu0 %v1551
    %2174 = vmatprep.subr.bf16.mxu0 0
    %2175 = vmatpush1.bf16.msra.mxu0 %v1552
    %2176 = vmatprep.subr.bf16.mxu0 0
    %2177 = vmatpush1.bf16.msra.mxu0 %v1553
    %2178 = vmatprep.subr.bf16.mxu0 0
    %2179 = vmatpush1.bf16.msra.mxu0 %v1554
    %2180 = vmatprep.subr.bf16.mxu0 0
    %2181 = vmatpush1.bf16.msra.mxu0 %v1555
    %2182 = vmatprep.subr.bf16.mxu0 0
    %2183 = vmatpush1.bf16.msra.mxu0 %v1556
    %2184 = vmatprep.subr.bf16.mxu0 0
    %2185 = vmatpush1.bf16.msra.mxu0 %v1557
    %2186 = vmatprep.mubr.bf16.mxu0 %v574
    %2187 = vmatmul.mubr.bf16.gmra.mrb[0].mxu0 %v572
    %v2188 = vpop.f32.mrb[0].mxu0
    %v2189 = vadd.f32 %v2149, %v2188
    %v2190 = vpop.f32.mrb[0].mxu0
    %v2191 = vpop.f32.mrb[0].mxu0
    %v2192 = vpop.f32.mrb[0].mxu0
    %2193 = vdwg.mxu0
    %2194 = vmatprep.subr.bf16.mxu0 0
    %2195 = vmatpush1.bf16.msra.mxu0 %v1558
    %2196 = vmatprep.subr.bf16.mxu0 0
    %2197 = vmatpush1.bf16.msra.mxu0 %v1559
    %2198 = vmatprep.subr.bf16.mxu0 0
    %2199 = vmatpush1.bf16.msra.mxu0 %v1560
    %2200 = vmatprep.subr.bf16.mxu0 0
    %2201 = vmatpush1.bf16.msra.mxu0 %v1561
    %2202 = vmatprep.subr.bf16.mxu0 0
    %2203 = vmatpush1.bf16.msra.mxu0 %v1562
    %2204 = vmatprep.subr.bf16.mxu0 0
    %2205 = vmatpush1.bf16.msra.mxu0 %v1563
    %2206 = vmatprep.subr.bf16.mxu0 0
    %2207 = vmatpush1.bf16.msra.mxu0 %v1564
    %2208 = vmatprep.subr.bf16.mxu0 0
    %2209 = vmatpush1.bf16.msra.mxu0 %v1565
    %2210 = vmatprep.subr.bf16.mxu0 0
    %2211 = vmatpush1.bf16.msra.mxu0 %v1566
    %2212 = vmatprep.subr.bf16.mxu0 0
    %2213 = vmatpush1.bf16.msra.mxu0 %v1567
    %2214 = vmatprep.subr.bf16.mxu0 0
    %2215 = vmatpush1.bf16.msra.mxu0 %v1568
    %2216 = vmatprep.subr.bf16.mxu0 0
    %2217 = vmatpush1.bf16.msra.mxu0 %v1569
    %2218 = vmatprep.subr.bf16.mxu0 0
    %2219 = vmatpush1.bf16.msra.mxu0 %v1570
    %2220 = vmatprep.subr.bf16.mxu0 0
    %2221 = vmatpush1.bf16.msra.mxu0 %v1571
    %2222 = vmatprep.subr.bf16.mxu0 0
    %2223 = vmatpush1.bf16.msra.mxu0 %v1572
    %2224 = vmatprep.subr.bf16.mxu0 0
    %2225 = vmatpush1.bf16.msra.mxu0 %v1573
    %2226 = vmatprep.mubr.bf16.mxu0 %v571
    %2227 = vmatmul.mubr.bf16.gmra.mrb[0].mxu0 %v557
    %v2228 = vpop.f32.mrb[0].mxu0
    %v2229 = vadd.f32 %v2189, %v2228
    %v2230 = vpop.f32.mrb[0].mxu0
    %v2231 = vpop.f32.mrb[0].mxu0
    %v2232 = vpop.f32.mrb[0].mxu0
    %2233 = vdwg.mxu0
    %2234 = vmatprep.subr.bf16.mxu0 0
    %2235 = vmatpush1.bf16.msra.mxu0 %v1574
    %2236 = vmatprep.subr.bf16.mxu0 0
    %2237 = vmatpush1.bf16.msra.mxu0 %v1575
    %2238 = vmatprep.subr.bf16.mxu0 0
    %2239 = vmatpush1.bf16.msra.mxu0 %v1576
    %2240 = vmatprep.subr.bf16.mxu0 0
    %2241 = vmatpush1.bf16.msra.mxu0 %v1577
    %2242 = vmatprep.subr.bf16.mxu0 0
    %2243 = vmatpush1.bf16.msra.mxu0 %v1578
    %2244 = vmatprep.subr.bf16.mxu0 0
    %2245 = vmatpush1.bf16.msra.mxu0 %v1579
    %2246 = vmatprep.subr.bf16.mxu0 0
    %2247 = vmatpush1.bf16.msra.mxu0 %v1580
    %2248 = vmatprep.subr.bf16.mxu0 0
    %2249 = vmatpush1.bf16.msra.mxu0 %v1581
    %2250 = vmatprep.subr.bf16.mxu0 0
    %2251 = vmatpush1.bf16.msra.mxu0 %v1582
    %2252 = vmatprep.subr.bf16.mxu0 0
    %2253 = vmatpush1.bf16.msra.mxu0 %v1583
    %2254 = vmatprep.subr.bf16.mxu0 0
    %2255 = vmatpush1.bf16.msra.mxu0 %v1584
    %2256 = vmatprep.subr.bf16.mxu0 0
    %2257 = vmatpush1.bf16.msra.mxu0 %v1585
    %2258 = vmatprep.subr.bf16.mxu0 0
    %2259 = vmatpush1.bf16.msra.mxu0 %v1586
    %2260 = vmatprep.subr.bf16.mxu0 0
    %2261 = vmatpush1.bf16.msra.mxu0 %v1587
    %2262 = vmatprep.subr.bf16.mxu0 0
    %2263 = vmatpush1.bf16.msra.mxu0 %v1588
    %2264 = vmatprep.subr.bf16.mxu0 0
    %2265 = vmatpush1.bf16.msra.mxu0 %v1589
    %2266 = vmatprep.mubr.bf16.mxu0 %v575
    %2267 = vmatmul.mubr.bf16.gmra.mrb[0].mxu0 %v573
    %v2268 = vpop.f32.mrb[0].mxu0
    %v2269 = vadd.f32 %v2229, %v2268
    %v2270 = vpop.f32.mrb[0].mxu0
    %v2271 = vpop.f32.mrb[0].mxu0
    %v2272 = vpop.f32.mrb[0].mxu0
    %2273 = vdwg.mxu0
    %2274 = vmatprep.subr.bf16.mxu0 0
    %2275 = vmatpush1.bf16.msra.mxu0 %v1590
    %2276 = vmatprep.subr.bf16.mxu0 0
    %2277 = vmatpush1.bf16.msra.mxu0 %v1591
    %2278 = vmatprep.subr.bf16.mxu0 0
    %2279 = vmatpush1.bf16.msra.mxu0 %v1592
    %2280 = vmatprep.subr.bf16.mxu0 0
    %2281 = vmatpush1.bf16.msra.mxu0 %v1593
    %2282 = vmatprep.subr.bf16.mxu0 0
    %2283 = vmatpush1.bf16.msra.mxu0 0
    %2284 = vmatprep.subr.bf16.mxu0 0
    %2285 = vmatpush1.bf16.msra.mxu0 0
    %2286 = vmatprep.subr.bf16.mxu0 0
    %2287 = vmatpush1.bf16.msra.mxu0 0
    %2288 = vmatprep.subr.bf16.mxu0 0
    %2289 = vmatpush1.bf16.msra.mxu0 0
    %2290 = vmatprep.subr.bf16.mxu0 0
    %2291 = vmatpush1.bf16.msra.mxu0 0
    %2292 = vmatprep.subr.bf16.mxu0 0
    %2293 = vmatpush1.bf16.msra.mxu0 0
    %2294 = vmatprep.subr.bf16.mxu0 0
    %2295 = vmatpush1.bf16.msra.mxu0 0
    %2296 = vmatprep.subr.bf16.mxu0 0
    %2297 = vmatpush1.bf16.msra.mxu0 0
    %2298 = vmatprep.subr.bf16.mxu0 0
    %2299 = vmatpush1.bf16.msra.mxu0 0
    %2300 = vmatprep.subr.bf16.mxu0 0
    %2301 = vmatpush1.bf16.msra.mxu0 0
    %2302 = vmatprep.subr.bf16.mxu0 0
    %2303 = vmatpush1.bf16.msra.mxu0 0
    %2304 = vmatprep.subr.bf16.mxu0 0
    %2305 = vmatpush1.bf16.msra.mxu0 0
    %2306 = vmatprep.mubr.bf16.mxu0 0
    %2307 = vmatmul.mubr.bf16.gmra.mrb[0].mxu0 %v1792
    %v2308 = vpop.f32.mrb[0].mxu0
    %v2309 = vadd.f32 %v2269, %v2308
    %v2310 = vpop.f32.mrb[0].mxu0
    %v2311 = vpop.f32.mrb[0].mxu0
    %v2312 = vpop.f32.mrb[0].mxu0
    %2313 = vdwg.mxu0
    %v2314 = vmax.f32 %v2309, 0.0
    %v2315 = vpack.c.bf16 %v2314, %v2314
    %v2316 = vld [vmem:[%s3] sm:$0xf]
    %v2317 = vld [vmem:[%s3 + $0x4] sm:$0xf]
    %v2318 = vld [vmem:[%s3 + $0x8] sm:$0xf]
    %v2319 = vld [vmem:[%s3 + $0xc] sm:$0xf]
    %v2320 = vld [vmem:[%s3 + $0x10] sm:$0xf]
    %v2321 = vld [vmem:[%s3 + $0x14] sm:$0xf]
    %v2322 = vld [vmem:[%s3 + $0x18] sm:$0xf]
    %v2323 = vld [vmem:[%s3 + $0x1c] sm:$0xf]
    %v2324 = vld [vmem:[%s3 + $0x20] sm:$0xf]
    %v2325 = vld [vmem:[%s3 + $0x24] sm:$0xf]
    %v2326 = vld [vmem:[%s3 + $0x28] sm:$0xf]
    %v2327 = vld [vmem:[%s3 + $0x2c] sm:$0xf]
    %v2328 = vld [vmem:[%s3 + $0x30] sm:$0xf]
    %v2329 = vld [vmem:[%s3 + $0x34] sm:$0xf]
    %v2330 = vld [vmem:[%s3 + $0x38] sm:$0xf]
    %v2331 = vld [vmem:[%s3 + $0x3c] sm:$0xf]
    %v2332 = vld [vmem:[%s4] sm:$0x1]
    %v2334 = vlaneseq
    %v2335 = vshrl.u32 %v2334, 7
    %v2336 = vsub.s32 0, %v2335
    %v2337 = vrot.slane %v2332, %v2336
    %v2355 = vunpack.c.l.b16 %v2316
    %v2356 = vunpack.c.l.b16 %v2317
    %v2357 = vunpack.c.l.b16 %v2318
    %v2358 = vunpack.c.l.b16 %v2319
    %v2359 = vunpack.c.l.b16 %v2320
    %v2360 = vunpack.c.l.b16 %v2321
    %v2361 = vunpack.c.l.b16 %v2322
    %v2362 = vunpack.c.l.b16 %v2323
    %v2363 = vunpack.c.l.b16 %v2324
    %v2364 = vunpack.c.l.b16 %v2325
    %v2365 = vunpack.c.l.b16 %v2326
    %v2366 = vunpack.c.l.b16 %v2327
    %v2367 = vunpack.c.l.b16 %v2328
    %v2368 = vunpack.c.l.b16 %v2329
    %v2369 = vunpack.c.l.b16 %v2330
    %v2370 = vunpack.c.l.b16 %v2331
    %v2371 = vpack.c.b16 %v2356, %v2355
    %v2372 = vpack.c.b16 %v2358, %v2357
    %v2373 = vpack.c.b16 %v2360, %v2359
    %v2374 = vpack.c.b16 %v2362, %v2361
    %v2375 = vpack.c.b16 %v2364, %v2363
    %v2376 = vpack.c.b16 %v2366, %v2365
    %v2377 = vpack.c.b16 %v2368, %v2367
    %v2378 = vpack.c.b16 %v2370, %v2369
    %2387 = vmatprep.subr.bf16.mxu0 0
    %2388 = vmatpush1.bf16.msra.mxu0 %v2371
    %2389 = vmatprep.subr.bf16.mxu0 0
    %2390 = vmatpush1.bf16.msra.mxu0 %v2372
    %2391 = vmatprep.subr.bf16.mxu0 0
    %2392 = vmatpush1.bf16.msra.mxu0 %v2373
    %2393 = vmatprep.subr.bf16.mxu0 0
    %2394 = vmatpush1.bf16.msra.mxu0 %v2374
    %2395 = vmatprep.subr.bf16.mxu0 0
    %2396 = vmatpush1.bf16.msra.mxu0 %v2375
    %2397 = vmatprep.subr.bf16.mxu0 0
    %2398 = vmatpush1.bf16.msra.mxu0 %v2376
    %2399 = vmatprep.subr.bf16.mxu0 0
    %2400 = vmatpush1.bf16.msra.mxu0 %v2377
    %2401 = vmatprep.subr.bf16.mxu0 0
    %2402 = vmatpush1.bf16.msra.mxu0 %v2378
    %2403 = vmatprep.subr.bf16.mxu0 0
    %2404 = vmatpush1.bf16.msra.mxu0 0
    %2405 = vmatprep.subr.bf16.mxu0 0
    %2406 = vmatpush1.bf16.msra.mxu0 0
    %2407 = vmatprep.subr.bf16.mxu0 0
    %2408 = vmatpush1.bf16.msra.mxu0 0
    %2409 = vmatprep.subr.bf16.mxu0 0
    %2410 = vmatpush1.bf16.msra.mxu0 0
    %2411 = vmatprep.subr.bf16.mxu0 0
    %2412 = vmatpush1.bf16.msra.mxu0 0
    %2413 = vmatprep.subr.bf16.mxu0 0
    %2414 = vmatpush1.bf16.msra.mxu0 0
    %2415 = vmatprep.subr.bf16.mxu0 0
    %2416 = vmatpush1.bf16.msra.mxu0 0
    %2417 = vmatprep.subr.bf16.mxu0 0
    %2418 = vmatpush1.bf16.msra.mxu0 0
    %2419 = vmatprep.mubr.bf16.mxu0 0
    %2420 = vmatmul.mubr.bf16.gmra.mrb[0].mxu0 %v2315
    %v2421 = vpop.f32.mrb[0].mxu0
    %v2422 = vadd.f32 %v2337, %v2421
    %v2423 = vpop.f32.mrb[0].mxu0
    %v2424 = vpop.f32.mrb[0].mxu0
    %v2425 = vpop.f32.mrb[0].mxu0
    %2426 = vdwg.mxu0
    %vm2427 = vcmask 74752
    %2428 = vst.msk [vmem:[#allocation2] sm:$0x3] %vm2427, %v2422
    // Predicated region
    $region22: #{mnist_cnn_forward.5} parent=1 // pred_check
      _
    $region23: #{mnist_cnn_forward.5} parent=1 // pred_check_branch
      %2430 = sbr.rel (0) target = $region25
    $region24: #{mnist_cnn_forward.5} parent=1 // pred_region
      %s2432 = ssub.s32 32, 32
      %2433 = vsyncadd [#allocation3], %s2432
      %s2435 = sshll.u32 [#allocation2], 4
      %s2436 = int_to_ptr.vmem [resolvable:$true] %s2435
      %2438 = dma.vmem_to_hbm [thread:$0]  %s2436, 32, %s5, [#allocation3]
    $region25: #{mnist_cnn_forward.5} parent=1 // pred_fallthru
      _
    // Predicated region
    $region26: #{mnist_cnn_forward.5} parent=1 // pred_check
      _
    $region27: #{mnist_cnn_forward.5} parent=1 // pred_check_branch
      %2440 = sbr.rel (0) target = $region29
    $region28: #{mnist_cnn_forward.5} parent=1 // pred_region
      %2441 = dma.done [#allocation3], 32
    $region29: #{mnist_cnn_forward.5} parent=1 // pred_fallthru
      _
    %2442 = vsyncpa [#allocation3], 1

</llo_original>
